<compile_context>
chip_gen: v7x
topology: tpu7x:2x2x1
jax: 0.10.0
libtpu: 0.0.40
codegen_flags: <defaults>
</compile_context>

<pallas_src>
import numpy as np

import jax
import jax.numpy as jnp
from jax import lax
from jax.experimental import pallas as pl
from jax.experimental.pallas import tpu as pltpu

LANE = 128                 # hidden / gate dims are padded to a multiple of this
_STATIC_UNROLL_MAX = 16    # chunks up to this size use a fully static unroll


def _round_up(x, m):
    return ((x + m - 1) // m) * m


def _tpu_vmem_bytes():
    try:
        return int(pltpu.get_tpu_info().vmem_capacity_bytes)
    except Exception:
        return 64 << 20    # conservative fallback (v7x per-TensorCore VMEM)


# ----------------------------------------------------------------------------
# Pallas LSTM layer kernel: grid = (batch blocks [parallel], time chunks [arbitrary])
# ----------------------------------------------------------------------------
def _make_lstm_layer_kernel(chunk, bblk, in_dim, hidden_pad, add_residual, compute_dtype):
    C, B, D, Hp = chunk, bblk, in_dim, hidden_pad
    H4 = 4 * Hp

    def kernel(*refs):
        if add_residual:
            (x_ref, xres_ref, h0_ref, c0_ref, wih_hbm, whh_hbm, b_hbm,
             y_ref, hT_ref, cT_ref,
             wih_v, whh_v, b_v, h_sc, c_sc, gx_sc) = refs
        else:
            (x_ref, h0_ref, c0_ref, wih_hbm, whh_hbm, b_hbm,
             y_ref, hT_ref, cT_ref,
             wih_v, whh_v, b_v, h_sc, c_sc, gx_sc) = refs
            xres_ref = None

        ti = pl.program_id(1)   # time chunk (serial recurrence axis)

        # Grid-invariant weights are SINGLE-buffered: they live in HBM (memory_space=ANY)
        # and are DMA'd into VMEM scratch once per batch block.  Gating on the *global*
        # first grid step would be wrong when the parallel batch axis is split across
        # TensorCores, so gate on the first time chunk instead.
        @pl.when(ti == 0)
        def _():
            pltpu.sync_copy(wih_hbm, wih_v)
            pltpu.sync_copy(whh_hbm, whh_v)
            pltpu.sync_copy(b_hbm, b_v)
            h_sc[...] = h0_ref[...].astype(jnp.float32)
            c_sc[...] = c0_ref[...].astype(jnp.float32)

        # ---- hoisted input projection: ONE (C*B, D) x (D, 4Hp) MXU GEMM per chunk ----
        # bias folded in; B (batch block) is sublane-aligned so the reshape is a view.
        x_flat = x_ref[...].reshape(C * B, D).astype(compute_dtype)
        gx = jnp.dot(x_flat, wih_v[...], preferred_element_type=jnp.float32)
        gx_sc[...] = (gx + b_v[...]).reshape(C, B, H4)

        whh = whh_v[...]   # (Hp, 4Hp) recurrent weights, loop-invariant

        def step(i, carry):
            h, c = carry
            gates = gx_sc[i] + jnp.dot(h.astype(compute_dtype), whh,
                                       preferred_element_type=jnp.float32)  # (B, 4Hp)
            # Gates are pre-permuted to (i, f, o, g): one sigmoid over the first 3*Hp
            # lanes and one tanh over the last Hp lanes (lane-aligned slices), instead
            # of sigmoid + tanh over the full tile plus a vector select.
            s = jax.nn.sigmoid(gates[:, :3 * Hp])
            g = jnp.tanh(gates[:, 3 * Hp:])
            i_g = s[:, 0 * Hp:1 * Hp]
            f_g = s[:, 1 * Hp:2 * Hp]
            o_g = s[:, 2 * Hp:3 * Hp]
            c = f_g * c + i_g * g
            h = o_g * jnp.tanh(c)
            if add_residual:
                # residual folded into the per-step store (no post-loop y_ref RMW)
                y_ref[i] = (h + xres_ref[i].astype(jnp.float32)).astype(y_ref.dtype)
            else:
                y_ref[i] = h.astype(y_ref.dtype)
            return h, c

        carry0 = (h_sc[...], c_sc[...])
        if C <= _STATIC_UNROLL_MAX:
            # small chunks: fully static unroll (static ref indices)
            h, c = carry0
            for i in range(C):
                h, c = step(i, (h, c))
        else:
            # large chunks: partial unroll keeps vreg live ranges / code size bounded
            h, c = lax.fori_loop(0, C, step, carry0, unroll=4)

        h_sc[...] = h
        c_sc[...] = c

        # Final state: written only on the LAST time chunk of this batch block.  The
        # constant-(per-batch-block)-index output block stays resident until its block
        # index changes / grid end, so this is the value that lands in HBM.
        @pl.when(ti == pl.num_programs(1) - 1)
        def _():
            hT_ref[...] = h.astype(hT_ref.dtype)
            cT_ref[...] = c.astype(cT_ref.dtype)

    return kernel


def lstm_layer_pallas(x_tbd, h0, c0, w_ih_t, w_hh_t, bias_row, *,
                      residual_x=None, y_dtype=None,
                      compute_dtype=jnp.bfloat16, batch_blocks=2, chunk=None):
    """Run one LSTM layer over the full sequence.

    x_tbd:      (T, B, D)    time-major input
    h0, c0:     (B, Hp)      initial states, hidden padded to a multiple of 128
    w_ih_t:     (D, 4Hp)     transposed input weights, gate order (i, f, o, g)
    w_hh_t:     (Hp, 4Hp)    transposed recurrent weights, same layout
    bias_row:   (1, 4Hp)     b_ih + b_hh, same layout
    residual_x: optional (T, B, Hp) added to the layer output (residual shortcut)

    Returns: y (T, B, Hp) in y_dtype, h_T (B, Hp) f32, c_T (B, Hp) f32
    """
    T, B, D = x_tbd.shape
    Hp = h0.shape[-1]
    assert Hp % LANE == 0
    add_res = residual_x is not None
    if y_dtype is None:
        y_dtype = x_tbd.dtype

    # --- batch grid axis ("parallel" -> second TensorCore on v7x).  Keep the batch
    # block sublane-aligned so the (C,B,D)->(C*B,D) reshape stays a pure layout view.
    sub = 8
    for dt in (x_tbd.dtype, y_dtype) + ((residual_x.dtype,) if add_res else ()):
        if jnp.dtype(dt).itemsize < 4:
            sub = 16
    nb = max(1, int(batch_blocks))
    while nb > 1 and not (B % nb == 0 and (B // nb) % sub == 0):
        nb -= 1
    bblk = B // nb

    # --- VMEM-budgeted time chunk (amortises per-grid-step overhead, fills the MXU) ---
    phys_vmem = _tpu_vmem_bytes()
    cdt_size = jnp.dtype(compute_dtype).itemsize
    x_isz = jnp.dtype(x_tbd.dtype).itemsize
    y_isz = jnp.dtype(y_dtype).itemsize
    if chunk is None:
        per_t = bblk * (4 * Hp * 4                     # gx scratch (f32)
                        + 2 * D * x_isz                # x block, double-buffered
                        + 2 * Hp * y_isz               # y block, double-buffered
                        + (2 * Hp * 4 if add_res else 0))
        chunk = max(1, min(T, (phys_vmem // 2) // per_t, 256))
        while T % chunk:
            chunk -= 1
    assert T % chunk == 0, "chunk must divide T"
    n_chunks = T // chunk

    kernel = _make_lstm_layer_kernel(chunk, bblk, D, Hp, add_res, compute_dtype)

    in_specs = [pl.BlockSpec((chunk, bblk, D), lambda b, t: (t, b, 0))]
    args = [x_tbd]
    if add_res:
        in_specs.append(pl.BlockSpec((chunk, bblk, Hp), lambda b, t: (t, b, 0)))
        args.append(residual_x)
    in_specs += [
        pl.BlockSpec((bblk, Hp), lambda b, t: (b, 0)),   # h0
        pl.BlockSpec((bblk, Hp), lambda b, t: (b, 0)),   # c0
        pl.BlockSpec(memory_space=pl.ANY),               # W_ih^T (single-buffered via scratch)
        pl.BlockSpec(memory_space=pl.ANY),               # W_hh^T
        pl.BlockSpec(memory_space=pl.ANY),               # bias
    ]
    args += [h0.astype(jnp.float32), c0.astype(jnp.float32),
             w_ih_t.astype(compute_dtype),               # bf16 weights halve DMA/VMEM
             w_hh_t.astype(compute_dtype),
             bias_row.astype(jnp.float32)]               # bias stays f32 (post-accum add)

    out_shapes = (
        jax.ShapeDtypeStruct((T, B, Hp), y_dtype),
        jax.ShapeDtypeStruct((B, Hp), jnp.float32),
        jax.ShapeDtypeStruct((B, Hp), jnp.float32),
    )
    out_specs = (
        pl.BlockSpec((chunk, bblk, Hp), lambda b, t: (t, b, 0)),
        pl.BlockSpec((bblk, Hp), lambda b, t: (b, 0)),
        pl.BlockSpec((bblk, Hp), lambda b, t: (b, 0)),
    )
    scratch_shapes = [
        pltpu.VMEM((D, 4 * Hp), compute_dtype),          # W_ih^T  (1x buffer)
        pltpu.VMEM((Hp, 4 * Hp), compute_dtype),         # W_hh^T  (1x buffer)
        pltpu.VMEM((1, 4 * Hp), jnp.float32),            # bias
        pltpu.VMEM((bblk, Hp), jnp.float32),             # h state (carried across chunks)
        pltpu.VMEM((bblk, Hp), jnp.float32),             # c state
        pltpu.VMEM((chunk, bblk, 4 * Hp), jnp.float32),  # hoisted input-proj gates
    ]

    # vmem_limit_bytes sized from the actual footprint with headroom, clamped to HW.
    footprint = (
        D * 4 * Hp * cdt_size + Hp * 4 * Hp * cdt_size + 4 * Hp * 4          # weights+bias
        + chunk * bblk * 4 * Hp * 4                                          # gx scratch
        + 2 * bblk * Hp * 4                                                  # h/c state
        + 2 * chunk * bblk * D * x_isz + 2 * chunk * bblk * Hp * y_isz       # x/y pipeline
        + (2 * chunk * bblk * Hp * 4 if add_res else 0)                      # residual pipeline
        + 8 * 2 * bblk * Hp * 4)                                             # h0/c0/hT/cT blocks
    vmem_limit = int(min(phys_vmem * 9 // 10,
                         max(2 * footprint + (8 << 20), 32 << 20)))

    return pl.pallas_call(
        kernel,
        out_shape=out_shapes,
        grid_spec=pltpu.PrefetchScalarGridSpec(
            num_scalar_prefetch=0,
            grid=(nb, n_chunks),
            in_specs=in_specs,
            out_specs=out_specs,
            scratch_shapes=scratch_shapes,
        ),
        compiler_params=pltpu.CompilerParams(
            # batch blocks independent (megacore on v7x); time chunks are the recurrence
            dimension_semantics=("parallel", "arbitrary"),
            vmem_limit_bytes=vmem_limit,
        ),
    )(*args)


# ----------------------------------------------------------------------------
# ResLSTM_block equivalent
# ----------------------------------------------------------------------------
class ResLSTMBlockPallas:
    """Pallas equivalent of the PyTorch ResLSTM_block forward.

    rnn2's INITIAL state is rnn1's FINAL state (as in the PyTorch code), so layer-2
    step 0 depends on layer-1 step T-1: the two recurrences run as two sequential
    pallas_calls, each with its input projection hoisted per chunk.
    """

    def __init__(self, in_dim, hidden_dim, key, compute_dtype=jnp.bfloat16,
                 chunk=None, batch_blocks=2):
        self.in_dim = in_dim
        self.hidden_dim = hidden_dim
        self.hidden_pad = _round_up(hidden_dim, LANE)
        self.res_shortcut = in_dim == hidden_dim
        # bf16 MXU operands (f32 accumulation / f32 state & elementwise) are native on
        # v5e/v6e/v7x; pass compute_dtype=jnp.float32 for bit-tight numerics.
        self.compute_dtype = compute_dtype
        self.chunk = chunk
        self.batch_blocks = batch_blocks

        def init_lstm_params(key, input_size, hidden_size):
            k = 1.0 / np.sqrt(hidden_size)
            ks = jax.random.split(key, 4)
            w_ih = jax.random.uniform(ks[0], (4 * hidden_size, input_size),
                                      jnp.float32, -k, k)
            w_hh = jax.random.uniform(ks[1], (4 * hidden_size, hidden_size),
                                      jnp.float32, -k, k)
            b_ih = jax.random.uniform(ks[2], (4 * hidden_size,), jnp.float32, -k, k)
            b_hh = jax.random.uniform(ks[3], (4 * hidden_size,), jnp.float32, -k, k)
            return w_ih, w_hh, b_ih, b_hh

        k1, k2 = jax.random.split(key)
        self.rnn1 = init_lstm_params(k1, in_dim, hidden_dim)
        self.rnn2 = init_lstm_params(k2, hidden_dim, hidden_dim)

    def _prep(self, params, in_dim, in_pad):
        """PyTorch gate order (i,f,g,o) -> (i,f,o,g); pad each gate (and the input /
        recurrent contraction dims) with zeros to the lane-aligned hidden size; transpose."""
        H, Hp = self.hidden_dim, self.hidden_pad
        w_ih, w_hh, b_ih, b_hh = params

        def reorder_pad_gate_rows(w):                                    # (4H, K) -> (4Hp, K)
            i, f, g, o = jnp.split(w, 4, axis=0)
            pads = ((0, Hp - H),) + ((0, 0),) * (w.ndim - 1)
            return jnp.concatenate([jnp.pad(p, pads) for p in (i, f, o, g)], axis=0)

        w_ih_r = reorder_pad_gate_rows(w_ih)                             # (4Hp, in_dim)
        w_ih_r = jnp.pad(w_ih_r, ((0, 0), (0, in_pad - in_dim)))         # (4Hp, in_pad)
        w_hh_r = reorder_pad_gate_rows(w_hh)                             # (4Hp, H)
        w_hh_r = jnp.pad(w_hh_r, ((0, 0), (0, Hp - H)))                  # (4Hp, Hp)
        b_r = reorder_pad_gate_rows((b_ih + b_hh)[:, None])              # (4Hp, 1)
        return w_ih_r.T, w_hh_r.T, b_r.T

    def __call__(self, x, h_0, c_0):
        # x: (B, T, in_dim); h_0, c_0: (1, B, hidden_dim)
        H, Hp = self.hidden_dim, self.hidden_pad
        x_tbd = jnp.transpose(x, (1, 0, 2))                              # time-major
        h0 = jnp.pad(h_0[0], ((0, 0), (0, Hp - H)))
        c0 = jnp.pad(c_0[0], ((0, 0), (0, Hp - H)))

        w1, u1, b1 = self._prep(self.rnn1, self.in_dim, self.in_dim)
        w2, u2, b2 = self._prep(self.rnn2, H, Hp)

        inter_dtype = (x.dtype
                       if jnp.dtype(self.compute_dtype) == jnp.dtype(jnp.float32)
                       else jnp.dtype(self.compute_dtype))

        # Layer 1: inter-layer activations in bf16 when the matmuls are bf16 (halves the
        # y1 HBM round trip); final h/c states stay f32.
        y1, h1, c1 = lstm_layer_pallas(
            x_tbd, h0, c0, w1, u1, b1,
            y_dtype=inter_dtype, compute_dtype=self.compute_dtype,
            batch_blocks=self.batch_blocks, chunk=self.chunk)

        # Layer 2: initial state = layer-1 final state; residual folded into the store.
        residual = None
        if self.res_shortcut:
            residual = jnp.pad(x_tbd, ((0, 0), (0, 0), (0, Hp - self.in_dim)))
        y2, h2, c2 = lstm_layer_pallas(
            y1, h1, c1, w2, u2, b2,
            residual_x=residual, y_dtype=x.dtype, compute_dtype=self.compute_dtype,
            batch_blocks=self.batch_blocks, chunk=self.chunk)

        out = jnp.transpose(y2[..., :H], (1, 0, 2))                      # (B, T, H)
        return out, (h2[None, :, :H], c2[None, :, :H])


# ----------------------------------------------------------------------------
# Pure-JAX reference (PyTorch LSTM semantics) for verification
# ----------------------------------------------------------------------------
def _lstm_ref(x_btd, h0, c0, params):
    w_ih, w_hh, b_ih, b_hh = params

    def step(carry, x_t):
        h, c = carry
        gates = x_t @ w_ih.T + b_ih + h @ w_hh.T + b_hh
        i, f, g, o = jnp.split(gates, 4, axis=-1)
        i = jax.nn.sigmoid(i)
        f = jax.nn.sigmoid(f)
        g = jnp.tanh(g)
        o = jax.nn.sigmoid(o)
        c = f * c + i * g
        h = o * jnp.tanh(c)
        return (h, c), h

    (hT, cT), ys = jax.lax.scan(step, (h0, c0), jnp.transpose(x_btd, (1, 0, 2)))
    return jnp.transpose(ys, (1, 0, 2)), hT, cT


def _res_lstm_ref(block, x, h_0, c_0):
    y1, h1, c1 = _lstm_ref(x, h_0[0], c_0[0], block.rnn1)
    y2, h2, c2 = _lstm_ref(y1, h1, c1, block.rnn2)
    out = x + y2 if block.res_shortcut else y2
    return out, (h2[None], c2[None])


# ----------------------------------------------------------------------------
if __name__ == "__main__":
    B, T, D, H = 16, 8, 32, 32   # in_dim == hidden_dim -> residual shortcut active

    key = jax.random.PRNGKey(0)
    k_param, k_x, k_h, k_c = jax.random.split(key, 4)

    x = jax.random.normal(k_x, (B, T, D), jnp.float32)
    h_0 = jax.random.normal(k_h, (1, B, H), jnp.float32)
    c_0 = jax.random.normal(k_c, (1, B, H), jnp.float32)

    # --- f32 matmul path: tight check against a pure-JAX lax.scan reference ---
    block_f32 = ResLSTMBlockPallas(D, H, k_param, compute_dtype=jnp.float32)
    out, (hidden, cell) = block_f32(x, h_0, c_0)
    out = jax.block_until_ready(out)
    hidden = jax.block_until_ready(hidden)
    cell = jax.block_until_ready(cell)

    out_ref, (h_ref, c_ref) = _res_lstm_ref(block_f32, x, h_0, c_0)
    np.testing.assert_allclose(np.asarray(out), np.asarray(out_ref), atol=1e-5, rtol=1e-5)
    np.testing.assert_allclose(np.asarray(hidden), np.asarray(h_ref), atol=1e-5, rtol=1e-5)
    np.testing.assert_allclose(np.asarray(cell), np.asarray(c_ref), atol=1e-5, rtol=1e-5)

    # --- bf16 matmul path (f32 accumulation / state, bf16 inter-layer y1): sanity ---
    block_bf16 = ResLSTMBlockPallas(D, H, k_param, compute_dtype=jnp.bfloat16)
    out_b, (hidden_b, cell_b) = block_bf16(x, h_0, c_0)
    out_b = jax.block_until_ready(out_b)
    jax.block_until_ready(hidden_b)
    jax.block_until_ready(cell_b)
    np.testing.assert_allclose(np.asarray(out_b), np.asarray(out_ref), atol=1e-1, rtol=1e-1)

    print("KERNEL_OK")
</pallas_src>

<mosaic_0001>
module attributes {stable_mosaic.version = 11 : i64} {
  func.func @kernel(%arg0: i32, %arg1: i32, %arg2: memref<8x8x32xf32, #tpu.memory_space<vmem>>, %arg3: memref<8x128xf32, #tpu.memory_space<vmem>>, %arg4: memref<8x128xf32, #tpu.memory_space<vmem>>, %arg5: memref<32x512xf32, #tpu.memory_space<any>>, %arg6: memref<128x512xf32, #tpu.memory_space<any>>, %arg7: memref<1x512xf32, #tpu.memory_space<any>>, %arg8: memref<8x8x128xf32, #tpu.memory_space<vmem>>, %arg9: memref<8x128xf32, #tpu.memory_space<vmem>>, %arg10: memref<8x128xf32, #tpu.memory_space<vmem>>, %arg11: memref<32x512xf32, #tpu.memory_space<vmem>>, %arg12: memref<128x512xf32, #tpu.memory_space<vmem>>, %arg13: memref<1x512xf32, #tpu.memory_space<vmem>>, %arg14: memref<8x128xf32, #tpu.memory_space<vmem>>, %arg15: memref<8x128xf32, #tpu.memory_space<vmem>>, %arg16: memref<8x8x512xf32, #tpu.memory_space<vmem>>) attributes {dimension_semantics = [#tpu.dimension_semantics<parallel>, #tpu.dimension_semantics<arbitrary>], iteration_bounds = array<i64: 2, 1>, scalar_prefetch = 0 : i64, scratch_operands = 6 : i64, tpu.core_type = #tpu.core_type<tc>, window_params = [{transform_indices = @transform_0, window_bounds = array<i64: 8, 8, 32>}, {transform_indices = @transform_1, window_bounds = array<i64: 8, 128>}, {transform_indices = @transform_2, window_bounds = array<i64: 8, 128>}, {}, {}, {}, {transform_indices = @transform_6, window_bounds = array<i64: 8, 8, 128>}, {transform_indices = @transform_7, window_bounds = array<i64: 8, 128>}, {transform_indices = @transform_8, window_bounds = array<i64: 8, 128>}]} {
    %c0_i32 = arith.constant 0 : i32
    %0 = arith.cmpi eq, %arg1, %c0_i32 : i32
    %1 = arith.extui %0 : i1 to i32
    %c0_i32_0 = arith.constant 0 : i32
    %2 = arith.cmpi ne, %1, %c0_i32_0 : i32
    scf.if %2 {
      "tpu.region"() ({
        %208 = tpu.sem_alloc : memref<!tpu.dma_semaphore, #tpu.memory_space<semaphore_mem>>
        tpu.enqueue_dma source(%arg5 : memref<32x512xf32, #tpu.memory_space<any>>) target(%arg11 : memref<32x512xf32, #tpu.memory_space<vmem>>) target_semaphore(%208 : memref<!tpu.dma_semaphore, #tpu.memory_space<semaphore_mem>>)
        tpu.wait_dma2 semaphore(%208 : memref<!tpu.dma_semaphore, #tpu.memory_space<semaphore_mem>>) src(%arg5 : memref<32x512xf32, #tpu.memory_space<any>>) dst(%arg11 : memref<32x512xf32, #tpu.memory_space<vmem>>)
        tpu.yield
      }) : () -> ()
      "tpu.region"() ({
        %208 = tpu.sem_alloc : memref<!tpu.dma_semaphore, #tpu.memory_space<semaphore_mem>>
        tpu.enqueue_dma source(%arg6 : memref<128x512xf32, #tpu.memory_space<any>>) target(%arg12 : memref<128x512xf32, #tpu.memory_space<vmem>>) target_semaphore(%208 : memref<!tpu.dma_semaphore, #tpu.memory_space<semaphore_mem>>)
        tpu.wait_dma2 semaphore(%208 : memref<!tpu.dma_semaphore, #tpu.memory_space<semaphore_mem>>) src(%arg6 : memref<128x512xf32, #tpu.memory_space<any>>) dst(%arg12 : memref<128x512xf32, #tpu.memory_space<vmem>>)
        tpu.yield
      }) : () -> ()
      "tpu.region"() ({
        %208 = tpu.sem_alloc : memref<!tpu.dma_semaphore, #tpu.memory_space<semaphore_mem>>
        tpu.enqueue_dma source(%arg7 : memref<1x512xf32, #tpu.memory_space<any>>) target(%arg13 : memref<1x512xf32, #tpu.memory_space<vmem>>) target_semaphore(%208 : memref<!tpu.dma_semaphore, #tpu.memory_space<semaphore_mem>>)
        tpu.wait_dma2 semaphore(%208 : memref<!tpu.dma_semaphore, #tpu.memory_space<semaphore_mem>>) src(%arg7 : memref<1x512xf32, #tpu.memory_space<any>>) dst(%arg13 : memref<1x512xf32, #tpu.memory_space<vmem>>)
        tpu.yield
      }) : () -> ()
      %c0_79 = arith.constant 0 : index
      %c0_80 = arith.constant 0 : index
      %204 = vector.load %arg3[%c0_79, %c0_80] : memref<8x128xf32, #tpu.memory_space<vmem>>, vector<8x128xf32>
      %c0_81 = arith.constant 0 : index
      %c0_82 = arith.constant 0 : index
      %205 = vector.load %arg14[%c0_81, %c0_82] : memref<8x128xf32, #tpu.memory_space<vmem>>, vector<8x128xf32>
      tpu.vector_store %arg14[%c0_81, %c0_82], %204 {strides = array<i32>} : memref<8x128xf32, #tpu.memory_space<vmem>>, vector<8x128xf32>,
      %c0_83 = arith.constant 0 : index
      %c0_84 = arith.constant 0 : index
      %206 = vector.load %arg4[%c0_83, %c0_84] : memref<8x128xf32, #tpu.memory_space<vmem>>, vector<8x128xf32>
      %c0_85 = arith.constant 0 : index
      %c0_86 = arith.constant 0 : index
      %207 = vector.load %arg15[%c0_85, %c0_86] : memref<8x128xf32, #tpu.memory_space<vmem>>, vector<8x128xf32>
      tpu.vector_store %arg15[%c0_85, %c0_86], %206 {strides = array<i32>} : memref<8x128xf32, #tpu.memory_space<vmem>>, vector<8x128xf32>,
    } else {
    }
    %c0 = arith.constant 0 : index
    %c0_1 = arith.constant 0 : index
    %c0_2 = arith.constant 0 : index
    %3 = vector.load %arg2[%c0, %c0_1, %c0_2] : memref<8x8x32xf32, #tpu.memory_space<vmem>>, vector<8x8x32xf32>
    %4 = vector.shape_cast %3 : vector<8x8x32xf32> to vector<64x32xf32>
    %c0_3 = arith.constant 0 : index
    %c0_4 = arith.constant 0 : index
    %5 = vector.load %arg11[%c0_3, %c0_4] : memref<32x512xf32, #tpu.memory_space<vmem>>, vector<32x512xf32>
    %cst = arith.constant dense<0.000000e+00> : vector<64x512xf32>
    %6 = tpu.matmul %4, %5, %cst {dimension_numbers = #tpu.dot_dimension_numbers<[1], [0], [0], [1], [0, 0, 1, 1], [], []>} : vector<64x32xf32>, vector<32x512xf32>, vector<64x512xf32> -> vector<64x512xf32>
    %c0_5 = arith.constant 0 : index
    %c0_6 = arith.constant 0 : index
    %7 = vector.load %arg13[%c0_5, %c0_6] : memref<1x512xf32, #tpu.memory_space<vmem>>, vector<1x512xf32>
    %8 = vector.broadcast %7 : vector<1x512xf32> to vector<64x512xf32>
    %9 = arith.addf %6, %8 : vector<64x512xf32>
    %10 = vector.shape_cast %9 : vector<64x512xf32> to vector<8x8x512xf32>
    %c0_7 = arith.constant 0 : index
    %c0_8 = arith.constant 0 : index
    %c0_9 = arith.constant 0 : index
    %11 = vector.load %arg16[%c0_7, %c0_8, %c0_9] : memref<8x8x512xf32, #tpu.memory_space<vmem>>, vector<8x8x512xf32>
    tpu.vector_store %arg16[%c0_7, %c0_8, %c0_9], %10 {strides = array<i32>} : memref<8x8x512xf32, #tpu.memory_space<vmem>>, vector<8x8x512xf32>,
    %c0_10 = arith.constant 0 : index
    %c0_11 = arith.constant 0 : index
    %12 = vector.load %arg12[%c0_10, %c0_11] : memref<128x512xf32, #tpu.memory_space<vmem>>, vector<128x512xf32>
    %c0_12 = arith.constant 0 : index
    %c0_13 = arith.constant 0 : index
    %13 = vector.load %arg14[%c0_12, %c0_13] : memref<8x128xf32, #tpu.memory_space<vmem>>, vector<8x128xf32>
    %c0_14 = arith.constant 0 : index
    %c0_15 = arith.constant 0 : index
    %14 = vector.load %arg15[%c0_14, %c0_15] : memref<8x128xf32, #tpu.memory_space<vmem>>, vector<8x128xf32>
    %c0_16 = arith.constant 0 : index
    %c0_17 = arith.constant 0 : index
    %c0_18 = arith.constant 0 : index
    %15 = vector.load %arg16[%c0_16, %c0_17, %c0_18] : memref<8x8x512xf32, #tpu.memory_space<vmem>>, vector<1x8x512xf32>
    %16 = vector.shape_cast %15 : vector<1x8x512xf32> to vector<8x512xf32>
    %cst_19 = arith.constant dense<0.000000e+00> : vector<8x512xf32>
    %17 = tpu.matmul %13, %12, %cst_19 {dimension_numbers = #tpu.dot_dimension_numbers<[1], [0], [0], [1], [0, 0, 1, 1], [], []>} : vector<8x128xf32>, vector<128x512xf32>, vector<8x512xf32> -> vector<8x512xf32>
    %18 = arith.addf %16, %17 : vector<8x512xf32>
    %19 = vector.extract_strided_slice %18 {offsets = [0, 0], sizes = [8, 384], strides = [1, 1]} : vector<8x512xf32> to vector<8x384xf32>
    %20 = arith.negf %19 : vector<8x384xf32>
    %21 = math.exp %20 : vector<8x384xf32>
    %cst_20 = arith.constant 1.000000e+00 : f32
    %22 = vector.broadcast %cst_20 : f32 to vector<8x384xf32>
    %23 = arith.addf %22, %21 : vector<8x384xf32>
    %24 = arith.divf %22, %23 : vector<8x384xf32>
    %25 = vector.extract_strided_slice %18 {offsets = [0, 384], sizes = [8, 128], strides = [1, 1]} : vector<8x512xf32> to vector<8x128xf32>
    %26 = math.tanh %25 : vector<8x128xf32>
    %27 = vector.extract_strided_slice %24 {offsets = [0, 0], sizes = [8, 128], strides = [1, 1]} : vector<8x384xf32> to vector<8x128xf32>
    %28 = vector.extract_strided_slice %24 {offsets = [0, 128], sizes = [8, 128], strides = [1, 1]} : vector<8x384xf32> to vector<8x128xf32>
    %29 = vector.extract_strided_slice %24 {offsets = [0, 256], sizes = [8, 128], strides = [1, 1]} : vector<8x384xf32> to vector<8x128xf32>
    %30 = arith.mulf %28, %14 : vector<8x128xf32>
    %31 = arith.mulf %27, %26 : vector<8x128xf32>
    %32 = arith.addf %30, %31 : vector<8x128xf32>
    %33 = math.tanh %32 : vector<8x128xf32>
    %34 = arith.mulf %29, %33 : vector<8x128xf32>
    %c0_21 = arith.constant 0 : index
    %c0_22 = arith.constant 0 : index
    %c0_23 = arith.constant 0 : index
    %35 = vector.load %arg8[%c0_21, %c0_22, %c0_23] : memref<8x8x128xf32, #tpu.memory_space<vmem>>, vector<1x8x128xf32>
    %36 = vector.shape_cast %35 : vector<1x8x128xf32> to vector<8x128xf32>
    %37 = vector.shape_cast %34 : vector<8x128xf32> to vector<1x8x128xf32>
    tpu.vector_store %arg8[%c0_21, %c0_22, %c0_23], %37 {strides = array<i32>} : memref<8x8x128xf32, #tpu.memory_space<vmem>>, vector<1x8x128xf32>,
    %c1 = arith.constant 1 : index
    %c0_24 = arith.constant 0 : index
    %c0_25 = arith.constant 0 : index
    %38 = vector.load %arg16[%c1, %c0_24, %c0_25] : memref<8x8x512xf32, #tpu.memory_space<vmem>>, vector<1x8x512xf32>
    %39 = vector.shape_cast %38 : vector<1x8x512xf32> to vector<8x512xf32>
    %cst_26 = arith.constant dense<0.000000e+00> : vector<8x512xf32>
    %40 = tpu.matmul %34, %12, %cst_26 {dimension_numbers = #tpu.dot_dimension_numbers<[1], [0], [0], [1], [0, 0, 1, 1], [], []>} : vector<8x128xf32>, vector<128x512xf32>, vector<8x512xf32> -> vector<8x512xf32>
    %41 = arith.addf %39, %40 : vector<8x512xf32>
    %42 = vector.extract_strided_slice %41 {offsets = [0, 0], sizes = [8, 384], strides = [1, 1]} : vector<8x512xf32> to vector<8x384xf32>
    %43 = arith.negf %42 : vector<8x384xf32>
    %44 = math.exp %43 : vector<8x384xf32>
    %cst_27 = arith.constant 1.000000e+00 : f32
    %45 = vector.broadcast %cst_27 : f32 to vector<8x384xf32>
    %46 = arith.addf %45, %44 : vector<8x384xf32>
    %47 = arith.divf %45, %46 : vector<8x384xf32>
    %48 = vector.extract_strided_slice %41 {offsets = [0, 384], sizes = [8, 128], strides = [1, 1]} : vector<8x512xf32> to vector<8x128xf32>
    %49 = math.tanh %48 : vector<8x128xf32>
    %50 = vector.extract_strided_slice %47 {offsets = [0, 0], sizes = [8, 128], strides = [1, 1]} : vector<8x384xf32> to vector<8x128xf32>
    %51 = vector.extract_strided_slice %47 {offsets = [0, 128], sizes = [8, 128], strides = [1, 1]} : vector<8x384xf32> to vector<8x128xf32>
    %52 = vector.extract_strided_slice %47 {offsets = [0, 256], sizes = [8, 128], strides = [1, 1]} : vector<8x384xf32> to vector<8x128xf32>
    %53 = arith.mulf %51, %32 : vector<8x128xf32>
    %54 = arith.mulf %50, %49 : vector<8x128xf32>
    %55 = arith.addf %53, %54 : vector<8x128xf32>
    %56 = math.tanh %55 : vector<8x128xf32>
    %57 = arith.mulf %52, %56 : vector<8x128xf32>
    %c1_28 = arith.constant 1 : index
    %c0_29 = arith.constant 0 : index
    %c0_30 = arith.constant 0 : index
    %58 = vector.load %arg8[%c1_28, %c0_29, %c0_30] : memref<8x8x128xf32, #tpu.memory_space<vmem>>, vector<1x8x128xf32>
    %59 = vector.shape_cast %58 : vector<1x8x128xf32> to vector<8x128xf32>
    %60 = vector.shape_cast %57 : vector<8x128xf32> to vector<1x8x128xf32>
    tpu.vector_store %arg8[%c1_28, %c0_29, %c0_30], %60 {strides = array<i32>} : memref<8x8x128xf32, #tpu.memory_space<vmem>>, vector<1x8x128xf32>,
    %c2 = arith.constant 2 : index
    %c0_31 = arith.constant 0 : index
    %c0_32 = arith.constant 0 : index
    %61 = vector.load %arg16[%c2, %c0_31, %c0_32] : memref<8x8x512xf32, #tpu.memory_space<vmem>>, vector<1x8x512xf32>
    %62 = vector.shape_cast %61 : vector<1x8x512xf32> to vector<8x512xf32>
    %cst_33 = arith.constant dense<0.000000e+00> : vector<8x512xf32>
    %63 = tpu.matmul %57, %12, %cst_33 {dimension_numbers = #tpu.dot_dimension_numbers<[1], [0], [0], [1], [0, 0, 1, 1], [], []>} : vector<8x128xf32>, vector<128x512xf32>, vector<8x512xf32> -> vector<8x512xf32>
    %64 = arith.addf %62, %63 : vector<8x512xf32>
    %65 = vector.extract_strided_slice %64 {offsets = [0, 0], sizes = [8, 384], strides = [1, 1]} : vector<8x512xf32> to vector<8x384xf32>
    %66 = arith.negf %65 : vector<8x384xf32>
    %67 = math.exp %66 : vector<8x384xf32>
    %cst_34 = arith.constant 1.000000e+00 : f32
    %68 = vector.broadcast %cst_34 : f32 to vector<8x384xf32>
    %69 = arith.addf %68, %67 : vector<8x384xf32>
    %70 = arith.divf %68, %69 : vector<8x384xf32>
    %71 = vector.extract_strided_slice %64 {offsets = [0, 384], sizes = [8, 128], strides = [1, 1]} : vector<8x512xf32> to vector<8x128xf32>
    %72 = math.tanh %71 : vector<8x128xf32>
    %73 = vector.extract_strided_slice %70 {offsets = [0, 0], sizes = [8, 128], strides = [1, 1]} : vector<8x384xf32> to vector<8x128xf32>
    %74 = vector.extract_strided_slice %70 {offsets = [0, 128], sizes = [8, 128], strides = [1, 1]} : vector<8x384xf32> to vector<8x128xf32>
    %75 = vector.extract_strided_slice %70 {offsets = [0, 256], sizes = [8, 128], strides = [1, 1]} : vector<8x384xf32> to vector<8x128xf32>
    %76 = arith.mulf %74, %55 : vector<8x128xf32>
    %77 = arith.mulf %73, %72 : vector<8x128xf32>
    %78 = arith.addf %76, %77 : vector<8x128xf32>
    %79 = math.tanh %78 : vector<8x128xf32>
    %80 = arith.mulf %75, %79 : vector<8x128xf32>
    %c2_35 = arith.constant 2 : index
    %c0_36 = arith.constant 0 : index
    %c0_37 = arith.constant 0 : index
    %81 = vector.load %arg8[%c2_35, %c0_36, %c0_37] : memref<8x8x128xf32, #tpu.memory_space<vmem>>, vector<1x8x128xf32>
    %82 = vector.shape_cast %81 : vector<1x8x128xf32> to vector<8x128xf32>
    %83 = vector.shape_cast %80 : vector<8x128xf32> to vector<1x8x128xf32>
    tpu.vector_store %arg8[%c2_35, %c0_36, %c0_37], %83 {strides = array<i32>} : memref<8x8x128xf32, #tpu.memory_space<vmem>>, vector<1x8x128xf32>,
    %c3 = arith.constant 3 : index
    %c0_38 = arith.constant 0 : index
    %c0_39 = arith.constant 0 : index
    %84 = vector.load %arg16[%c3, %c0_38, %c0_39] : memref<8x8x512xf32, #tpu.memory_space<vmem>>, vector<1x8x512xf32>
    %85 = vector.shape_cast %84 : vector<1x8x512xf32> to vector<8x512xf32>
    %cst_40 = arith.constant dense<0.000000e+00> : vector<8x512xf32>
    %86 = tpu.matmul %80, %12, %cst_40 {dimension_numbers = #tpu.dot_dimension_numbers<[1], [0], [0], [1], [0, 0, 1, 1], [], []>} : vector<8x128xf32>, vector<128x512xf32>, vector<8x512xf32> -> vector<8x512xf32>
    %87 = arith.addf %85, %86 : vector<8x512xf32>
    %88 = vector.extract_strided_slice %87 {offsets = [0, 0], sizes = [8, 384], strides = [1, 1]} : vector<8x512xf32> to vector<8x384xf32>
    %89 = arith.negf %88 : vector<8x384xf32>
    %90 = math.exp %89 : vector<8x384xf32>
    %cst_41 = arith.constant 1.000000e+00 : f32
    %91 = vector.broadcast %cst_41 : f32 to vector<8x384xf32>
    %92 = arith.addf %91, %90 : vector<8x384xf32>
    %93 = arith.divf %91, %92 : vector<8x384xf32>
    %94 = vector.extract_strided_slice %87 {offsets = [0, 384], sizes = [8, 128], strides = [1, 1]} : vector<8x512xf32> to vector<8x128xf32>
    %95 = math.tanh %94 : vector<8x128xf32>
    %96 = vector.extract_strided_slice %93 {offsets = [0, 0], sizes = [8, 128], strides = [1, 1]} : vector<8x384xf32> to vector<8x128xf32>
    %97 = vector.extract_strided_slice %93 {offsets = [0, 128], sizes = [8, 128], strides = [1, 1]} : vector<8x384xf32> to vector<8x128xf32>
    %98 = vector.extract_strided_slice %93 {offsets = [0, 256], sizes = [8, 128], strides = [1, 1]} : vector<8x384xf32> to vector<8x128xf32>
    %99 = arith.mulf %97, %78 : vector<8x128xf32>
    %100 = arith.mulf %96, %95 : vector<8x128xf32>
    %101 = arith.addf %99, %100 : vector<8x128xf32>
    %102 = math.tanh %101 : vector<8x128xf32>
    %103 = arith.mulf %98, %102 : vector<8x128xf32>
    %c3_42 = arith.constant 3 : index
    %c0_43 = arith.constant 0 : index
    %c0_44 = arith.constant 0 : index
    %104 = vector.load %arg8[%c3_42, %c0_43, %c0_44] : memref<8x8x128xf32, #tpu.memory_space<vmem>>, vector<1x8x128xf32>
    %105 = vector.shape_cast %104 : vector<1x8x128xf32> to vector<8x128xf32>
    %106 = vector.shape_cast %103 : vector<8x128xf32> to vector<1x8x128xf32>
    tpu.vector_store %arg8[%c3_42, %c0_43, %c0_44], %106 {strides = array<i32>} : memref<8x8x128xf32, #tpu.memory_space<vmem>>, vector<1x8x128xf32>,
    %c4 = arith.constant 4 : index
    %c0_45 = arith.constant 0 : index
    %c0_46 = arith.constant 0 : index
    %107 = vector.load %arg16[%c4, %c0_45, %c0_46] : memref<8x8x512xf32, #tpu.memory_space<vmem>>, vector<1x8x512xf32>
    %108 = vector.shape_cast %107 : vector<1x8x512xf32> to vector<8x512xf32>
    %cst_47 = arith.constant dense<0.000000e+00> : vector<8x512xf32>
    %109 = tpu.matmul %103, %12, %cst_47 {dimension_numbers = #tpu.dot_dimension_numbers<[1], [0], [0], [1], [0, 0, 1, 1], [], []>} : vector<8x128xf32>, vector<128x512xf32>, vector<8x512xf32> -> vector<8x512xf32>
    %110 = arith.addf %108, %109 : vector<8x512xf32>
    %111 = vector.extract_strided_slice %110 {offsets = [0, 0], sizes = [8, 384], strides = [1, 1]} : vector<8x512xf32> to vector<8x384xf32>
    %112 = arith.negf %111 : vector<8x384xf32>
    %113 = math.exp %112 : vector<8x384xf32>
    %cst_48 = arith.constant 1.000000e+00 : f32
    %114 = vector.broadcast %cst_48 : f32 to vector<8x384xf32>
    %115 = arith.addf %114, %113 : vector<8x384xf32>
    %116 = arith.divf %114, %115 : vector<8x384xf32>
    %117 = vector.extract_strided_slice %110 {offsets = [0, 384], sizes = [8, 128], strides = [1, 1]} : vector<8x512xf32> to vector<8x128xf32>
    %118 = math.tanh %117 : vector<8x128xf32>
    %119 = vector.extract_strided_slice %116 {offsets = [0, 0], sizes = [8, 128], strides = [1, 1]} : vector<8x384xf32> to vector<8x128xf32>
    %120 = vector.extract_strided_slice %116 {offsets = [0, 128], sizes = [8, 128], strides = [1, 1]} : vector<8x384xf32> to vector<8x128xf32>
    %121 = vector.extract_strided_slice %116 {offsets = [0, 256], sizes = [8, 128], strides = [1, 1]} : vector<8x384xf32> to vector<8x128xf32>
    %122 = arith.mulf %120, %101 : vector<8x128xf32>
    %123 = arith.mulf %119, %118 : vector<8x128xf32>
    %124 = arith.addf %122, %123 : vector<8x128xf32>
    %125 = math.tanh %124 : vector<8x128xf32>
    %126 = arith.mulf %121, %125 : vector<8x128xf32>
    %c4_49 = arith.constant 4 : index
    %c0_50 = arith.constant 0 : index
    %c0_51 = arith.constant 0 : index
    %127 = vector.load %arg8[%c4_49, %c0_50, %c0_51] : memref<8x8x128xf32, #tpu.memory_space<vmem>>, vector<1x8x128xf32>
    %128 = vector.shape_cast %127 : vector<1x8x128xf32> to vector<8x128xf32>
    %129 = vector.shape_cast %126 : vector<8x128xf32> to vector<1x8x128xf32>
    tpu.vector_store %arg8[%c4_49, %c0_50, %c0_51], %129 {strides = array<i32>} : memref<8x8x128xf32, #tpu.memory_space<vmem>>, vector<1x8x128xf32>,
    %c5 = arith.constant 5 : index
    %c0_52 = arith.constant 0 : index
    %c0_53 = arith.constant 0 : index
    %130 = vector.load %arg16[%c5, %c0_52, %c0_53] : memref<8x8x512xf32, #tpu.memory_space<vmem>>, vector<1x8x512xf32>
    %131 = vector.shape_cast %130 : vector<1x8x512xf32> to vector<8x512xf32>
    %cst_54 = arith.constant dense<0.000000e+00> : vector<8x512xf32>
    %132 = tpu.matmul %126, %12, %cst_54 {dimension_numbers = #tpu.dot_dimension_numbers<[1], [0], [0], [1], [0, 0, 1, 1], [], []>} : vector<8x128xf32>, vector<128x512xf32>, vector<8x512xf32> -> vector<8x512xf32>
    %133 = arith.addf %131, %132 : vector<8x512xf32>
    %134 = vector.extract_strided_slice %133 {offsets = [0, 0], sizes = [8, 384], strides = [1, 1]} : vector<8x512xf32> to vector<8x384xf32>
    %135 = arith.negf %134 : vector<8x384xf32>
    %136 = math.exp %135 : vector<8x384xf32>
    %cst_55 = arith.constant 1.000000e+00 : f32
    %137 = vector.broadcast %cst_55 : f32 to vector<8x384xf32>
    %138 = arith.addf %137, %136 : vector<8x384xf32>
    %139 = arith.divf %137, %138 : vector<8x384xf32>
    %140 = vector.extract_strided_slice %133 {offsets = [0, 384], sizes = [8, 128], strides = [1, 1]} : vector<8x512xf32> to vector<8x128xf32>
    %141 = math.tanh %140 : vector<8x128xf32>
    %142 = vector.extract_strided_slice %139 {offsets = [0, 0], sizes = [8, 128], strides = [1, 1]} : vector<8x384xf32> to vector<8x128xf32>
    %143 = vector.extract_strided_slice %139 {offsets = [0, 128], sizes = [8, 128], strides = [1, 1]} : vector<8x384xf32> to vector<8x128xf32>
    %144 = vector.extract_strided_slice %139 {offsets = [0, 256], sizes = [8, 128], strides = [1, 1]} : vector<8x384xf32> to vector<8x128xf32>
    %145 = arith.mulf %143, %124 : vector<8x128xf32>
    %146 = arith.mulf %142, %141 : vector<8x128xf32>
    %147 = arith.addf %145, %146 : vector<8x128xf32>
    %148 = math.tanh %147 : vector<8x128xf32>
    %149 = arith.mulf %144, %148 : vector<8x128xf32>
    %c5_56 = arith.constant 5 : index
    %c0_57 = arith.constant 0 : index
    %c0_58 = arith.constant 0 : index
    %150 = vector.load %arg8[%c5_56, %c0_57, %c0_58] : memref<8x8x128xf32, #tpu.memory_space<vmem>>, vector<1x8x128xf32>
    %151 = vector.shape_cast %150 : vector<1x8x128xf32> to vector<8x128xf32>
    %152 = vector.shape_cast %149 : vector<8x128xf32> to vector<1x8x128xf32>
    tpu.vector_store %arg8[%c5_56, %c0_57, %c0_58], %152 {strides = array<i32>} : memref<8x8x128xf32, #tpu.memory_space<vmem>>, vector<1x8x128xf32>,
    %c6 = arith.constant 6 : index
    %c0_59 = arith.constant 0 : index
    %c0_60 = arith.constant 0 : index
    %153 = vector.load %arg16[%c6, %c0_59, %c0_60] : memref<8x8x512xf32, #tpu.memory_space<vmem>>, vector<1x8x512xf32>
    %154 = vector.shape_cast %153 : vector<1x8x512xf32> to vector<8x512xf32>
    %cst_61 = arith.constant dense<0.000000e+00> : vector<8x512xf32>
    %155 = tpu.matmul %149, %12, %cst_61 {dimension_numbers = #tpu.dot_dimension_numbers<[1], [0], [0], [1], [0, 0, 1, 1], [], []>} : vector<8x128xf32>, vector<128x512xf32>, vector<8x512xf32> -> vector<8x512xf32>
    %156 = arith.addf %154, %155 : vector<8x512xf32>
    %157 = vector.extract_strided_slice %156 {offsets = [0, 0], sizes = [8, 384], strides = [1, 1]} : vector<8x512xf32> to vector<8x384xf32>
    %158 = arith.negf %157 : vector<8x384xf32>
    %159 = math.exp %158 : vector<8x384xf32>
    %cst_62 = arith.constant 1.000000e+00 : f32
    %160 = vector.broadcast %cst_62 : f32 to vector<8x384xf32>
    %161 = arith.addf %160, %159 : vector<8x384xf32>
    %162 = arith.divf %160, %161 : vector<8x384xf32>
    %163 = vector.extract_strided_slice %156 {offsets = [0, 384], sizes = [8, 128], strides = [1, 1]} : vector<8x512xf32> to vector<8x128xf32>
    %164 = math.tanh %163 : vector<8x128xf32>
    %165 = vector.extract_strided_slice %162 {offsets = [0, 0], sizes = [8, 128], strides = [1, 1]} : vector<8x384xf32> to vector<8x128xf32>
    %166 = vector.extract_strided_slice %162 {offsets = [0, 128], sizes = [8, 128], strides = [1, 1]} : vector<8x384xf32> to vector<8x128xf32>
    %167 = vector.extract_strided_slice %162 {offsets = [0, 256], sizes = [8, 128], strides = [1, 1]} : vector<8x384xf32> to vector<8x128xf32>
    %168 = arith.mulf %166, %147 : vector<8x128xf32>
    %169 = arith.mulf %165, %164 : vector<8x128xf32>
    %170 = arith.addf %168, %169 : vector<8x128xf32>
    %171 = math.tanh %170 : vector<8x128xf32>
    %172 = arith.mulf %167, %171 : vector<8x128xf32>
    %c6_63 = arith.constant 6 : index
    %c0_64 = arith.constant 0 : index
    %c0_65 = arith.constant 0 : index
    %173 = vector.load %arg8[%c6_63, %c0_64, %c0_65] : memref<8x8x128xf32, #tpu.memory_space<vmem>>, vector<1x8x128xf32>
    %174 = vector.shape_cast %173 : vector<1x8x128xf32> to vector<8x128xf32>
    %175 = vector.shape_cast %172 : vector<8x128xf32> to vector<1x8x128xf32>
    tpu.vector_store %arg8[%c6_63, %c0_64, %c0_65], %175 {strides = array<i32>} : memref<8x8x128xf32, #tpu.memory_space<vmem>>, vector<1x8x128xf32>,
    %c7 = arith.constant 7 : index
    %c0_66 = arith.constant 0 : index
    %c0_67 = arith.constant 0 : index
    %176 = vector.load %arg16[%c7, %c0_66, %c0_67] : memref<8x8x512xf32, #tpu.memory_space<vmem>>, vector<1x8x512xf32>
    %177 = vector.shape_cast %176 : vector<1x8x512xf32> to vector<8x512xf32>
    %cst_68 = arith.constant dense<0.000000e+00> : vector<8x512xf32>
    %178 = tpu.matmul %172, %12, %cst_68 {dimension_numbers = #tpu.dot_dimension_numbers<[1], [0], [0], [1], [0, 0, 1, 1], [], []>} : vector<8x128xf32>, vector<128x512xf32>, vector<8x512xf32> -> vector<8x512xf32>
    %179 = arith.addf %177, %178 : vector<8x512xf32>
    %180 = vector.extract_strided_slice %179 {offsets = [0, 0], sizes = [8, 384], strides = [1, 1]} : vector<8x512xf32> to vector<8x384xf32>
    %181 = arith.negf %180 : vector<8x384xf32>
    %182 = math.exp %181 : vector<8x384xf32>
    %cst_69 = arith.constant 1.000000e+00 : f32
    %183 = vector.broadcast %cst_69 : f32 to vector<8x384xf32>
    %184 = arith.addf %183, %182 : vector<8x384xf32>
    %185 = arith.divf %183, %184 : vector<8x384xf32>
    %186 = vector.extract_strided_slice %179 {offsets = [0, 384], sizes = [8, 128], strides = [1, 1]} : vector<8x512xf32> to vector<8x128xf32>
    %187 = math.tanh %186 : vector<8x128xf32>
    %188 = vector.extract_strided_slice %185 {offsets = [0, 0], sizes = [8, 128], strides = [1, 1]} : vector<8x384xf32> to vector<8x128xf32>
    %189 = vector.extract_strided_slice %185 {offsets = [0, 128], sizes = [8, 128], strides = [1, 1]} : vector<8x384xf32> to vector<8x128xf32>
    %190 = vector.extract_strided_slice %185 {offsets = [0, 256], sizes = [8, 128], strides = [1, 1]} : vector<8x384xf32> to vector<8x128xf32>
    %191 = arith.mulf %189, %170 : vector<8x128xf32>
    %192 = arith.mulf %188, %187 : vector<8x128xf32>
    %193 = arith.addf %191, %192 : vector<8x128xf32>
    %194 = math.tanh %193 : vector<8x128xf32>
    %195 = arith.mulf %190, %194 : vector<8x128xf32>
    %c7_70 = arith.constant 7 : index
    %c0_71 = arith.constant 0 : index
    %c0_72 = arith.constant 0 : index
    %196 = vector.load %arg8[%c7_70, %c0_71, %c0_72] : memref<8x8x128xf32, #tpu.memory_space<vmem>>, vector<1x8x128xf32>
    %197 = vector.shape_cast %196 : vector<1x8x128xf32> to vector<8x128xf32>
    %198 = vector.shape_cast %195 : vector<8x128xf32> to vector<1x8x128xf32>
    tpu.vector_store %arg8[%c7_70, %c0_71, %c0_72], %198 {strides = array<i32>} : memref<8x8x128xf32, #tpu.memory_space<vmem>>, vector<1x8x128xf32>,
    %c0_73 = arith.constant 0 : index
    %c0_74 = arith.constant 0 : index
    %199 = vector.load %arg14[%c0_73, %c0_74] : memref<8x128xf32, #tpu.memory_space<vmem>>, vector<8x128xf32>
    tpu.vector_store %arg14[%c0_73, %c0_74], %195 {strides = array<i32>} : memref<8x128xf32, #tpu.memory_space<vmem>>, vector<8x128xf32>,
    %c0_75 = arith.constant 0 : index
    %c0_76 = arith.constant 0 : index
    %200 = vector.load %arg15[%c0_75, %c0_76] : memref<8x128xf32, #tpu.memory_space<vmem>>, vector<8x128xf32>
    tpu.vector_store %arg15[%c0_75, %c0_76], %193 {strides = array<i32>} : memref<8x128xf32, #tpu.memory_space<vmem>>, vector<8x128xf32>,
    %c0_i32_77 = arith.constant 0 : i32
    %201 = arith.cmpi eq, %arg1, %c0_i32_77 : i32
    %202 = arith.extui %201 : i1 to i32
    %c0_i32_78 = arith.constant 0 : i32
    %203 = arith.cmpi ne, %202, %c0_i32_78 : i32
    scf.if %203 {
      %c0_79 = arith.constant 0 : index
      %c0_80 = arith.constant 0 : index
      %204 = vector.load %arg9[%c0_79, %c0_80] : memref<8x128xf32, #tpu.memory_space<vmem>>, vector<8x128xf32>
      tpu.vector_store %arg9[%c0_79, %c0_80], %195 {strides = array<i32>} : memref<8x128xf32, #tpu.memory_space<vmem>>, vector<8x128xf32>,
      %c0_81 = arith.constant 0 : index
      %c0_82 = arith.constant 0 : index
      %205 = vector.load %arg10[%c0_81, %c0_82] : memref<8x128xf32, #tpu.memory_space<vmem>>, vector<8x128xf32>
      tpu.vector_store %arg10[%c0_81, %c0_82], %193 {strides = array<i32>} : memref<8x128xf32, #tpu.memory_space<vmem>>, vector<8x128xf32>,
    } else {
    }
    return
  }
  func.func @transform_0(%arg0: i32, %arg1: i32) -> (i32, i32, i32) {
    %c0_i32 = arith.constant 0 : i32
    %c0_i32_0 = arith.constant 0 : i32
    return %arg1, %arg0, %c0_i32 : i32, i32, i32
  }
  func.func @transform_1(%arg0: i32, %arg1: i32) -> (i32, i32) {
    %c0_i32 = arith.constant 0 : i32
    %c0_i32_0 = arith.constant 0 : i32
    return %arg0, %c0_i32 : i32, i32
  }
  func.func @transform_2(%arg0: i32, %arg1: i32) -> (i32, i32) {
    %c0_i32 = arith.constant 0 : i32
    %c0_i32_0 = arith.constant 0 : i32
    return %arg0, %c0_i32 : i32, i32
  }
  func.func @transform_6(%arg0: i32, %arg1: i32) -> (i32, i32, i32) {
    %c0_i32 = arith.constant 0 : i32
    %c0_i32_0 = arith.constant 0 : i32
    return %arg1, %arg0, %c0_i32 : i32, i32, i32
  }
  func.func @transform_7(%arg0: i32, %arg1: i32) -> (i32, i32) {
    %c0_i32 = arith.constant 0 : i32
    %c0_i32_0 = arith.constant 0 : i32
    return %arg0, %c0_i32 : i32, i32
  }
  func.func @transform_8(%arg0: i32, %arg1: i32) -> (i32, i32) {
    %c0_i32 = arith.constant 0 : i32
    %c0_i32_0 = arith.constant 0 : i32
    return %arg0, %c0_i32 : i32, i32
  }
}

</mosaic_0001>

<llo_original>
// kernel: tpu_custom_call.1
$region0: #{tpu_custom_call.1}
  #allocation0 [shape = 'u32[]', space=smem, size = 0x4, offset = 0x4, fixed_abs, tag = 'smem constant byte address 0x4 - core index']
  #allocation1 [shape = 'u32[144,128]{1,0:T(1,128)}', space=vmem, size = 0x12000, scoped, tag = 'internal scratch']
  #allocation2 [shape = 'f32[32,512]{1,0:T(8,128)}', space=vmem, size = 0x10000, scoped, tag = 'scratch operand']
  #allocation3 [shape = 'f32[128,512]{1,0:T(8,128)}', space=vmem, size = 0x40000, scoped, tag = 'scratch operand']
  #allocation4 [shape = 'f32[1,512]{1,0:T(1,128)}', space=vmem, size = 0x800, scoped, tag = 'scratch operand']
  #allocation5 [shape = 'f32[8,128]{1,0:T(8,128)}', space=vmem, size = 0x1000, scoped, tag = 'scratch operand']
  #allocation6 [shape = 'f32[8,128]{1,0:T(8,128)}', space=vmem, size = 0x1000, scoped, tag = 'scratch operand']
  #allocation7 [shape = 'f32[8,8,512]{2,1,0:T(8,128)}', space=vmem, size = 0x20000, scoped, tag = 'scratch operand']
  #allocation19 [shape = 's32[]', space=sflag, size = 0x4, offset = 0, fixed_abs, tag = 'sflag constant byte address 0x0 - dummy sync flag']
  #allocation20 [shape = 's32[]', space=sflag, size = 0x4, offset = 0, fixed_abs, tag = 'sflag constant byte address 0x0 - dummy sync flag']
  #allocation21 [shape = 'u32[]', space=smem, size = 0x4, offset = 0x44, fixed_abs, tag = 'smem constant byte address 0x44 - assertion arg 0']
  #allocation22 [shape = 'u32[]', space=smem, size = 0x4, offset = 0x48, fixed_abs, tag = 'smem constant byte address 0x48 - assertion arg 1']
  #allocation24 [shape = 's32[]', space=sflag, size = 0x4, offset = 0, fixed_abs, tag = 'sflag constant byte address 0x0 - dummy sync flag']
  #allocation25 [shape = 's32[]', space=sflag, size = 0x4, offset = 0, fixed_abs, tag = 'sflag constant byte address 0x0 - dummy sync flag']
  #allocation27 [shape = 's32[]', space=sflag, size = 0x4, offset = 0, fixed_abs, tag = 'sflag constant byte address 0x0 - dummy sync flag']
  %s0 = inlined_call_operand.hbm [shape: f32[8,16,32], index: 0, kind: input, shape index: {}]
  %s1 = inlined_call_operand.hbm [shape: f32[16,128], index: 1, kind: input, shape index: {}]
  %s2 = inlined_call_operand.hbm [shape: f32[16,128], index: 2, kind: input, shape index: {}]
  %s3 = inlined_call_operand.hbm [shape: f32[32,512], index: 3, kind: input, shape index: {}]
  %s4 = inlined_call_operand.hbm [shape: f32[128,512], index: 4, kind: input, shape index: {}]
  %s5 = inlined_call_operand.vmem [shape: f32[1,512], index: 5, kind: input, shape index: {}]
  %s6 = inlined_call_operand.hbm [shape: f32[8,16,128], index: 6, kind: output, shape index: {0}]
  %s7 = inlined_call_operand.hbm [shape: f32[16,128], index: 7, kind: output, shape index: {1}]
  %s8 = inlined_call_operand.hbm [shape: f32[16,128], index: 8, kind: output, shape index: {2}]
  %9 = xla_tuple %s6, %s7, %s8
  %s10 = sld [smem:[#allocation0]]
  $region122: #{tpu_custom_call.1} parent=0
    _
  %s12 = ssub.s32 1, %s10
  %s13 = scalar_select 0, %s12, %s10
  $region1: #{tpu_custom_call.1} parent=0
    #allocation8 [shape = 'u8[65536]{0}', space=vmem, size = 0x10000, scoped, tag = 'input window, operand 0']
    #allocation9 [shape = 's32[2]{0}', space=sflag, size = 0x8, scoped, tag = 'scoped memory for tpu_custom_call.1']
    #allocation10 [shape = 's32[2]{0}', space=sflag, size = 0x8, scoped, tag = 'scoped memory for tpu_custom_call.1']
    #allocation11 [shape = 'u8[8192]{0}', space=vmem, size = 0x2000, scoped, tag = 'input window, operand 1']
    #allocation12 [shape = 's32[2]{0}', space=sflag, size = 0x8, scoped, tag = 'scoped memory for tpu_custom_call.1']
    #allocation13 [shape = 'u8[8192]{0}', space=vmem, size = 0x2000, scoped, tag = 'input window, operand 2']
    #allocation14 [shape = 'u8[65536]{0}', space=vmem, size = 0x10000, scoped, tag = 'output window, operand 0']
    #allocation15 [shape = 'u8[8192]{0}', space=vmem, size = 0x2000, scoped, tag = 'output window, operand 1']
    #allocation16 [shape = 's32[2]{0}', space=sflag, size = 0x8, scoped, tag = 'scoped memory for tpu_custom_call.1']
    #allocation17 [shape = 'u8[8192]{0}', space=vmem, size = 0x2000, scoped, tag = 'output window, operand 2']
    %14 = vsyncpa [#allocation9], 0
    %s15 = scalar_lea.sflag [#allocation9], 1
    %16 = vsyncpa %s15, 0
    %17 = vsyncpa [#allocation12], 0
    %s18 = scalar_lea.sflag [#allocation12], 1
    %19 = vsyncpa %s18, 0
    %20 = vsyncpa [#allocation10], 0
    %s21 = scalar_lea.sflag [#allocation10], 1
    %22 = vsyncpa %s21, 0
    %23 = vsyncpa [#allocation16], 0
    %s24 = scalar_lea.sflag [#allocation16], 1
    %25 = vsyncpa %s24, 0
    loop: start=0, step=1, limit=4
    $region2: #{tpu_custom_call.1} parent=1 // loop_pre_header
      _
    $region3: #{tpu_custom_call.1} parent=1 // loop_header
      %s27 = sphi 0, %s31
      %p28 = scmp.ge.s32.totalorder %s27, 4
      %s34 = sphi 0, %s46
      %s35 = sphi 0, %s42
      %s36 = sphi 0, %s34
      %s37 = sphi 0, %s35
      %s38 = sphi 0, %s36
      %s39 = sphi 0, %s37
      %s51 = sphi 0, %s53
      %s54 = sphi 0, %s51
      %s55 = sphi 0, %s54
      %s71 = sphi 0, %s55
      %s77 = sphi 0, %s79
      %s80 = sphi 0, %s77
      %s81 = sphi 0, %s80
      %s97 = sphi 0, %s81
      %s103 = sphi 0, %s105
      %s106 = sphi 0, %s103
      %s107 = sphi 0, %s106
      %s123 = sphi 0, %s107
      %s131 = sphi 0, %s133
      %s134 = sphi 0, %s131
      %s135 = sphi 0, %s134
      %s151 = sphi 0, %s135
      %s157 = sphi 0, %s159
      %s160 = sphi 0, %s157
      %s161 = sphi 0, %s160
      %s177 = sphi 0, %s161
      %s183 = sphi 0, %s185
      %s186 = sphi 0, %s183
      %s187 = sphi 0, %s186
      %s203 = sphi 0, %s187
    $region4: #{tpu_custom_call.1} parent=1 // loop_header_branch
      %30 = sbr.rel (%p28) target = $region8
    $region5: #{tpu_custom_call.1} parent=1 // loop_body
      %s32 = ssub.s32 %s27, 1
      %s33 = ssub.s32 %s27, 2
      %s40 = sadd.s32 1, %s35
      %p41 = scmp.ge.s32.totalorder %s40, 1
      %s42 = scalar_select %p41, 0, %s40
      %s43 = sadd.s32 1, %s34
      %s44 = scalar_select %p41, %s43, %s34
      %p45 = scmp.ge.s32.totalorder %s44, 2
      %s46 = scalar_select %p45, 0, %s44
      %s47 = ssub.s32 %s35, %s42
      %s48 = ssub.s32 %s34, %s46
      %s49 = sor.u32 %s47, %s48
      %p50 = scmp.eq.s32.totalorder %s49, 0
      %s52 = sadd.s32 %s51, 1
      %s53 = scalar_select %p50, %s51, %s52
      %p56 = pneg %p50
      %p57 = scmp.eq.s32.totalorder %s27, 1
      %p58 = por %p56, %p57
      %p59 = scmp.ne.s32.totalorder %s51, %s54
      %p60 = scmp.eq.s32.totalorder %s27, 0
      %p61 = por %p59, %p60
      %p62 = scmp.ne.s32.totalorder %s51, %s54
      %p63 = scmp.eq.s32.totalorder %s32, 1
      %p64 = por %p62, %p63
      %p65 = scmp.ne.s32.totalorder %s54, %s55
      %p66 = scmp.eq.s32.totalorder %s32, 0
      %p67 = por %p65, %p66
      %p68 = scmp.ne.s32.totalorder %s54, %s55
      %p69 = scmp.eq.s32.totalorder %s33, 1
      %p70 = por %p68, %p69
      %p72 = scmp.ne.s32.totalorder %s55, %s71
      %p73 = scmp.eq.s32.totalorder %s33, 0
      %p74 = por %p72, %p73
      %s75 = ssub.s32 %s34, %s46
      %p76 = scmp.eq.s32.totalorder %s75, 0
      %s78 = sadd.s32 %s77, 1
      %s79 = scalar_select %p76, %s77, %s78
      %p82 = pneg %p76
      %p83 = scmp.eq.s32.totalorder %s27, 1
      %p84 = por %p82, %p83
      %p85 = scmp.ne.s32.totalorder %s77, %s80
      %p86 = scmp.eq.s32.totalorder %s27, 0
      %p87 = por %p85, %p86
      %p88 = scmp.ne.s32.totalorder %s77, %s80
      %p89 = scmp.eq.s32.totalorder %s32, 1
      %p90 = por %p88, %p89
      %p91 = scmp.ne.s32.totalorder %s80, %s81
      %p92 = scmp.eq.s32.totalorder %s32, 0
      %p93 = por %p91, %p92
      %p94 = scmp.ne.s32.totalorder %s80, %s81
      %p95 = scmp.eq.s32.totalorder %s33, 1
      %p96 = por %p94, %p95
      %p98 = scmp.ne.s32.totalorder %s81, %s97
      %p99 = scmp.eq.s32.totalorder %s33, 0
      %p100 = por %p98, %p99
      %s101 = ssub.s32 %s34, %s46
      %p102 = scmp.eq.s32.totalorder %s101, 0
      %s104 = sadd.s32 %s103, 1
      %s105 = scalar_select %p102, %s103, %s104
      %p108 = pneg %p102
      %p109 = scmp.eq.s32.totalorder %s27, 1
      %p110 = por %p108, %p109
      %p111 = scmp.ne.s32.totalorder %s103, %s106
      %p112 = scmp.eq.s32.totalorder %s27, 0
      %p113 = por %p111, %p112
      %p114 = scmp.ne.s32.totalorder %s103, %s106
      %p115 = scmp.eq.s32.totalorder %s32, 1
      %p116 = por %p114, %p115
      %p117 = scmp.ne.s32.totalorder %s106, %s107
      %p118 = scmp.eq.s32.totalorder %s32, 0
      %p119 = por %p117, %p118
      %p120 = scmp.ne.s32.totalorder %s106, %s107
      %p121 = scmp.eq.s32.totalorder %s33, 1
      %p122 = por %p120, %p121
      %p124 = scmp.ne.s32.totalorder %s107, %s123
      %p125 = scmp.eq.s32.totalorder %s33, 0
      %p126 = por %p124, %p125
      %s127 = ssub.s32 %s35, %s42
      %s128 = ssub.s32 %s34, %s46
      %s129 = sor.u32 %s127, %s128
      %p130 = scmp.eq.s32.totalorder %s129, 0
      %s132 = sadd.s32 %s131, 1
      %s133 = scalar_select %p130, %s131, %s132
      %p136 = pneg %p130
      %p137 = scmp.eq.s32.totalorder %s27, 1
      %p138 = por %p136, %p137
      %p139 = scmp.ne.s32.totalorder %s131, %s134
      %p140 = scmp.eq.s32.totalorder %s27, 0
      %p141 = por %p139, %p140
      %p142 = scmp.ne.s32.totalorder %s131, %s134
      %p143 = scmp.eq.s32.totalorder %s32, 1
      %p144 = por %p142, %p143
      %p145 = scmp.ne.s32.totalorder %s134, %s135
      %p146 = scmp.eq.s32.totalorder %s32, 0
      %p147 = por %p145, %p146
      %p148 = scmp.ne.s32.totalorder %s134, %s135
      %p149 = scmp.eq.s32.totalorder %s33, 1
      %p150 = por %p148, %p149
      %p152 = scmp.ne.s32.totalorder %s135, %s151
      %p153 = scmp.eq.s32.totalorder %s33, 0
      %p154 = por %p152, %p153
      %s155 = ssub.s32 %s34, %s46
      %p156 = scmp.eq.s32.totalorder %s155, 0
      %s158 = sadd.s32 %s157, 1
      %s159 = scalar_select %p156, %s157, %s158
      %p162 = pneg %p156
      %p163 = scmp.eq.s32.totalorder %s27, 1
      %p164 = por %p162, %p163
      %p165 = scmp.ne.s32.totalorder %s157, %s160
      %p166 = scmp.eq.s32.totalorder %s27, 0
      %p167 = por %p165, %p166
      %p168 = scmp.ne.s32.totalorder %s157, %s160
      %p169 = scmp.eq.s32.totalorder %s32, 1
      %p170 = por %p168, %p169
      %p171 = scmp.ne.s32.totalorder %s160, %s161
      %p172 = scmp.eq.s32.totalorder %s32, 0
      %p173 = por %p171, %p172
      %p174 = scmp.ne.s32.totalorder %s160, %s161
      %p175 = scmp.eq.s32.totalorder %s33, 1
      %p176 = por %p174, %p175
      %p178 = scmp.ne.s32.totalorder %s161, %s177
      %p179 = scmp.eq.s32.totalorder %s33, 0
      %p180 = por %p178, %p179
      %s181 = ssub.s32 %s34, %s46
      %p182 = scmp.eq.s32.totalorder %s181, 0
      %s184 = sadd.s32 %s183, 1
      %s185 = scalar_select %p182, %s183, %s184
      %p188 = pneg %p182
      %p189 = scmp.eq.s32.totalorder %s27, 1
      %p190 = por %p188, %p189
      %p191 = scmp.ne.s32.totalorder %s183, %s186
      %p192 = scmp.eq.s32.totalorder %s27, 0
      %p193 = por %p191, %p192
      %p194 = scmp.ne.s32.totalorder %s183, %s186
      %p195 = scmp.eq.s32.totalorder %s32, 1
      %p196 = por %p194, %p195
      %p197 = scmp.ne.s32.totalorder %s186, %s187
      %p198 = scmp.eq.s32.totalorder %s32, 0
      %p199 = por %p197, %p198
      %p200 = scmp.ne.s32.totalorder %s186, %s187
      %p201 = scmp.eq.s32.totalorder %s33, 1
      %p202 = por %p200, %p201
      %p204 = scmp.ne.s32.totalorder %s187, %s203
      %p205 = scmp.eq.s32.totalorder %s33, 0
      %p206 = por %p204, %p205
      %p207 = scmp.le.s32.totalorder 1, %s27
      %p208 = scmp.lt.s32.totalorder %s27, 3
      %p209 = pnand %p207, %p208
      %p210 = pneg %p209
      // Predicated region
      $region9: #{tpu_custom_call.1} parent=5 // pred_check
        _
      $region10: #{tpu_custom_call.1} parent=5 // pred_check_branch
        %212 = sbr.rel (%p209) target = $region12
      $region11: #{tpu_custom_call.1} parent=5 // pred_region
        %s213 = ssub.s32 %s27, 1
      $region12: #{tpu_custom_call.1} parent=5 // pred_fallthru
        _
      %p214 = scmp.lt.s32.totalorder %s27, 2
      // Predicated region
      $region13: #{tpu_custom_call.1} parent=5 // pred_check
        %p215 = pneg %p214
      $region14: #{tpu_custom_call.1} parent=5 // pred_check_branch
        %217 = sbr.rel (%p215) target = $region16
      $region15: #{tpu_custom_call.1} parent=5 // pred_region
        // Predicated region
        $region17: #{tpu_custom_call.1} parent=15 // pred_check
          %p218 = pneg %p61
        $region18: #{tpu_custom_call.1} parent=15 // pred_check_branch
          %220 = sbr.rel (%p218) target = $region20
        $region19: #{tpu_custom_call.1} parent=15 // pred_region
          %s221 = sand.u32 %s51, 1
          %s222 = scalar_lea.sflag [#allocation9], %s221
          %s223 = sand.u32 %s51, 1
          %s224 = smul.addr %s223, 64
          %s225 = scalar_lea.vmem [#allocation8], %s224
          %s226 = smul.u32 8, %s35
          %s228 = ssub.s32 1024, 1024
          %229 = vsyncadd %s222, %s228
          %s230 = smul.addr %s226, 2
          %s231 = sadd.s32 %s34, %s230
          %s232 = smul.addr %s231, 128
          %s233 = scalar_lea.hbm %s0, %s232
          %s234 = sshll.u32 %s225, 4
          %s235 = int_to_ptr.vmem [resolvable:$true] %s234
          %240 = dma.hbm_to_vmem [thread:$0]  %s233, 1024, %s235, %s222, 256, 128, 8
        $region20: #{tpu_custom_call.1} parent=15 // pred_fallthru
          _
        // Predicated region
        $region21: #{tpu_custom_call.1} parent=15 // pred_check
          %p241 = pneg %p87
        $region22: #{tpu_custom_call.1} parent=15 // pred_check_branch
          %243 = sbr.rel (%p241) target = $region24
        $region23: #{tpu_custom_call.1} parent=15 // pred_region
          %s244 = sand.u32 %s27, 1
          %s245 = scalar_lea.sflag [#allocation12], %s244
          %s246 = sand.u32 %s77, 1
          %s247 = smul.addr %s246, 8
          %s248 = scalar_lea.vmem [#allocation11], %s247
          %s250 = ssub.s32 128, 128
          %251 = vsyncadd %s245, %s250
          %s252 = smul.addr %s34, 128
          %s253 = scalar_lea.hbm %s1, %s252
          %s255 = sshll.u32 %s248, 4
          %s256 = int_to_ptr.vmem [resolvable:$true] %s255
          %258 = dma.hbm_to_vmem [thread:$0]  %s253, 128, %s256, %s245
        $region24: #{tpu_custom_call.1} parent=15 // pred_fallthru
          _
        // Predicated region
        $region25: #{tpu_custom_call.1} parent=15 // pred_check
          %p259 = pneg %p113
        $region26: #{tpu_custom_call.1} parent=15 // pred_check_branch
          %261 = sbr.rel (%p259) target = $region28
        $region27: #{tpu_custom_call.1} parent=15 // pred_region
          %s262 = sand.u32 %s27, 1
          %s263 = scalar_lea.sflag [#allocation12], %s262
          %s264 = sand.u32 %s103, 1
          %s265 = smul.addr %s264, 8
          %s266 = scalar_lea.vmem [#allocation13], %s265
          %s268 = ssub.s32 128, 128
          %269 = vsyncadd %s263, %s268
          %s270 = smul.addr %s34, 128
          %s271 = scalar_lea.hbm %s2, %s270
          %s273 = sshll.u32 %s266, 4
          %s274 = int_to_ptr.vmem [resolvable:$true] %s273
          %276 = dma.hbm_to_vmem [thread:$0]  %s271, 128, %s274, %s263
        $region28: #{tpu_custom_call.1} parent=15 // pred_fallthru
          _
      $region16: #{tpu_custom_call.1} parent=5 // pred_fallthru
        _
      %p277 = scmp.le.s32.totalorder 1, %s27
      %p278 = scmp.lt.s32.totalorder %s27, 3
      %p279 = pnand %p277, %p278
      %p280 = pneg %p279
      // Predicated region
      $region29: #{tpu_custom_call.1} parent=5 // pred_check
        _
      $region30: #{tpu_custom_call.1} parent=5 // pred_check_branch
        %282 = sbr.rel (%p279) target = $region32
      $region31: #{tpu_custom_call.1} parent=5 // pred_region
        %s283 = ssub.s32 %s27, 1
        %s284 = sand.u32 %s54, 1
        %s285 = scalar_lea.sflag [#allocation9], %s284
        %s286 = sand.u32 %s54, 1
        %s287 = smul.addr %s286, 64
        %s288 = scalar_lea.vmem [#allocation8], %s287
        // Predicated region
        $region33: #{tpu_custom_call.1} parent=31 // pred_check
          %p289 = pneg %p67
        $region34: #{tpu_custom_call.1} parent=31 // pred_check_branch
          %291 = sbr.rel (%p289) target = $region36
        $region35: #{tpu_custom_call.1} parent=31 // pred_region
          %292 = dma.done %s285, 1024
        $region36: #{tpu_custom_call.1} parent=31 // pred_fallthru
          _
        %s293 = sand.u32 %s32, 1
        %s294 = scalar_lea.sflag [#allocation12], %s293
        %s295 = sand.u32 %s80, 1
        %s296 = smul.addr %s295, 8
        %s297 = scalar_lea.vmem [#allocation11], %s296
        // Predicated region
        $region37: #{tpu_custom_call.1} parent=31 // pred_check
          %p298 = pneg %p93
        $region38: #{tpu_custom_call.1} parent=31 // pred_check_branch
          %300 = sbr.rel (%p298) target = $region40
        $region39: #{tpu_custom_call.1} parent=31 // pred_region
          %301 = dma.done %s294, 128
        $region40: #{tpu_custom_call.1} parent=31 // pred_fallthru
          _
        %s302 = sand.u32 %s32, 1
        %s303 = scalar_lea.sflag [#allocation12], %s302
        %s304 = sand.u32 %s106, 1
        %s305 = smul.addr %s304, 8
        %s306 = scalar_lea.vmem [#allocation13], %s305
        // Predicated region
        $region41: #{tpu_custom_call.1} parent=31 // pred_check
          %p307 = pneg %p119
        $region42: #{tpu_custom_call.1} parent=31 // pred_check_branch
          %309 = sbr.rel (%p307) target = $region44
        $region43: #{tpu_custom_call.1} parent=31 // pred_region
          %310 = dma.done %s303, 128
        $region44: #{tpu_custom_call.1} parent=31 // pred_fallthru
          _
        %s311 = sand.u32 %s54, 1
        %s312 = scalar_lea.sflag [#allocation9], %s311
        %s313 = sand.u32 %s54, 1
        %s314 = smul.addr %s313, 64
        %s315 = scalar_lea.vmem [#allocation8], %s314
        %p316 = pneg %p67
        %p317 = pneg %p64
        %s318 = sand.u32 %s32, 1
        %s319 = scalar_lea.sflag [#allocation12], %s318
        %s320 = sand.u32 %s80, 1
        %s321 = smul.addr %s320, 8
        %s322 = scalar_lea.vmem [#allocation11], %s321
        %p323 = pneg %p93
        %p324 = pneg %p90
        %s325 = sand.u32 %s32, 1
        %s326 = scalar_lea.sflag [#allocation12], %s325
        %s327 = sand.u32 %s106, 1
        %s328 = smul.addr %s327, 8
        %s329 = scalar_lea.vmem [#allocation13], %s328
        %p330 = pneg %p119
        %p331 = pneg %p116
        %p332 = pneg %p147
        %p333 = pneg %p144
        %s334 = sand.u32 %s134, 1
        %s335 = scalar_lea.sflag [#allocation10], %s334
        %s336 = sand.u32 %s134, 1
        %s337 = smul.addr %s336, 64
        %s338 = scalar_lea.vmem [#allocation14], %s337
        %p339 = pneg %p173
        %p340 = pneg %p170
        %s341 = sand.u32 %s32, 1
        %s342 = scalar_lea.sflag [#allocation16], %s341
        %s343 = sand.u32 %s160, 1
        %s344 = smul.addr %s343, 8
        %s345 = scalar_lea.vmem [#allocation15], %s344
        %p346 = pneg %p199
        %p347 = pneg %p196
        %s348 = sand.u32 %s32, 1
        %s349 = scalar_lea.sflag [#allocation16], %s348
        %s350 = sand.u32 %s186, 1
        %s351 = smul.addr %s350, 8
        %s352 = scalar_lea.vmem [#allocation17], %s351
        %s353 = smul.u32 8, %s37
        %s354 = smul.u32 8, %s37
        %p355 = scmp.eq.s32.totalorder %s37, 0
        // Predicated region
        $region45: #{tpu_custom_call.1} parent=31 // pred_check
          %p356 = pneg %p355
        $region46: #{tpu_custom_call.1} parent=31 // pred_check_branch
          %358 = sbr.rel (%p356) target = $region48
        $region47: #{tpu_custom_call.1} parent=31 // pred_region
          $region49: #{tpu_custom_call.1} parent=47
            #allocation18 [shape = 's32[1]{0}', space=sflag, size = 0x4, scoped, tag = 'scoped memory for tpu_custom_call.1']
            // Predicated region
            $region50: #{tpu_custom_call.1} parent=49 // pred_check
              _
            $region51: #{tpu_custom_call.1} parent=49 // pred_check_branch
              %360 = sbr.rel target = $region53
            $region52: #{tpu_custom_call.1} parent=49 // pred_region
              %361 = sst [smem:[#allocation21]] [#allocation20]
              %362 = sst [smem:[#allocation22]] [#allocation19]
            $region53: #{tpu_custom_call.1} parent=49 // pred_fallthru
              _
            %364 = shalt.err (0)
            %s366 = sshll.u32 [#allocation2], 4
            %s367 = int_to_ptr.vmem [resolvable:$true] %s366
            %369 = dma.hbm_to_vmem [thread:$0]  %s3, 2048, %s367, [#allocation18]
            %s370 = smul.u32 8, 4
            %s371 = smul.u32 %s370, 4
            %s372 = sshll.u32 %s371, 4
            %373 = dma.done [#allocation18], %s372
          $region54: #{tpu_custom_call.1} parent=47
            #allocation23 [shape = 's32[1]{0}', space=sflag, size = 0x4, scoped, tag = 'scoped memory for tpu_custom_call.1']
            // Predicated region
            $region55: #{tpu_custom_call.1} parent=54 // pred_check
              _
            $region56: #{tpu_custom_call.1} parent=54 // pred_check_branch
              %375 = sbr.rel target = $region58
            $region57: #{tpu_custom_call.1} parent=54 // pred_region
              %376 = sst [smem:[#allocation21]] [#allocation25]
              %377 = sst [smem:[#allocation22]] [#allocation24]
            $region58: #{tpu_custom_call.1} parent=54 // pred_fallthru
              _
            %379 = shalt.err (0)
            %s381 = sshll.u32 [#allocation3], 4
            %s382 = int_to_ptr.vmem [resolvable:$true] %s381
            %384 = dma.hbm_to_vmem [thread:$0]  %s4, 8192, %s382, [#allocation23]
            %s385 = smul.u32 8, 16
            %s386 = smul.u32 %s385, 4
            %s387 = sshll.u32 %s386, 4
            %388 = dma.done [#allocation23], %s387
          $region59: #{tpu_custom_call.1} parent=47
            #allocation26 [shape = 's32[1]{0}', space=sflag, size = 0x4, scoped, tag = 'scoped memory for tpu_custom_call.1']
            %p390 = scmp.lt.u32.totalorder 4, 8
            %p391 = pneg %p390
            // Predicated region
            $region60: #{tpu_custom_call.1} parent=59 // pred_check
              _
            $region61: #{tpu_custom_call.1} parent=59 // pred_check_branch
              %393 = sbr.rel (%p390) target = $region63
            $region62: #{tpu_custom_call.1} parent=59 // pred_region
              %s408 = sand.u32 4, 7
              %p409 = scmp.eq.s32.totalorder %s408, 0
              %p410 = pneg %p409
              // Predicated region
              $region75: #{tpu_custom_call.1} parent=62 // pred_check
                _
              $region76: #{tpu_custom_call.1} parent=62 // pred_check_branch
                %412 = sbr.rel (%p409) target = $region78
              $region77: #{tpu_custom_call.1} parent=62 // pred_region
                %s413 = sand.u32 4, 7
                %s414 = ssub.s32 4, %s413
                %s415 = scalar_lea.vmem %s5, %s414
                %s416 = ssub.s32 4, %s413
                %s417 = scalar_lea.vmem [#allocation4], %s416
                %s418 = sshllo.u32 0, %s413
                loop: start=0, step=1, limit=1
                $region79: #{tpu_custom_call.1} parent=77 // loop_pre_header
                  _
                $region80: #{tpu_custom_call.1} parent=77 // loop_header
                  %s420 = sphi 0, %s424
                  %p421 = scmp.ge.s32.totalorder %s420, 1
                  %s425 = sphi %s415, %s415
                  %s426 = sphi %s417, %s417
                $region81: #{tpu_custom_call.1} parent=77 // loop_header_branch
                  %423 = sbr.rel (%p421) target = $region85
                $region82: #{tpu_custom_call.1} parent=77 // loop_body
                  %v427 = vld [vmem:[%s425] sm:%s418]
                  %428 = vst [vmem:[%s426] sm:%s418] %v427
                $region83: #{tpu_custom_call.1} parent=77 // loop_footer
                  %s424 = sadd.s32 1, %s420
                $region84: #{tpu_custom_call.1} parent=77 // loop_footer_branch
                  %419 = sbr.rel target = $region80
                $region85: #{tpu_custom_call.1} parent=77 // loop_exit
                  _
              $region78: #{tpu_custom_call.1} parent=62 // pred_fallthru
                _
            $region63: #{tpu_custom_call.1} parent=59 // pred_fallthru
              _
            // Predicated region
            $region64: #{tpu_custom_call.1} parent=59 // pred_check
              %p394 = pneg %p390
            $region65: #{tpu_custom_call.1} parent=59 // pred_check_branch
              %396 = sbr.rel (%p394) target = $region67
            $region66: #{tpu_custom_call.1} parent=59 // pred_region
              %s397 = sshllo.u32 0, 4
              loop: start=0, step=1, limit=1
              $region68: #{tpu_custom_call.1} parent=66 // loop_pre_header
                _
              $region69: #{tpu_custom_call.1} parent=66 // loop_header
                %s399 = sphi 0, %s403
                %p400 = scmp.ge.s32.totalorder %s399, 1
                %s404 = sphi %s5, %s5
                %s405 = sphi [#allocation4], [#allocation4]
              $region70: #{tpu_custom_call.1} parent=66 // loop_header_branch
                %402 = sbr.rel (%p400) target = $region74
              $region71: #{tpu_custom_call.1} parent=66 // loop_body
                %v406 = vld [vmem:[%s404] sm:%s397]
                %407 = vst [vmem:[%s405] sm:%s397] %v406
              $region72: #{tpu_custom_call.1} parent=66 // loop_footer
                %s403 = sadd.s32 1, %s399
              $region73: #{tpu_custom_call.1} parent=66 // loop_footer_branch
                %398 = sbr.rel target = $region69
              $region74: #{tpu_custom_call.1} parent=66 // loop_exit
                _
            $region67: #{tpu_custom_call.1} parent=59 // pred_fallthru
              _
            // Predicated region
            $region86: #{tpu_custom_call.1} parent=59 // pred_check
              _
            $region87: #{tpu_custom_call.1} parent=59 // pred_check_branch
              %431 = sbr.rel (0) target = $region89
            $region88: #{tpu_custom_call.1} parent=59 // pred_region
              %432 = vsyncadd [#allocation26], 64
            $region89: #{tpu_custom_call.1} parent=59 // pred_fallthru
              _
            %s433 = smul.u32 1, 4
            %s434 = sshll.u32 %s433, 4
            %435 = dma.done [#allocation26], %s434
          %v436 = vld [vmem:[%s297] sm:$0xff]
          %437 = vst [vmem:[#allocation5] sm:$0xff] %v436
          %v438 = vld [vmem:[%s306] sm:$0xff]
          %439 = vst [vmem:[#allocation6] sm:$0xff] %v438
        $region48: #{tpu_custom_call.1} parent=31 // pred_fallthru
          _
        %v440 = vld [vmem:[%s288] sm:$0xff]
        %v441 = vld [vmem:[%s288 + $0x8] sm:$0xff]
        %v442 = vld [vmem:[%s288 + $0x10] sm:$0xff]
        %v443 = vld [vmem:[%s288 + $0x18] sm:$0xff]
        %v444 = vld [vmem:[%s288 + $0x20] sm:$0xff]
        %v445 = vld [vmem:[%s288 + $0x28] sm:$0xff]
        %v446 = vld [vmem:[%s288 + $0x30] sm:$0xff]
        %v447 = vld [vmem:[%s288 + $0x38] sm:$0xff]
        %v448 = vld [vmem:[#allocation2] sm:$0xff]
        %v449 = vld [vmem:[#allocation2 + $0x8] sm:$0xff]
        %v450 = vld [vmem:[#allocation2 + $0x10] sm:$0xff]
        %v451 = vld [vmem:[#allocation2 + $0x18] sm:$0xff]
        %v452 = vld [vmem:[#allocation2 + $0x20] sm:$0xff]
        %v453 = vld [vmem:[#allocation2 + $0x28] sm:$0xff]
        %v454 = vld [vmem:[#allocation2 + $0x30] sm:$0xff]
        %v455 = vld [vmem:[#allocation2 + $0x38] sm:$0xff]
        %v456 = vld [vmem:[#allocation2 + $0x40] sm:$0xff]
        %v457 = vld [vmem:[#allocation2 + $0x48] sm:$0xff]
        %v458 = vld [vmem:[#allocation2 + $0x50] sm:$0xff]
        %v459 = vld [vmem:[#allocation2 + $0x58] sm:$0xff]
        %v460 = vld [vmem:[#allocation2 + $0x60] sm:$0xff]
        %v461 = vld [vmem:[#allocation2 + $0x68] sm:$0xff]
        %v462 = vld [vmem:[#allocation2 + $0x70] sm:$0xff]
        %v463 = vld [vmem:[#allocation2 + $0x78] sm:$0xff]
        %v464 = vld [vmem:[#allocation4] sm:$0xf]
        %v466 = vlaneseq
        %v467 = vshrl.u32 %v466, 7
        %v468 = vsub.s32 0, %v467
        %v469 = vrot.slane %v464, %v468
        %v470 = vlaneseq
        %v471 = vshrl.u32 %v470, 7
        %v472 = vsub.s32 1, %v471
        %v473 = vrot.slane %v464, %v472
        %v474 = vlaneseq
        %v475 = vshrl.u32 %v474, 7
        %v476 = vsub.s32 2, %v475
        %v477 = vrot.slane %v464, %v476
        %v478 = vlaneseq
        %v479 = vshrl.u32 %v478, 7
        %v480 = vsub.s32 3, %v479
        %v481 = vrot.slane %v464, %v480
        %vm486 = vcmask 261120
        %v488 = vsel %vm486, %v440, 0
        %v491 = vsel %vm486, %v441, 0
        %v494 = vsel %vm486, %v442, 0
        %v497 = vsel %vm486, %v443, 0
        %v500 = vsel %vm486, %v444, 0
        %v503 = vsel %vm486, %v445, 0
        %v506 = vsel %vm486, %v446, 0
        %v509 = vsel %vm486, %v447, 0
        %511 = vmatprep.subr.mxu0 %v449
        %512 = vmatpush1.msra.mxu0 %v448
        %513 = vmatprep.subr.mxu0 %v453
        %514 = vmatpush1.msra.mxu0 %v452
        %515 = vmatprep.subr.mxu0 %v457
        %516 = vmatpush1.msra.mxu0 %v456
        %517 = vmatprep.subr.mxu0 %v461
        %518 = vmatpush1.msra.mxu0 %v460
        %519 = vmatprep.subr.mxu0 0.0
        %520 = vmatpush1.msra.mxu0 0.0
        %521 = vmatprep.subr.mxu0 0.0
        %522 = vmatpush1.msra.mxu0 0.0
        %523 = vmatprep.subr.mxu0 0.0
        %524 = vmatpush1.msra.mxu0 0.0
        %525 = vmatprep.subr.mxu0 0.0
        %526 = vmatpush1.msra.mxu0 0.0
        %527 = vmatprep.subr.mxu0 0.0
        %528 = vmatpush1.msra.mxu0 0.0
        %529 = vmatprep.subr.mxu0 0.0
        %530 = vmatpush1.msra.mxu0 0.0
        %531 = vmatprep.subr.mxu0 0.0
        %532 = vmatpush1.msra.mxu0 0.0
        %533 = vmatprep.subr.mxu0 0.0
        %534 = vmatpush1.msra.mxu0 0.0
        %535 = vmatprep.subr.mxu0 0.0
        %536 = vmatpush1.msra.mxu0 0.0
        %537 = vmatprep.subr.mxu0 0.0
        %538 = vmatpush1.msra.mxu0 0.0
        %539 = vmatprep.subr.mxu0 0.0
        %540 = vmatpush1.msra.mxu0 0.0
        %541 = vmatprep.subr.mxu0 0.0
        %542 = vmatpush1.msra.mxu0 0.0
        %543 = vmatprep.subr.mxu0 0.0
        %544 = vmatpush1.msra.mxu0 0.0
        %545 = vmatprep.subr.mxu0 0.0
        %546 = vmatpush1.msra.mxu0 0.0
        %547 = vmatprep.subr.mxu0 0.0
        %548 = vmatpush1.msra.mxu0 0.0
        %549 = vmatprep.subr.mxu0 0.0
        %550 = vmatpush1.msra.mxu0 0.0
        %551 = vmatprep.subr.mxu0 0.0
        %552 = vmatpush1.msra.mxu0 0.0
        %553 = vmatprep.subr.mxu0 0.0
        %554 = vmatpush1.msra.mxu0 0.0
        %555 = vmatprep.subr.mxu0 0.0
        %556 = vmatpush1.msra.mxu0 0.0
        %557 = vmatprep.subr.mxu0 0.0
        %558 = vmatpush1.msra.mxu0 0.0
        %559 = vmatprep.subr.mxu0 0.0
        %560 = vmatpush1.msra.mxu0 0.0
        %561 = vmatprep.subr.mxu0 0.0
        %562 = vmatpush1.msra.mxu0 0.0
        %563 = vmatprep.subr.mxu0 0.0
        %564 = vmatpush1.msra.mxu0 0.0
        %565 = vmatprep.subr.mxu0 0.0
        %566 = vmatpush1.msra.mxu0 0.0
        %567 = vmatprep.subr.mxu0 0.0
        %568 = vmatpush1.msra.mxu0 0.0
        %569 = vmatprep.subr.mxu0 0.0
        %570 = vmatpush1.msra.mxu0 0.0
        %571 = vmatprep.subr.mxu0 0.0
        %572 = vmatpush1.msra.mxu0 0.0
        %573 = vmatprep.subr.mxu0 0.0
        %574 = vmatpush1.msra.mxu0 0.0
        %575 = vmatprep.mubr.f32.mxu0 0.0
        %576 = vmatmul.mubr.f32.gmra.mrb[0].mxu0 %v488
        %v577 = vpop.f32.mrb[0].mxu0
        %v578 = vadd.f32 %v469, %v577
        %v579 = vpop.f32.mrb[0].mxu0
        %v580 = vadd.f32 %v473, %v579
        %581 = vmatprep.mubr.f32.mxu0 0.0
        %582 = vmatmul.mubr.f32.gmra.mrb[0].mxu0 %v491
        %v583 = vpop.f32.mrb[0].mxu0
        %v584 = vadd.f32 %v469, %v583
        %v585 = vpop.f32.mrb[0].mxu0
        %v586 = vadd.f32 %v473, %v585
        %587 = vmatprep.mubr.f32.mxu0 0.0
        %588 = vmatmul.mubr.f32.gmra.mrb[0].mxu0 %v494
        %v589 = vpop.f32.mrb[0].mxu0
        %v590 = vadd.f32 %v469, %v589
        %v591 = vpop.f32.mrb[0].mxu0
        %v592 = vadd.f32 %v473, %v591
        %593 = vmatprep.mubr.f32.mxu0 0.0
        %594 = vmatmul.mubr.f32.gmra.mrb[0].mxu0 %v497
        %v595 = vpop.f32.mrb[0].mxu0
        %v596 = vadd.f32 %v469, %v595
        %v597 = vpop.f32.mrb[0].mxu0
        %v598 = vadd.f32 %v473, %v597
        %599 = vmatprep.mubr.f32.mxu0 0.0
        %600 = vmatmul.mubr.f32.gmra.mrb[0].mxu0 %v500
        %v601 = vpop.f32.mrb[0].mxu0
        %v602 = vadd.f32 %v469, %v601
        %v603 = vpop.f32.mrb[0].mxu0
        %v604 = vadd.f32 %v473, %v603
        %605 = vmatprep.mubr.f32.mxu0 0.0
        %606 = vmatmul.mubr.f32.gmra.mrb[0].mxu0 %v503
        %v607 = vpop.f32.mrb[0].mxu0
        %v608 = vadd.f32 %v469, %v607
        %v609 = vpop.f32.mrb[0].mxu0
        %v610 = vadd.f32 %v473, %v609
        %611 = vmatprep.mubr.f32.mxu0 0.0
        %612 = vmatmul.mubr.f32.gmra.mrb[0].mxu0 %v506
        %v613 = vpop.f32.mrb[0].mxu0
        %v614 = vadd.f32 %v469, %v613
        %v615 = vpop.f32.mrb[0].mxu0
        %v616 = vadd.f32 %v473, %v615
        %617 = vmatprep.mubr.f32.mxu0 0.0
        %618 = vmatmul.mubr.f32.gmra.mrb[0].mxu0 %v509
        %v619 = vpop.f32.mrb[0].mxu0
        %v620 = vadd.f32 %v469, %v619
        %v621 = vpop.f32.mrb[0].mxu0
        %v622 = vadd.f32 %v473, %v621
        %623 = vdwg.mxu0
        %624 = vmatprep.subr.mxu0 %v451
        %625 = vmatpush1.msra.mxu0 %v450
        %626 = vmatprep.subr.mxu0 %v455
        %627 = vmatpush1.msra.mxu0 %v454
        %628 = vmatprep.subr.mxu0 %v459
        %629 = vmatpush1.msra.mxu0 %v458
        %630 = vmatprep.subr.mxu0 %v463
        %631 = vmatpush1.msra.mxu0 %v462
        %632 = vmatprep.subr.mxu0 0.0
        %633 = vmatpush1.msra.mxu0 0.0
        %634 = vmatprep.subr.mxu0 0.0
        %635 = vmatpush1.msra.mxu0 0.0
        %636 = vmatprep.subr.mxu0 0.0
        %637 = vmatpush1.msra.mxu0 0.0
        %638 = vmatprep.subr.mxu0 0.0
        %639 = vmatpush1.msra.mxu0 0.0
        %640 = vmatprep.subr.mxu0 0.0
        %641 = vmatpush1.msra.mxu0 0.0
        %642 = vmatprep.subr.mxu0 0.0
        %643 = vmatpush1.msra.mxu0 0.0
        %644 = vmatprep.subr.mxu0 0.0
        %645 = vmatpush1.msra.mxu0 0.0
        %646 = vmatprep.subr.mxu0 0.0
        %647 = vmatpush1.msra.mxu0 0.0
        %648 = vmatprep.subr.mxu0 0.0
        %649 = vmatpush1.msra.mxu0 0.0
        %650 = vmatprep.subr.mxu0 0.0
        %651 = vmatpush1.msra.mxu0 0.0
        %652 = vmatprep.subr.mxu0 0.0
        %653 = vmatpush1.msra.mxu0 0.0
        %654 = vmatprep.subr.mxu0 0.0
        %655 = vmatpush1.msra.mxu0 0.0
        %656 = vmatprep.subr.mxu0 0.0
        %657 = vmatpush1.msra.mxu0 0.0
        %658 = vmatprep.subr.mxu0 0.0
        %659 = vmatpush1.msra.mxu0 0.0
        %660 = vmatprep.subr.mxu0 0.0
        %661 = vmatpush1.msra.mxu0 0.0
        %662 = vmatprep.subr.mxu0 0.0
        %663 = vmatpush1.msra.mxu0 0.0
        %664 = vmatprep.subr.mxu0 0.0
        %665 = vmatpush1.msra.mxu0 0.0
        %666 = vmatprep.subr.mxu0 0.0
        %667 = vmatpush1.msra.mxu0 0.0
        %668 = vmatprep.subr.mxu0 0.0
        %669 = vmatpush1.msra.mxu0 0.0
        %670 = vmatprep.subr.mxu0 0.0
        %671 = vmatpush1.msra.mxu0 0.0
        %672 = vmatprep.subr.mxu0 0.0
        %673 = vmatpush1.msra.mxu0 0.0
        %674 = vmatprep.subr.mxu0 0.0
        %675 = vmatpush1.msra.mxu0 0.0
        %676 = vmatprep.subr.mxu0 0.0
        %677 = vmatpush1.msra.mxu0 0.0
        %678 = vmatprep.subr.mxu0 0.0
        %679 = vmatpush1.msra.mxu0 0.0
        %680 = vmatprep.subr.mxu0 0.0
        %681 = vmatpush1.msra.mxu0 0.0
        %682 = vmatprep.subr.mxu0 0.0
        %683 = vmatpush1.msra.mxu0 0.0
        %684 = vmatprep.subr.mxu0 0.0
        %685 = vmatpush1.msra.mxu0 0.0
        %686 = vmatprep.subr.mxu0 0.0
        %687 = vmatpush1.msra.mxu0 0.0
        %688 = vmatprep.mubr.f32.mxu0 0.0
        %689 = vmatmul.mubr.f32.gmra.mrb[0].mxu0 %v488
        %v690 = vpop.f32.mrb[0].mxu0
        %v691 = vadd.f32 %v477, %v690
        %v692 = vpop.f32.mrb[0].mxu0
        %v693 = vadd.f32 %v481, %v692
        %694 = vmatprep.mubr.f32.mxu0 0.0
        %695 = vmatmul.mubr.f32.gmra.mrb[0].mxu0 %v491
        %v696 = vpop.f32.mrb[0].mxu0
        %v697 = vadd.f32 %v477, %v696
        %v698 = vpop.f32.mrb[0].mxu0
        %v699 = vadd.f32 %v481, %v698
        %700 = vmatprep.mubr.f32.mxu0 0.0
        %701 = vmatmul.mubr.f32.gmra.mrb[0].mxu0 %v494
        %v702 = vpop.f32.mrb[0].mxu0
        %v703 = vadd.f32 %v477, %v702
        %v704 = vpop.f32.mrb[0].mxu0
        %v705 = vadd.f32 %v481, %v704
        %706 = vmatprep.mubr.f32.mxu0 0.0
        %707 = vmatmul.mubr.f32.gmra.mrb[0].mxu0 %v497
        %v708 = vpop.f32.mrb[0].mxu0
        %v709 = vadd.f32 %v477, %v708
        %v710 = vpop.f32.mrb[0].mxu0
        %v711 = vadd.f32 %v481, %v710
        %712 = vmatprep.mubr.f32.mxu0 0.0
        %713 = vmatmul.mubr.f32.gmra.mrb[0].mxu0 %v500
        %v714 = vpop.f32.mrb[0].mxu0
        %v715 = vadd.f32 %v477, %v714
        %v716 = vpop.f32.mrb[0].mxu0
        %v717 = vadd.f32 %v481, %v716
        %718 = vmatprep.mubr.f32.mxu0 0.0
        %719 = vmatmul.mubr.f32.gmra.mrb[0].mxu0 %v503
        %v720 = vpop.f32.mrb[0].mxu0
        %v721 = vadd.f32 %v477, %v720
        %v722 = vpop.f32.mrb[0].mxu0
        %v723 = vadd.f32 %v481, %v722
        %724 = vmatprep.mubr.f32.mxu0 0.0
        %725 = vmatmul.mubr.f32.gmra.mrb[0].mxu0 %v506
        %v726 = vpop.f32.mrb[0].mxu0
        %v727 = vadd.f32 %v477, %v726
        %v728 = vpop.f32.mrb[0].mxu0
        %v729 = vadd.f32 %v481, %v728
        %730 = vmatprep.mubr.f32.mxu0 0.0
        %731 = vmatmul.mubr.f32.gmra.mrb[0].mxu0 %v509
        %v732 = vpop.f32.mrb[0].mxu0
        %v733 = vadd.f32 %v477, %v732
        %v734 = vpop.f32.mrb[0].mxu0
        %v735 = vadd.f32 %v481, %v734
        %736 = vdwg.mxu0
        %737 = vst [vmem:[#allocation7] sm:$0xff] %v578
        %738 = vst [vmem:[#allocation7 + $0x8] sm:$0xff] %v580
        %739 = vst [vmem:[#allocation7 + $0x10] sm:$0xff] %v691
        %740 = vst [vmem:[#allocation7 + $0x18] sm:$0xff] %v693
        %741 = vst [vmem:[#allocation7 + $0x20] sm:$0xff] %v584
        %742 = vst [vmem:[#allocation7 + $0x28] sm:$0xff] %v586
        %743 = vst [vmem:[#allocation7 + $0x30] sm:$0xff] %v697
        %744 = vst [vmem:[#allocation7 + $0x38] sm:$0xff] %v699
        %745 = vst [vmem:[#allocation7 + $0x40] sm:$0xff] %v590
        %746 = vst [vmem:[#allocation7 + $0x48] sm:$0xff] %v592
        %747 = vst [vmem:[#allocation7 + $0x50] sm:$0xff] %v703
        %748 = vst [vmem:[#allocation7 + $0x58] sm:$0xff] %v705
        %749 = vst [vmem:[#allocation7 + $0x60] sm:$0xff] %v596
        %750 = vst [vmem:[#allocation7 + $0x68] sm:$0xff] %v598
        %751 = vst [vmem:[#allocation7 + $0x70] sm:$0xff] %v709
        %752 = vst [vmem:[#allocation7 + $0x78] sm:$0xff] %v711
        %753 = vst [vmem:[#allocation7 + $0x80] sm:$0xff] %v602
        %754 = vst [vmem:[#allocation7 + $0x88] sm:$0xff] %v604
        %755 = vst [vmem:[#allocation7 + $0x90] sm:$0xff] %v715
        %756 = vst [vmem:[#allocation7 + $0x98] sm:$0xff] %v717
        %757 = vst [vmem:[#allocation7 + $0xa0] sm:$0xff] %v608
        %758 = vst [vmem:[#allocation7 + $0xa8] sm:$0xff] %v610
        %759 = vst [vmem:[#allocation7 + $0xb0] sm:$0xff] %v721
        %760 = vst [vmem:[#allocation7 + $0xb8] sm:$0xff] %v723
        %761 = vst [vmem:[#allocation7 + $0xc0] sm:$0xff] %v614
        %762 = vst [vmem:[#allocation7 + $0xc8] sm:$0xff] %v616
        %763 = vst [vmem:[#allocation7 + $0xd0] sm:$0xff] %v727
        %764 = vst [vmem:[#allocation7 + $0xd8] sm:$0xff] %v729
        %765 = vst [vmem:[#allocation7 + $0xe0] sm:$0xff] %v620
        %766 = vst [vmem:[#allocation7 + $0xe8] sm:$0xff] %v622
        %767 = vst [vmem:[#allocation7 + $0xf0] sm:$0xff] %v733
        %768 = vst [vmem:[#allocation7 + $0xf8] sm:$0xff] %v735
        %v769 = vld [vmem:[#allocation3] sm:$0xff]
        %v770 = vld [vmem:[#allocation3 + $0x8] sm:$0xff]
        %v771 = vld [vmem:[#allocation3 + $0x10] sm:$0xff]
        %v772 = vld [vmem:[#allocation3 + $0x18] sm:$0xff]
        %v773 = vld [vmem:[#allocation3 + $0x20] sm:$0xff]
        %v774 = vld [vmem:[#allocation3 + $0x28] sm:$0xff]
        %v775 = vld [vmem:[#allocation3 + $0x30] sm:$0xff]
        %v776 = vld [vmem:[#allocation3 + $0x38] sm:$0xff]
        %v777 = vld [vmem:[#allocation3 + $0x40] sm:$0xff]
        %v778 = vld [vmem:[#allocation3 + $0x48] sm:$0xff]
        %v779 = vld [vmem:[#allocation3 + $0x50] sm:$0xff]
        %v780 = vld [vmem:[#allocation3 + $0x58] sm:$0xff]
        %v781 = vld [vmem:[#allocation3 + $0x60] sm:$0xff]
        %v782 = vld [vmem:[#allocation3 + $0x68] sm:$0xff]
        %v783 = vld [vmem:[#allocation3 + $0x70] sm:$0xff]
        %v784 = vld [vmem:[#allocation3 + $0x78] sm:$0xff]
        %v785 = vld [vmem:[#allocation3 + $0x80] sm:$0xff]
        %v786 = vld [vmem:[#allocation3 + $0x88] sm:$0xff]
        %v787 = vld [vmem:[#allocation3 + $0x90] sm:$0xff]
        %v788 = vld [vmem:[#allocation3 + $0x98] sm:$0xff]
        %v789 = vld [vmem:[#allocation3 + $0xa0] sm:$0xff]
        %v790 = vld [vmem:[#allocation3 + $0xa8] sm:$0xff]
        %v791 = vld [vmem:[#allocation3 + $0xb0] sm:$0xff]
        %v792 = vld [vmem:[#allocation3 + $0xb8] sm:$0xff]
        %v793 = vld [vmem:[#allocation3 + $0xc0] sm:$0xff]
        %v794 = vld [vmem:[#allocation3 + $0xc8] sm:$0xff]
        %v795 = vld [vmem:[#allocation3 + $0xd0] sm:$0xff]
        %v796 = vld [vmem:[#allocation3 + $0xd8] sm:$0xff]
        %v797 = vld [vmem:[#allocation3 + $0xe0] sm:$0xff]
        %v798 = vld [vmem:[#allocation3 + $0xe8] sm:$0xff]
        %v799 = vld [vmem:[#allocation3 + $0xf0] sm:$0xff]
        %v800 = vld [vmem:[#allocation3 + $0xf8] sm:$0xff]
        %v801 = vld [vmem:[#allocation3 + $0x100] sm:$0xff]
        %v802 = vld [vmem:[#allocation3 + $0x108] sm:$0xff]
        %v803 = vld [vmem:[#allocation3 + $0x110] sm:$0xff]
        %v804 = vld [vmem:[#allocation3 + $0x118] sm:$0xff]
        %v805 = vld [vmem:[#allocation3 + $0x120] sm:$0xff]
        %v806 = vld [vmem:[#allocation3 + $0x128] sm:$0xff]
        %v807 = vld [vmem:[#allocation3 + $0x130] sm:$0xff]
        %v808 = vld [vmem:[#allocation3 + $0x138] sm:$0xff]
        %v809 = vld [vmem:[#allocation3 + $0x140] sm:$0xff]
        %v810 = vld [vmem:[#allocation3 + $0x148] sm:$0xff]
        %v811 = vld [vmem:[#allocation3 + $0x150] sm:$0xff]
        %v812 = vld [vmem:[#allocation3 + $0x158] sm:$0xff]
        %v813 = vld [vmem:[#allocation3 + $0x160] sm:$0xff]
        %v814 = vld [vmem:[#allocation3 + $0x168] sm:$0xff]
        %v815 = vld [vmem:[#allocation3 + $0x170] sm:$0xff]
        %v816 = vld [vmem:[#allocation3 + $0x178] sm:$0xff]
        %v817 = vld [vmem:[#allocation3 + $0x180] sm:$0xff]
        %v818 = vld [vmem:[#allocation3 + $0x188] sm:$0xff]
        %v819 = vld [vmem:[#allocation3 + $0x190] sm:$0xff]
        %v820 = vld [vmem:[#allocation3 + $0x198] sm:$0xff]
        %v821 = vld [vmem:[#allocation3 + $0x1a0] sm:$0xff]
        %v822 = vld [vmem:[#allocation3 + $0x1a8] sm:$0xff]
        %v823 = vld [vmem:[#allocation3 + $0x1b0] sm:$0xff]
        %v824 = vld [vmem:[#allocation3 + $0x1b8] sm:$0xff]
        %v825 = vld [vmem:[#allocation3 + $0x1c0] sm:$0xff]
        %v826 = vld [vmem:[#allocation3 + $0x1c8] sm:$0xff]
        %v827 = vld [vmem:[#allocation3 + $0x1d0] sm:$0xff]
        %v828 = vld [vmem:[#allocation3 + $0x1d8] sm:$0xff]
        %v829 = vld [vmem:[#allocation3 + $0x1e0] sm:$0xff]
        %v830 = vld [vmem:[#allocation3 + $0x1e8] sm:$0xff]
        %v831 = vld [vmem:[#allocation3 + $0x1f0] sm:$0xff]
        %v832 = vld [vmem:[#allocation3 + $0x1f8] sm:$0xff]
        %v833 = vld [vmem:[#allocation5] sm:$0xff]
        %v834 = vld [vmem:[#allocation6] sm:$0xff]
        %v835 = vld [vmem:[#allocation7] sm:$0xff]
        %v836 = vld [vmem:[#allocation7 + $0x8] sm:$0xff]
        %v837 = vld [vmem:[#allocation7 + $0x10] sm:$0xff]
        %v838 = vld [vmem:[#allocation7 + $0x18] sm:$0xff]
        %839 = vmatprep.subr.mxu0 %v770
        %840 = vmatpush1.msra.mxu0 %v769
        %841 = vmatprep.subr.mxu0 %v774
        %842 = vmatpush1.msra.mxu0 %v773
        %843 = vmatprep.subr.mxu0 %v778
        %844 = vmatpush1.msra.mxu0 %v777
        %845 = vmatprep.subr.mxu0 %v782
        %846 = vmatpush1.msra.mxu0 %v781
        %847 = vmatprep.subr.mxu0 %v786
        %848 = vmatpush1.msra.mxu0 %v785
        %849 = vmatprep.subr.mxu0 %v790
        %850 = vmatpush1.msra.mxu0 %v789
        %851 = vmatprep.subr.mxu0 %v794
        %852 = vmatpush1.msra.mxu0 %v793
        %853 = vmatprep.subr.mxu0 %v798
        %854 = vmatpush1.msra.mxu0 %v797
        %855 = vmatprep.subr.mxu0 %v802
        %856 = vmatpush1.msra.mxu0 %v801
        %857 = vmatprep.subr.mxu0 %v806
        %858 = vmatpush1.msra.mxu0 %v805
        %859 = vmatprep.subr.mxu0 %v810
        %860 = vmatpush1.msra.mxu0 %v809
        %861 = vmatprep.subr.mxu0 %v814
        %862 = vmatpush1.msra.mxu0 %v813
        %863 = vmatprep.subr.mxu0 %v818
        %864 = vmatpush1.msra.mxu0 %v817
        %865 = vmatprep.subr.mxu0 %v822
        %866 = vmatpush1.msra.mxu0 %v821
        %867 = vmatprep.subr.mxu0 %v826
        %868 = vmatpush1.msra.mxu0 %v825
        %869 = vmatprep.subr.mxu0 %v830
        %870 = vmatpush1.msra.mxu0 %v829
        %871 = vmatprep.subr.mxu0 0.0
        %872 = vmatpush1.msra.mxu0 0.0
        %873 = vmatprep.subr.mxu0 0.0
        %874 = vmatpush1.msra.mxu0 0.0
        %875 = vmatprep.subr.mxu0 0.0
        %876 = vmatpush1.msra.mxu0 0.0
        %877 = vmatprep.subr.mxu0 0.0
        %878 = vmatpush1.msra.mxu0 0.0
        %879 = vmatprep.subr.mxu0 0.0
        %880 = vmatpush1.msra.mxu0 0.0
        %881 = vmatprep.subr.mxu0 0.0
        %882 = vmatpush1.msra.mxu0 0.0
        %883 = vmatprep.subr.mxu0 0.0
        %884 = vmatpush1.msra.mxu0 0.0
        %885 = vmatprep.subr.mxu0 0.0
        %886 = vmatpush1.msra.mxu0 0.0
        %887 = vmatprep.subr.mxu0 0.0
        %888 = vmatpush1.msra.mxu0 0.0
        %889 = vmatprep.subr.mxu0 0.0
        %890 = vmatpush1.msra.mxu0 0.0
        %891 = vmatprep.subr.mxu0 0.0
        %892 = vmatpush1.msra.mxu0 0.0
        %893 = vmatprep.subr.mxu0 0.0
        %894 = vmatpush1.msra.mxu0 0.0
        %895 = vmatprep.subr.mxu0 0.0
        %896 = vmatpush1.msra.mxu0 0.0
        %897 = vmatprep.subr.mxu0 0.0
        %898 = vmatpush1.msra.mxu0 0.0
        %899 = vmatprep.subr.mxu0 0.0
        %900 = vmatpush1.msra.mxu0 0.0
        %901 = vmatprep.subr.mxu0 0.0
        %902 = vmatpush1.msra.mxu0 0.0
        %903 = vmatprep.mubr.f32.mxu0 0.0
        %904 = vmatmul.mubr.f32.gmra.mrb[0].mxu0 %v833
        %v905 = vpop.f32.mrb[0].mxu0
        %v906 = vadd.f32 0.0, %v905
        %v907 = vpop.f32.mrb[0].mxu0
        %v908 = vadd.f32 0.0, %v907
        %909 = vdwg.mxu0
        %910 = vmatprep.subr.mxu0 %v772
        %911 = vmatpush1.msra.mxu0 %v771
        %912 = vmatprep.subr.mxu0 %v776
        %913 = vmatpush1.msra.mxu0 %v775
        %914 = vmatprep.subr.mxu0 %v780
        %915 = vmatpush1.msra.mxu0 %v779
        %916 = vmatprep.subr.mxu0 %v784
        %917 = vmatpush1.msra.mxu0 %v783
        %918 = vmatprep.subr.mxu0 %v788
        %919 = vmatpush1.msra.mxu0 %v787
        %920 = vmatprep.subr.mxu0 %v792
        %921 = vmatpush1.msra.mxu0 %v791
        %922 = vmatprep.subr.mxu0 %v796
        %923 = vmatpush1.msra.mxu0 %v795
        %924 = vmatprep.subr.mxu0 %v800
        %925 = vmatpush1.msra.mxu0 %v799
        %926 = vmatprep.subr.mxu0 %v804
        %927 = vmatpush1.msra.mxu0 %v803
        %928 = vmatprep.subr.mxu0 %v808
        %929 = vmatpush1.msra.mxu0 %v807
        %930 = vmatprep.subr.mxu0 %v812
        %931 = vmatpush1.msra.mxu0 %v811
        %932 = vmatprep.subr.mxu0 %v816
        %933 = vmatpush1.msra.mxu0 %v815
        %934 = vmatprep.subr.mxu0 %v820
        %935 = vmatpush1.msra.mxu0 %v819
        %936 = vmatprep.subr.mxu0 %v824
        %937 = vmatpush1.msra.mxu0 %v823
        %938 = vmatprep.subr.mxu0 %v828
        %939 = vmatpush1.msra.mxu0 %v827
        %940 = vmatprep.subr.mxu0 %v832
        %941 = vmatpush1.msra.mxu0 %v831
        %942 = vmatprep.subr.mxu0 0.0
        %943 = vmatpush1.msra.mxu0 0.0
        %944 = vmatprep.subr.mxu0 0.0
        %945 = vmatpush1.msra.mxu0 0.0
        %946 = vmatprep.subr.mxu0 0.0
        %947 = vmatpush1.msra.mxu0 0.0
        %948 = vmatprep.subr.mxu0 0.0
        %949 = vmatpush1.msra.mxu0 0.0
        %950 = vmatprep.subr.mxu0 0.0
        %951 = vmatpush1.msra.mxu0 0.0
        %952 = vmatprep.subr.mxu0 0.0
        %953 = vmatpush1.msra.mxu0 0.0
        %954 = vmatprep.subr.mxu0 0.0
        %955 = vmatpush1.msra.mxu0 0.0
        %956 = vmatprep.subr.mxu0 0.0
        %957 = vmatpush1.msra.mxu0 0.0
        %958 = vmatprep.subr.mxu0 0.0
        %959 = vmatpush1.msra.mxu0 0.0
        %960 = vmatprep.subr.mxu0 0.0
        %961 = vmatpush1.msra.mxu0 0.0
        %962 = vmatprep.subr.mxu0 0.0
        %963 = vmatpush1.msra.mxu0 0.0
        %964 = vmatprep.subr.mxu0 0.0
        %965 = vmatpush1.msra.mxu0 0.0
        %966 = vmatprep.subr.mxu0 0.0
        %967 = vmatpush1.msra.mxu0 0.0
        %968 = vmatprep.subr.mxu0 0.0
        %969 = vmatpush1.msra.mxu0 0.0
        %970 = vmatprep.subr.mxu0 0.0
        %971 = vmatpush1.msra.mxu0 0.0
        %972 = vmatprep.subr.mxu0 0.0
        %973 = vmatpush1.msra.mxu0 0.0
        %974 = vmatprep.mubr.f32.mxu0 0.0
        %975 = vmatmul.mubr.f32.gmra.mrb[0].mxu0 %v833
        %v976 = vpop.f32.mrb[0].mxu0
        %v977 = vadd.f32 0.0, %v976
        %v978 = vpop.f32.mrb[0].mxu0
        %v979 = vadd.f32 0.0, %v978
        %980 = vdwg.mxu0
        %v981 = vadd.f32 %v835, %v906
        %v982 = vadd.f32 %v836, %v908
        %v983 = vadd.f32 %v837, %v977
        %v984 = vadd.f32 %v838, %v979
        %v985 = vxor.u32 %v981, 2147483648
        %v986 = vxor.u32 %v982, 2147483648
        %v987 = vxor.u32 %v983, 2147483648
        %v988 = vmul.f32 %v985, 1.442695
        %v989 = vpow.pop %v988
        %v990 = vmul.f32 %v986, 1.442695
        %v991 = vpow.pop %v990
        %v992 = vmul.f32 %v987, 1.442695
        %v993 = vpow.pop %v992
        %v994 = vadd.f32 %v989, 1.0
        %v995 = vadd.f32 %v991, 1.0
        %v996 = vadd.f32 %v993, 1.0
        %v997 = vrcp.pop %v994
        %v998 = vmul.f32 1.0, %v997
        %v999 = vrcp.pop %v995
        %v1000 = vmul.f32 1.0, %v999
        %v1001 = vrcp.pop %v996
        %v1002 = vmul.f32 1.0, %v1001
        %v1003 = vtanh.pop %v984
        %v1004 = vmul.f32 %v1000, %v834
        %v1005 = vmul.f32 %v998, %v1003
        %v1006 = vadd.f32 %v1004, %v1005
        %v1007 = vtanh.pop %v1006
        %v1008 = vmul.f32 %v1002, %v1007
        %1009 = vst [vmem:[%s338] sm:$0xff] %v1008
        %s1010 = scalar_lea.vmem [#allocation7], 32
        %v1011 = vld [vmem:[%s1010] sm:$0xff]
        %v1012 = vld [vmem:[%s1010 + $0x8] sm:$0xff]
        %v1013 = vld [vmem:[%s1010 + $0x10] sm:$0xff]
        %v1014 = vld [vmem:[%s1010 + $0x18] sm:$0xff]
        %1015 = vmatprep.subr.mxu0 %v770
        %1016 = vmatpush1.msra.mxu0 %v769
        %1017 = vmatprep.subr.mxu0 %v774
        %1018 = vmatpush1.msra.mxu0 %v773
        %1019 = vmatprep.subr.mxu0 %v778
        %1020 = vmatpush1.msra.mxu0 %v777
        %1021 = vmatprep.subr.mxu0 %v782
        %1022 = vmatpush1.msra.mxu0 %v781
        %1023 = vmatprep.subr.mxu0 %v786
        %1024 = vmatpush1.msra.mxu0 %v785
        %1025 = vmatprep.subr.mxu0 %v790
        %1026 = vmatpush1.msra.mxu0 %v789
        %1027 = vmatprep.subr.mxu0 %v794
        %1028 = vmatpush1.msra.mxu0 %v793
        %1029 = vmatprep.subr.mxu0 %v798
        %1030 = vmatpush1.msra.mxu0 %v797
        %1031 = vmatprep.subr.mxu0 %v802
        %1032 = vmatpush1.msra.mxu0 %v801
        %1033 = vmatprep.subr.mxu0 %v806
        %1034 = vmatpush1.msra.mxu0 %v805
        %1035 = vmatprep.subr.mxu0 %v810
        %1036 = vmatpush1.msra.mxu0 %v809
        %1037 = vmatprep.subr.mxu0 %v814
        %1038 = vmatpush1.msra.mxu0 %v813
        %1039 = vmatprep.subr.mxu0 %v818
        %1040 = vmatpush1.msra.mxu0 %v817
        %1041 = vmatprep.subr.mxu0 %v822
        %1042 = vmatpush1.msra.mxu0 %v821
        %1043 = vmatprep.subr.mxu0 %v826
        %1044 = vmatpush1.msra.mxu0 %v825
        %1045 = vmatprep.subr.mxu0 %v830
        %1046 = vmatpush1.msra.mxu0 %v829
        %1047 = vmatprep.subr.mxu0 0.0
        %1048 = vmatpush1.msra.mxu0 0.0
        %1049 = vmatprep.subr.mxu0 0.0
        %1050 = vmatpush1.msra.mxu0 0.0
        %1051 = vmatprep.subr.mxu0 0.0
        %1052 = vmatpush1.msra.mxu0 0.0
        %1053 = vmatprep.subr.mxu0 0.0
        %1054 = vmatpush1.msra.mxu0 0.0
        %1055 = vmatprep.subr.mxu0 0.0
        %1056 = vmatpush1.msra.mxu0 0.0
        %1057 = vmatprep.subr.mxu0 0.0
        %1058 = vmatpush1.msra.mxu0 0.0
        %1059 = vmatprep.subr.mxu0 0.0
        %1060 = vmatpush1.msra.mxu0 0.0
        %1061 = vmatprep.subr.mxu0 0.0
        %1062 = vmatpush1.msra.mxu0 0.0
        %1063 = vmatprep.subr.mxu0 0.0
        %1064 = vmatpush1.msra.mxu0 0.0
        %1065 = vmatprep.subr.mxu0 0.0
        %1066 = vmatpush1.msra.mxu0 0.0
        %1067 = vmatprep.subr.mxu0 0.0
        %1068 = vmatpush1.msra.mxu0 0.0
        %1069 = vmatprep.subr.mxu0 0.0
        %1070 = vmatpush1.msra.mxu0 0.0
        %1071 = vmatprep.subr.mxu0 0.0
        %1072 = vmatpush1.msra.mxu0 0.0
        %1073 = vmatprep.subr.mxu0 0.0
        %1074 = vmatpush1.msra.mxu0 0.0
        %1075 = vmatprep.subr.mxu0 0.0
        %1076 = vmatpush1.msra.mxu0 0.0
        %1077 = vmatprep.subr.mxu0 0.0
        %1078 = vmatpush1.msra.mxu0 0.0
        %1079 = vmatprep.mubr.f32.mxu0 0.0
        %1080 = vmatmul.mubr.f32.gmra.mrb[0].mxu0 %v1008
        %v1081 = vpop.f32.mrb[0].mxu0
        %v1082 = vadd.f32 0.0, %v1081
        %v1083 = vpop.f32.mrb[0].mxu0
        %v1084 = vadd.f32 0.0, %v1083
        %1085 = vdwg.mxu0
        %1086 = vmatprep.subr.mxu0 %v772
        %1087 = vmatpush1.msra.mxu0 %v771
        %1088 = vmatprep.subr.mxu0 %v776
        %1089 = vmatpush1.msra.mxu0 %v775
        %1090 = vmatprep.subr.mxu0 %v780
        %1091 = vmatpush1.msra.mxu0 %v779
        %1092 = vmatprep.subr.mxu0 %v784
        %1093 = vmatpush1.msra.mxu0 %v783
        %1094 = vmatprep.subr.mxu0 %v788
        %1095 = vmatpush1.msra.mxu0 %v787
        %1096 = vmatprep.subr.mxu0 %v792
        %1097 = vmatpush1.msra.mxu0 %v791
        %1098 = vmatprep.subr.mxu0 %v796
        %1099 = vmatpush1.msra.mxu0 %v795
        %1100 = vmatprep.subr.mxu0 %v800
        %1101 = vmatpush1.msra.mxu0 %v799
        %1102 = vmatprep.subr.mxu0 %v804
        %1103 = vmatpush1.msra.mxu0 %v803
        %1104 = vmatprep.subr.mxu0 %v808
        %1105 = vmatpush1.msra.mxu0 %v807
        %1106 = vmatprep.subr.mxu0 %v812
        %1107 = vmatpush1.msra.mxu0 %v811
        %1108 = vmatprep.subr.mxu0 %v816
        %1109 = vmatpush1.msra.mxu0 %v815
        %1110 = vmatprep.subr.mxu0 %v820
        %1111 = vmatpush1.msra.mxu0 %v819
        %1112 = vmatprep.subr.mxu0 %v824
        %1113 = vmatpush1.msra.mxu0 %v823
        %1114 = vmatprep.subr.mxu0 %v828
        %1115 = vmatpush1.msra.mxu0 %v827
        %1116 = vmatprep.subr.mxu0 %v832
        %1117 = vmatpush1.msra.mxu0 %v831
        %1118 = vmatprep.subr.mxu0 0.0
        %1119 = vmatpush1.msra.mxu0 0.0
        %1120 = vmatprep.subr.mxu0 0.0
        %1121 = vmatpush1.msra.mxu0 0.0
        %1122 = vmatprep.subr.mxu0 0.0
        %1123 = vmatpush1.msra.mxu0 0.0
        %1124 = vmatprep.subr.mxu0 0.0
        %1125 = vmatpush1.msra.mxu0 0.0
        %1126 = vmatprep.subr.mxu0 0.0
        %1127 = vmatpush1.msra.mxu0 0.0
        %1128 = vmatprep.subr.mxu0 0.0
        %1129 = vmatpush1.msra.mxu0 0.0
        %1130 = vmatprep.subr.mxu0 0.0
        %1131 = vmatpush1.msra.mxu0 0.0
        %1132 = vmatprep.subr.mxu0 0.0
        %1133 = vmatpush1.msra.mxu0 0.0
        %1134 = vmatprep.subr.mxu0 0.0
        %1135 = vmatpush1.msra.mxu0 0.0
        %1136 = vmatprep.subr.mxu0 0.0
        %1137 = vmatpush1.msra.mxu0 0.0
        %1138 = vmatprep.subr.mxu0 0.0
        %1139 = vmatpush1.msra.mxu0 0.0
        %1140 = vmatprep.subr.mxu0 0.0
        %1141 = vmatpush1.msra.mxu0 0.0
        %1142 = vmatprep.subr.mxu0 0.0
        %1143 = vmatpush1.msra.mxu0 0.0
        %1144 = vmatprep.subr.mxu0 0.0
        %1145 = vmatpush1.msra.mxu0 0.0
        %1146 = vmatprep.subr.mxu0 0.0
        %1147 = vmatpush1.msra.mxu0 0.0
        %1148 = vmatprep.subr.mxu0 0.0
        %1149 = vmatpush1.msra.mxu0 0.0
        %1150 = vmatprep.mubr.f32.mxu0 0.0
        %1151 = vmatmul.mubr.f32.gmra.mrb[0].mxu0 %v1008
        %v1152 = vpop.f32.mrb[0].mxu0
        %v1153 = vadd.f32 0.0, %v1152
        %v1154 = vpop.f32.mrb[0].mxu0
        %v1155 = vadd.f32 0.0, %v1154
        %1156 = vdwg.mxu0
        %v1157 = vadd.f32 %v1011, %v1082
        %v1158 = vadd.f32 %v1012, %v1084
        %v1159 = vadd.f32 %v1013, %v1153
        %v1160 = vadd.f32 %v1014, %v1155
        %v1161 = vxor.u32 %v1157, 2147483648
        %v1162 = vxor.u32 %v1158, 2147483648
        %v1163 = vxor.u32 %v1159, 2147483648
        %v1164 = vmul.f32 %v1161, 1.442695
        %v1165 = vpow.pop %v1164
        %v1166 = vmul.f32 %v1162, 1.442695
        %v1167 = vpow.pop %v1166
        %v1168 = vmul.f32 %v1163, 1.442695
        %v1169 = vpow.pop %v1168
        %v1170 = vadd.f32 %v1165, 1.0
        %v1171 = vadd.f32 %v1167, 1.0
        %v1172 = vadd.f32 %v1169, 1.0
        %v1173 = vrcp.pop %v1170
        %v1174 = vmul.f32 1.0, %v1173
        %v1175 = vrcp.pop %v1171
        %v1176 = vmul.f32 1.0, %v1175
        %v1177 = vrcp.pop %v1172
        %v1178 = vmul.f32 1.0, %v1177
        %v1179 = vtanh.pop %v1160
        %v1180 = vmul.f32 %v1176, %v1006
        %v1181 = vmul.f32 %v1174, %v1179
        %v1182 = vadd.f32 %v1180, %v1181
        %v1183 = vtanh.pop %v1182
        %v1184 = vmul.f32 %v1178, %v1183
        %s1185 = scalar_lea.vmem %s338, 8 [#allocation14]
        %1186 = vst [vmem:[%s1185] sm:$0xff] %v1184
        %s1187 = scalar_lea.vmem [#allocation7], 64
        %v1188 = vld [vmem:[%s1187] sm:$0xff]
        %v1189 = vld [vmem:[%s1187 + $0x8] sm:$0xff]
        %v1190 = vld [vmem:[%s1187 + $0x10] sm:$0xff]
        %v1191 = vld [vmem:[%s1187 + $0x18] sm:$0xff]
        %1192 = vmatprep.subr.mxu0 %v770
        %1193 = vmatpush1.msra.mxu0 %v769
        %1194 = vmatprep.subr.mxu0 %v774
        %1195 = vmatpush1.msra.mxu0 %v773
        %1196 = vmatprep.subr.mxu0 %v778
        %1197 = vmatpush1.msra.mxu0 %v777
        %1198 = vmatprep.subr.mxu0 %v782
        %1199 = vmatpush1.msra.mxu0 %v781
        %1200 = vmatprep.subr.mxu0 %v786
        %1201 = vmatpush1.msra.mxu0 %v785
        %1202 = vmatprep.subr.mxu0 %v790
        %1203 = vmatpush1.msra.mxu0 %v789
        %1204 = vmatprep.subr.mxu0 %v794
        %1205 = vmatpush1.msra.mxu0 %v793
        %1206 = vmatprep.subr.mxu0 %v798
        %1207 = vmatpush1.msra.mxu0 %v797
        %1208 = vmatprep.subr.mxu0 %v802
        %1209 = vmatpush1.msra.mxu0 %v801
        %1210 = vmatprep.subr.mxu0 %v806
        %1211 = vmatpush1.msra.mxu0 %v805
        %1212 = vmatprep.subr.mxu0 %v810
        %1213 = vmatpush1.msra.mxu0 %v809
        %1214 = vmatprep.subr.mxu0 %v814
        %1215 = vmatpush1.msra.mxu0 %v813
        %1216 = vmatprep.subr.mxu0 %v818
        %1217 = vmatpush1.msra.mxu0 %v817
        %1218 = vmatprep.subr.mxu0 %v822
        %1219 = vmatpush1.msra.mxu0 %v821
        %1220 = vmatprep.subr.mxu0 %v826
        %1221 = vmatpush1.msra.mxu0 %v825
        %1222 = vmatprep.subr.mxu0 %v830
        %1223 = vmatpush1.msra.mxu0 %v829
        %1224 = vmatprep.subr.mxu0 0.0
        %1225 = vmatpush1.msra.mxu0 0.0
        %1226 = vmatprep.subr.mxu0 0.0
        %1227 = vmatpush1.msra.mxu0 0.0
        %1228 = vmatprep.subr.mxu0 0.0
        %1229 = vmatpush1.msra.mxu0 0.0
        %1230 = vmatprep.subr.mxu0 0.0
        %1231 = vmatpush1.msra.mxu0 0.0
        %1232 = vmatprep.subr.mxu0 0.0
        %1233 = vmatpush1.msra.mxu0 0.0
        %1234 = vmatprep.subr.mxu0 0.0
        %1235 = vmatpush1.msra.mxu0 0.0
        %1236 = vmatprep.subr.mxu0 0.0
        %1237 = vmatpush1.msra.mxu0 0.0
        %1238 = vmatprep.subr.mxu0 0.0
        %1239 = vmatpush1.msra.mxu0 0.0
        %1240 = vmatprep.subr.mxu0 0.0
        %1241 = vmatpush1.msra.mxu0 0.0
        %1242 = vmatprep.subr.mxu0 0.0
        %1243 = vmatpush1.msra.mxu0 0.0
        %1244 = vmatprep.subr.mxu0 0.0
        %1245 = vmatpush1.msra.mxu0 0.0
        %1246 = vmatprep.subr.mxu0 0.0
        %1247 = vmatpush1.msra.mxu0 0.0
        %1248 = vmatprep.subr.mxu0 0.0
        %1249 = vmatpush1.msra.mxu0 0.0
        %1250 = vmatprep.subr.mxu0 0.0
        %1251 = vmatpush1.msra.mxu0 0.0
        %1252 = vmatprep.subr.mxu0 0.0
        %1253 = vmatpush1.msra.mxu0 0.0
        %1254 = vmatprep.subr.mxu0 0.0
        %1255 = vmatpush1.msra.mxu0 0.0
        %1256 = vmatprep.mubr.f32.mxu0 0.0
        %1257 = vmatmul.mubr.f32.gmra.mrb[0].mxu0 %v1184
        %v1258 = vpop.f32.mrb[0].mxu0
        %v1259 = vadd.f32 0.0, %v1258
        %v1260 = vpop.f32.mrb[0].mxu0
        %v1261 = vadd.f32 0.0, %v1260
        %1262 = vdwg.mxu0
        %1263 = vmatprep.subr.mxu0 %v772
        %1264 = vmatpush1.msra.mxu0 %v771
        %1265 = vmatprep.subr.mxu0 %v776
        %1266 = vmatpush1.msra.mxu0 %v775
        %1267 = vmatprep.subr.mxu0 %v780
        %1268 = vmatpush1.msra.mxu0 %v779
        %1269 = vmatprep.subr.mxu0 %v784
        %1270 = vmatpush1.msra.mxu0 %v783
        %1271 = vmatprep.subr.mxu0 %v788
        %1272 = vmatpush1.msra.mxu0 %v787
        %1273 = vmatprep.subr.mxu0 %v792
        %1274 = vmatpush1.msra.mxu0 %v791
        %1275 = vmatprep.subr.mxu0 %v796
        %1276 = vmatpush1.msra.mxu0 %v795
        %1277 = vmatprep.subr.mxu0 %v800
        %1278 = vmatpush1.msra.mxu0 %v799
        %1279 = vmatprep.subr.mxu0 %v804
        %1280 = vmatpush1.msra.mxu0 %v803
        %1281 = vmatprep.subr.mxu0 %v808
        %1282 = vmatpush1.msra.mxu0 %v807
        %1283 = vmatprep.subr.mxu0 %v812
        %1284 = vmatpush1.msra.mxu0 %v811
        %1285 = vmatprep.subr.mxu0 %v816
        %1286 = vmatpush1.msra.mxu0 %v815
        %1287 = vmatprep.subr.mxu0 %v820
        %1288 = vmatpush1.msra.mxu0 %v819
        %1289 = vmatprep.subr.mxu0 %v824
        %1290 = vmatpush1.msra.mxu0 %v823
        %1291 = vmatprep.subr.mxu0 %v828
        %1292 = vmatpush1.msra.mxu0 %v827
        %1293 = vmatprep.subr.mxu0 %v832
        %1294 = vmatpush1.msra.mxu0 %v831
        %1295 = vmatprep.subr.mxu0 0.0
        %1296 = vmatpush1.msra.mxu0 0.0
        %1297 = vmatprep.subr.mxu0 0.0
        %1298 = vmatpush1.msra.mxu0 0.0
        %1299 = vmatprep.subr.mxu0 0.0
        %1300 = vmatpush1.msra.mxu0 0.0
        %1301 = vmatprep.subr.mxu0 0.0
        %1302 = vmatpush1.msra.mxu0 0.0
        %1303 = vmatprep.subr.mxu0 0.0
        %1304 = vmatpush1.msra.mxu0 0.0
        %1305 = vmatprep.subr.mxu0 0.0
        %1306 = vmatpush1.msra.mxu0 0.0
        %1307 = vmatprep.subr.mxu0 0.0
        %1308 = vmatpush1.msra.mxu0 0.0
        %1309 = vmatprep.subr.mxu0 0.0
        %1310 = vmatpush1.msra.mxu0 0.0
        %1311 = vmatprep.subr.mxu0 0.0
        %1312 = vmatpush1.msra.mxu0 0.0
        %1313 = vmatprep.subr.mxu0 0.0
        %1314 = vmatpush1.msra.mxu0 0.0
        %1315 = vmatprep.subr.mxu0 0.0
        %1316 = vmatpush1.msra.mxu0 0.0
        %1317 = vmatprep.subr.mxu0 0.0
        %1318 = vmatpush1.msra.mxu0 0.0
        %1319 = vmatprep.subr.mxu0 0.0
        %1320 = vmatpush1.msra.mxu0 0.0
        %1321 = vmatprep.subr.mxu0 0.0
        %1322 = vmatpush1.msra.mxu0 0.0
        %1323 = vmatprep.subr.mxu0 0.0
        %1324 = vmatpush1.msra.mxu0 0.0
        %1325 = vmatprep.subr.mxu0 0.0
        %1326 = vmatpush1.msra.mxu0 0.0
        %1327 = vmatprep.mubr.f32.mxu0 0.0
        %1328 = vmatmul.mubr.f32.gmra.mrb[0].mxu0 %v1184
        %v1329 = vpop.f32.mrb[0].mxu0
        %v1330 = vadd.f32 0.0, %v1329
        %v1331 = vpop.f32.mrb[0].mxu0
        %v1332 = vadd.f32 0.0, %v1331
        %1333 = vdwg.mxu0
        %v1334 = vadd.f32 %v1188, %v1259
        %v1335 = vadd.f32 %v1189, %v1261
        %v1336 = vadd.f32 %v1190, %v1330
        %v1337 = vadd.f32 %v1191, %v1332
        %v1338 = vxor.u32 %v1334, 2147483648
        %v1339 = vxor.u32 %v1335, 2147483648
        %v1340 = vxor.u32 %v1336, 2147483648
        %v1341 = vmul.f32 %v1338, 1.442695
        %v1342 = vpow.pop %v1341
        %v1343 = vmul.f32 %v1339, 1.442695
        %v1344 = vpow.pop %v1343
        %v1345 = vmul.f32 %v1340, 1.442695
        %v1346 = vpow.pop %v1345
        %v1347 = vadd.f32 %v1342, 1.0
        %v1348 = vadd.f32 %v1344, 1.0
        %v1349 = vadd.f32 %v1346, 1.0
        %v1350 = vrcp.pop %v1347
        %v1351 = vmul.f32 1.0, %v1350
        %v1352 = vrcp.pop %v1348
        %v1353 = vmul.f32 1.0, %v1352
        %v1354 = vrcp.pop %v1349
        %v1355 = vmul.f32 1.0, %v1354
        %v1356 = vtanh.pop %v1337
        %v1357 = vmul.f32 %v1353, %v1182
        %v1358 = vmul.f32 %v1351, %v1356
        %v1359 = vadd.f32 %v1357, %v1358
        %v1360 = vtanh.pop %v1359
        %v1361 = vmul.f32 %v1355, %v1360
        %s1362 = scalar_lea.vmem %s338, 16 [#allocation14]
        %1363 = vst [vmem:[%s1362] sm:$0xff] %v1361
        %s1364 = scalar_lea.vmem [#allocation7], 96
        %v1365 = vld [vmem:[%s1364] sm:$0xff]
        %v1366 = vld [vmem:[%s1364 + $0x8] sm:$0xff]
        %v1367 = vld [vmem:[%s1364 + $0x10] sm:$0xff]
        %v1368 = vld [vmem:[%s1364 + $0x18] sm:$0xff]
        %1369 = vmatprep.subr.mxu0 %v770
        %1370 = vmatpush1.msra.mxu0 %v769
        %1371 = vmatprep.subr.mxu0 %v774
        %1372 = vmatpush1.msra.mxu0 %v773
        %1373 = vmatprep.subr.mxu0 %v778
        %1374 = vmatpush1.msra.mxu0 %v777
        %1375 = vmatprep.subr.mxu0 %v782
        %1376 = vmatpush1.msra.mxu0 %v781
        %1377 = vmatprep.subr.mxu0 %v786
        %1378 = vmatpush1.msra.mxu0 %v785
        %1379 = vmatprep.subr.mxu0 %v790
        %1380 = vmatpush1.msra.mxu0 %v789
        %1381 = vmatprep.subr.mxu0 %v794
        %1382 = vmatpush1.msra.mxu0 %v793
        %1383 = vmatprep.subr.mxu0 %v798
        %1384 = vmatpush1.msra.mxu0 %v797
        %1385 = vmatprep.subr.mxu0 %v802
        %1386 = vmatpush1.msra.mxu0 %v801
        %1387 = vmatprep.subr.mxu0 %v806
        %1388 = vmatpush1.msra.mxu0 %v805
        %1389 = vmatprep.subr.mxu0 %v810
        %1390 = vmatpush1.msra.mxu0 %v809
        %1391 = vmatprep.subr.mxu0 %v814
        %1392 = vmatpush1.msra.mxu0 %v813
        %1393 = vmatprep.subr.mxu0 %v818
        %1394 = vmatpush1.msra.mxu0 %v817
        %1395 = vmatprep.subr.mxu0 %v822
        %1396 = vmatpush1.msra.mxu0 %v821
        %1397 = vmatprep.subr.mxu0 %v826
        %1398 = vmatpush1.msra.mxu0 %v825
        %1399 = vmatprep.subr.mxu0 %v830
        %1400 = vmatpush1.msra.mxu0 %v829
        %1401 = vmatprep.subr.mxu0 0.0
        %1402 = vmatpush1.msra.mxu0 0.0
        %1403 = vmatprep.subr.mxu0 0.0
        %1404 = vmatpush1.msra.mxu0 0.0
        %1405 = vmatprep.subr.mxu0 0.0
        %1406 = vmatpush1.msra.mxu0 0.0
        %1407 = vmatprep.subr.mxu0 0.0
        %1408 = vmatpush1.msra.mxu0 0.0
        %1409 = vmatprep.subr.mxu0 0.0
        %1410 = vmatpush1.msra.mxu0 0.0
        %1411 = vmatprep.subr.mxu0 0.0
        %1412 = vmatpush1.msra.mxu0 0.0
        %1413 = vmatprep.subr.mxu0 0.0
        %1414 = vmatpush1.msra.mxu0 0.0
        %1415 = vmatprep.subr.mxu0 0.0
        %1416 = vmatpush1.msra.mxu0 0.0
        %1417 = vmatprep.subr.mxu0 0.0
        %1418 = vmatpush1.msra.mxu0 0.0
        %1419 = vmatprep.subr.mxu0 0.0
        %1420 = vmatpush1.msra.mxu0 0.0
        %1421 = vmatprep.subr.mxu0 0.0
        %1422 = vmatpush1.msra.mxu0 0.0
        %1423 = vmatprep.subr.mxu0 0.0
        %1424 = vmatpush1.msra.mxu0 0.0
        %1425 = vmatprep.subr.mxu0 0.0
        %1426 = vmatpush1.msra.mxu0 0.0
        %1427 = vmatprep.subr.mxu0 0.0
        %1428 = vmatpush1.msra.mxu0 0.0
        %1429 = vmatprep.subr.mxu0 0.0
        %1430 = vmatpush1.msra.mxu0 0.0
        %1431 = vmatprep.subr.mxu0 0.0
        %1432 = vmatpush1.msra.mxu0 0.0
        %1433 = vmatprep.mubr.f32.mxu0 0.0
        %1434 = vmatmul.mubr.f32.gmra.mrb[0].mxu0 %v1361
        %v1435 = vpop.f32.mrb[0].mxu0
        %v1436 = vadd.f32 0.0, %v1435
        %v1437 = vpop.f32.mrb[0].mxu0
        %v1438 = vadd.f32 0.0, %v1437
        %1439 = vdwg.mxu0
        %1440 = vmatprep.subr.mxu0 %v772
        %1441 = vmatpush1.msra.mxu0 %v771
        %1442 = vmatprep.subr.mxu0 %v776
        %1443 = vmatpush1.msra.mxu0 %v775
        %1444 = vmatprep.subr.mxu0 %v780
        %1445 = vmatpush1.msra.mxu0 %v779
        %1446 = vmatprep.subr.mxu0 %v784
        %1447 = vmatpush1.msra.mxu0 %v783
        %1448 = vmatprep.subr.mxu0 %v788
        %1449 = vmatpush1.msra.mxu0 %v787
        %1450 = vmatprep.subr.mxu0 %v792
        %1451 = vmatpush1.msra.mxu0 %v791
        %1452 = vmatprep.subr.mxu0 %v796
        %1453 = vmatpush1.msra.mxu0 %v795
        %1454 = vmatprep.subr.mxu0 %v800
        %1455 = vmatpush1.msra.mxu0 %v799
        %1456 = vmatprep.subr.mxu0 %v804
        %1457 = vmatpush1.msra.mxu0 %v803
        %1458 = vmatprep.subr.mxu0 %v808
        %1459 = vmatpush1.msra.mxu0 %v807
        %1460 = vmatprep.subr.mxu0 %v812
        %1461 = vmatpush1.msra.mxu0 %v811
        %1462 = vmatprep.subr.mxu0 %v816
        %1463 = vmatpush1.msra.mxu0 %v815
        %1464 = vmatprep.subr.mxu0 %v820
        %1465 = vmatpush1.msra.mxu0 %v819
        %1466 = vmatprep.subr.mxu0 %v824
        %1467 = vmatpush1.msra.mxu0 %v823
        %1468 = vmatprep.subr.mxu0 %v828
        %1469 = vmatpush1.msra.mxu0 %v827
        %1470 = vmatprep.subr.mxu0 %v832
        %1471 = vmatpush1.msra.mxu0 %v831
        %1472 = vmatprep.subr.mxu0 0.0
        %1473 = vmatpush1.msra.mxu0 0.0
        %1474 = vmatprep.subr.mxu0 0.0
        %1475 = vmatpush1.msra.mxu0 0.0
        %1476 = vmatprep.subr.mxu0 0.0
        %1477 = vmatpush1.msra.mxu0 0.0
        %1478 = vmatprep.subr.mxu0 0.0
        %1479 = vmatpush1.msra.mxu0 0.0
        %1480 = vmatprep.subr.mxu0 0.0
        %1481 = vmatpush1.msra.mxu0 0.0
        %1482 = vmatprep.subr.mxu0 0.0
        %1483 = vmatpush1.msra.mxu0 0.0
        %1484 = vmatprep.subr.mxu0 0.0
        %1485 = vmatpush1.msra.mxu0 0.0
        %1486 = vmatprep.subr.mxu0 0.0
        %1487 = vmatpush1.msra.mxu0 0.0
        %1488 = vmatprep.subr.mxu0 0.0
        %1489 = vmatpush1.msra.mxu0 0.0
        %1490 = vmatprep.subr.mxu0 0.0
        %1491 = vmatpush1.msra.mxu0 0.0
        %1492 = vmatprep.subr.mxu0 0.0
        %1493 = vmatpush1.msra.mxu0 0.0
        %1494 = vmatprep.subr.mxu0 0.0
        %1495 = vmatpush1.msra.mxu0 0.0
        %1496 = vmatprep.subr.mxu0 0.0
        %1497 = vmatpush1.msra.mxu0 0.0
        %1498 = vmatprep.subr.mxu0 0.0
        %1499 = vmatpush1.msra.mxu0 0.0
        %1500 = vmatprep.subr.mxu0 0.0
        %1501 = vmatpush1.msra.mxu0 0.0
        %1502 = vmatprep.subr.mxu0 0.0
        %1503 = vmatpush1.msra.mxu0 0.0
        %1504 = vmatprep.mubr.f32.mxu0 0.0
        %1505 = vmatmul.mubr.f32.gmra.mrb[0].mxu0 %v1361
        %v1506 = vpop.f32.mrb[0].mxu0
        %v1507 = vadd.f32 0.0, %v1506
        %v1508 = vpop.f32.mrb[0].mxu0
        %v1509 = vadd.f32 0.0, %v1508
        %1510 = vdwg.mxu0
        %v1511 = vadd.f32 %v1365, %v1436
        %v1512 = vadd.f32 %v1366, %v1438
        %v1513 = vadd.f32 %v1367, %v1507
        %v1514 = vadd.f32 %v1368, %v1509
        %v1515 = vxor.u32 %v1511, 2147483648
        %v1516 = vxor.u32 %v1512, 2147483648
        %v1517 = vxor.u32 %v1513, 2147483648
        %v1518 = vmul.f32 %v1515, 1.442695
        %v1519 = vpow.pop %v1518
        %v1520 = vmul.f32 %v1516, 1.442695
        %v1521 = vpow.pop %v1520
        %v1522 = vmul.f32 %v1517, 1.442695
        %v1523 = vpow.pop %v1522
        %v1524 = vadd.f32 %v1519, 1.0
        %v1525 = vadd.f32 %v1521, 1.0
        %v1526 = vadd.f32 %v1523, 1.0
        %v1527 = vrcp.pop %v1524
        %v1528 = vmul.f32 1.0, %v1527
        %v1529 = vrcp.pop %v1525
        %v1530 = vmul.f32 1.0, %v1529
        %v1531 = vrcp.pop %v1526
        %v1532 = vmul.f32 1.0, %v1531
        %v1533 = vtanh.pop %v1514
        %v1534 = vmul.f32 %v1530, %v1359
        %v1535 = vmul.f32 %v1528, %v1533
        %v1536 = vadd.f32 %v1534, %v1535
        %v1537 = vtanh.pop %v1536
        %v1538 = vmul.f32 %v1532, %v1537
        %s1539 = scalar_lea.vmem %s338, 24 [#allocation14]
        %1540 = vst [vmem:[%s1539] sm:$0xff] %v1538
        %s1541 = scalar_lea.vmem [#allocation7], 128
        %v1542 = vld [vmem:[%s1541] sm:$0xff]
        %v1543 = vld [vmem:[%s1541 + $0x8] sm:$0xff]
        %v1544 = vld [vmem:[%s1541 + $0x10] sm:$0xff]
        %v1545 = vld [vmem:[%s1541 + $0x18] sm:$0xff]
        %1546 = vmatprep.subr.mxu0 %v770
        %1547 = vmatpush1.msra.mxu0 %v769
        %1548 = vmatprep.subr.mxu0 %v774
        %1549 = vmatpush1.msra.mxu0 %v773
        %1550 = vmatprep.subr.mxu0 %v778
        %1551 = vmatpush1.msra.mxu0 %v777
        %1552 = vmatprep.subr.mxu0 %v782
        %1553 = vmatpush1.msra.mxu0 %v781
        %1554 = vmatprep.subr.mxu0 %v786
        %1555 = vmatpush1.msra.mxu0 %v785
        %1556 = vmatprep.subr.mxu0 %v790
        %1557 = vmatpush1.msra.mxu0 %v789
        %1558 = vmatprep.subr.mxu0 %v794
        %1559 = vmatpush1.msra.mxu0 %v793
        %1560 = vmatprep.subr.mxu0 %v798
        %1561 = vmatpush1.msra.mxu0 %v797
        %1562 = vmatprep.subr.mxu0 %v802
        %1563 = vmatpush1.msra.mxu0 %v801
        %1564 = vmatprep.subr.mxu0 %v806
        %1565 = vmatpush1.msra.mxu0 %v805
        %1566 = vmatprep.subr.mxu0 %v810
        %1567 = vmatpush1.msra.mxu0 %v809
        %1568 = vmatprep.subr.mxu0 %v814
        %1569 = vmatpush1.msra.mxu0 %v813
        %1570 = vmatprep.subr.mxu0 %v818
        %1571 = vmatpush1.msra.mxu0 %v817
        %1572 = vmatprep.subr.mxu0 %v822
        %1573 = vmatpush1.msra.mxu0 %v821
        %1574 = vmatprep.subr.mxu0 %v826
        %1575 = vmatpush1.msra.mxu0 %v825
        %1576 = vmatprep.subr.mxu0 %v830
        %1577 = vmatpush1.msra.mxu0 %v829
        %1578 = vmatprep.subr.mxu0 0.0
        %1579 = vmatpush1.msra.mxu0 0.0
        %1580 = vmatprep.subr.mxu0 0.0
        %1581 = vmatpush1.msra.mxu0 0.0
        %1582 = vmatprep.subr.mxu0 0.0
        %1583 = vmatpush1.msra.mxu0 0.0
        %1584 = vmatprep.subr.mxu0 0.0
        %1585 = vmatpush1.msra.mxu0 0.0
        %1586 = vmatprep.subr.mxu0 0.0
        %1587 = vmatpush1.msra.mxu0 0.0
        %1588 = vmatprep.subr.mxu0 0.0
        %1589 = vmatpush1.msra.mxu0 0.0
        %1590 = vmatprep.subr.mxu0 0.0
        %1591 = vmatpush1.msra.mxu0 0.0
        %1592 = vmatprep.subr.mxu0 0.0
        %1593 = vmatpush1.msra.mxu0 0.0
        %1594 = vmatprep.subr.mxu0 0.0
        %1595 = vmatpush1.msra.mxu0 0.0
        %1596 = vmatprep.subr.mxu0 0.0
        %1597 = vmatpush1.msra.mxu0 0.0
        %1598 = vmatprep.subr.mxu0 0.0
        %1599 = vmatpush1.msra.mxu0 0.0
        %1600 = vmatprep.subr.mxu0 0.0
        %1601 = vmatpush1.msra.mxu0 0.0
        %1602 = vmatprep.subr.mxu0 0.0
        %1603 = vmatpush1.msra.mxu0 0.0
        %1604 = vmatprep.subr.mxu0 0.0
        %1605 = vmatpush1.msra.mxu0 0.0
        %1606 = vmatprep.subr.mxu0 0.0
        %1607 = vmatpush1.msra.mxu0 0.0
        %1608 = vmatprep.subr.mxu0 0.0
        %1609 = vmatpush1.msra.mxu0 0.0
        %1610 = vmatprep.mubr.f32.mxu0 0.0
        %1611 = vmatmul.mubr.f32.gmra.mrb[0].mxu0 %v1538
        %v1612 = vpop.f32.mrb[0].mxu0
        %v1613 = vadd.f32 0.0, %v1612
        %v1614 = vpop.f32.mrb[0].mxu0
        %v1615 = vadd.f32 0.0, %v1614
        %1616 = vdwg.mxu0
        %1617 = vmatprep.subr.mxu0 %v772
        %1618 = vmatpush1.msra.mxu0 %v771
        %1619 = vmatprep.subr.mxu0 %v776
        %1620 = vmatpush1.msra.mxu0 %v775
        %1621 = vmatprep.subr.mxu0 %v780
        %1622 = vmatpush1.msra.mxu0 %v779
        %1623 = vmatprep.subr.mxu0 %v784
        %1624 = vmatpush1.msra.mxu0 %v783
        %1625 = vmatprep.subr.mxu0 %v788
        %1626 = vmatpush1.msra.mxu0 %v787
        %1627 = vmatprep.subr.mxu0 %v792
        %1628 = vmatpush1.msra.mxu0 %v791
        %1629 = vmatprep.subr.mxu0 %v796
        %1630 = vmatpush1.msra.mxu0 %v795
        %1631 = vmatprep.subr.mxu0 %v800
        %1632 = vmatpush1.msra.mxu0 %v799
        %1633 = vmatprep.subr.mxu0 %v804
        %1634 = vmatpush1.msra.mxu0 %v803
        %1635 = vmatprep.subr.mxu0 %v808
        %1636 = vmatpush1.msra.mxu0 %v807
        %1637 = vmatprep.subr.mxu0 %v812
        %1638 = vmatpush1.msra.mxu0 %v811
        %1639 = vmatprep.subr.mxu0 %v816
        %1640 = vmatpush1.msra.mxu0 %v815
        %1641 = vmatprep.subr.mxu0 %v820
        %1642 = vmatpush1.msra.mxu0 %v819
        %1643 = vmatprep.subr.mxu0 %v824
        %1644 = vmatpush1.msra.mxu0 %v823
        %1645 = vmatprep.subr.mxu0 %v828
        %1646 = vmatpush1.msra.mxu0 %v827
        %1647 = vmatprep.subr.mxu0 %v832
        %1648 = vmatpush1.msra.mxu0 %v831
        %1649 = vmatprep.subr.mxu0 0.0
        %1650 = vmatpush1.msra.mxu0 0.0
        %1651 = vmatprep.subr.mxu0 0.0
        %1652 = vmatpush1.msra.mxu0 0.0
        %1653 = vmatprep.subr.mxu0 0.0
        %1654 = vmatpush1.msra.mxu0 0.0
        %1655 = vmatprep.subr.mxu0 0.0
        %1656 = vmatpush1.msra.mxu0 0.0
        %1657 = vmatprep.subr.mxu0 0.0
        %1658 = vmatpush1.msra.mxu0 0.0
        %1659 = vmatprep.subr.mxu0 0.0
        %1660 = vmatpush1.msra.mxu0 0.0
        %1661 = vmatprep.subr.mxu0 0.0
        %1662 = vmatpush1.msra.mxu0 0.0
        %1663 = vmatprep.subr.mxu0 0.0
        %1664 = vmatpush1.msra.mxu0 0.0
        %1665 = vmatprep.subr.mxu0 0.0
        %1666 = vmatpush1.msra.mxu0 0.0
        %1667 = vmatprep.subr.mxu0 0.0
        %1668 = vmatpush1.msra.mxu0 0.0
        %1669 = vmatprep.subr.mxu0 0.0
        %1670 = vmatpush1.msra.mxu0 0.0
        %1671 = vmatprep.subr.mxu0 0.0
        %1672 = vmatpush1.msra.mxu0 0.0
        %1673 = vmatprep.subr.mxu0 0.0
        %1674 = vmatpush1.msra.mxu0 0.0
        %1675 = vmatprep.subr.mxu0 0.0
        %1676 = vmatpush1.msra.mxu0 0.0
        %1677 = vmatprep.subr.mxu0 0.0
        %1678 = vmatpush1.msra.mxu0 0.0
        %1679 = vmatprep.subr.mxu0 0.0
        %1680 = vmatpush1.msra.mxu0 0.0
        %1681 = vmatprep.mubr.f32.mxu0 0.0
        %1682 = vmatmul.mubr.f32.gmra.mrb[0].mxu0 %v1538
        %v1683 = vpop.f32.mrb[0].mxu0
        %v1684 = vadd.f32 0.0, %v1683
        %v1685 = vpop.f32.mrb[0].mxu0
        %v1686 = vadd.f32 0.0, %v1685
        %1687 = vdwg.mxu0
        %v1688 = vadd.f32 %v1542, %v1613
        %v1689 = vadd.f32 %v1543, %v1615
        %v1690 = vadd.f32 %v1544, %v1684
        %v1691 = vadd.f32 %v1545, %v1686
        %v1692 = vxor.u32 %v1688, 2147483648
        %v1693 = vxor.u32 %v1689, 2147483648
        %v1694 = vxor.u32 %v1690, 2147483648
        %v1695 = vmul.f32 %v1692, 1.442695
        %v1696 = vpow.pop %v1695
        %v1697 = vmul.f32 %v1693, 1.442695
        %v1698 = vpow.pop %v1697
        %v1699 = vmul.f32 %v1694, 1.442695
        %v1700 = vpow.pop %v1699
        %v1701 = vadd.f32 %v1696, 1.0
        %v1702 = vadd.f32 %v1698, 1.0
        %v1703 = vadd.f32 %v1700, 1.0
        %v1704 = vrcp.pop %v1701
        %v1705 = vmul.f32 1.0, %v1704
        %v1706 = vrcp.pop %v1702
        %v1707 = vmul.f32 1.0, %v1706
        %v1708 = vrcp.pop %v1703
        %v1709 = vmul.f32 1.0, %v1708
        %v1710 = vtanh.pop %v1691
        %v1711 = vmul.f32 %v1707, %v1536
        %v1712 = vmul.f32 %v1705, %v1710
        %v1713 = vadd.f32 %v1711, %v1712
        %v1714 = vtanh.pop %v1713
        %v1715 = vmul.f32 %v1709, %v1714
        %s1716 = scalar_lea.vmem %s338, 32 [#allocation14]
        %1717 = vst [vmem:[%s1716] sm:$0xff] %v1715
        %s1718 = scalar_lea.vmem [#allocation7], 160
        %v1719 = vld [vmem:[%s1718] sm:$0xff]
        %v1720 = vld [vmem:[%s1718 + $0x8] sm:$0xff]
        %v1721 = vld [vmem:[%s1718 + $0x10] sm:$0xff]
        %v1722 = vld [vmem:[%s1718 + $0x18] sm:$0xff]
        %1723 = vmatprep.subr.mxu0 %v770
        %1724 = vmatpush1.msra.mxu0 %v769
        %1725 = vmatprep.subr.mxu0 %v774
        %1726 = vmatpush1.msra.mxu0 %v773
        %1727 = vmatprep.subr.mxu0 %v778
        %1728 = vmatpush1.msra.mxu0 %v777
        %1729 = vmatprep.subr.mxu0 %v782
        %1730 = vmatpush1.msra.mxu0 %v781
        %1731 = vmatprep.subr.mxu0 %v786
        %1732 = vmatpush1.msra.mxu0 %v785
        %1733 = vmatprep.subr.mxu0 %v790
        %1734 = vmatpush1.msra.mxu0 %v789
        %1735 = vmatprep.subr.mxu0 %v794
        %1736 = vmatpush1.msra.mxu0 %v793
        %1737 = vmatprep.subr.mxu0 %v798
        %1738 = vmatpush1.msra.mxu0 %v797
        %1739 = vmatprep.subr.mxu0 %v802
        %1740 = vmatpush1.msra.mxu0 %v801
        %1741 = vmatprep.subr.mxu0 %v806
        %1742 = vmatpush1.msra.mxu0 %v805
        %1743 = vmatprep.subr.mxu0 %v810
        %1744 = vmatpush1.msra.mxu0 %v809
        %1745 = vmatprep.subr.mxu0 %v814
        %1746 = vmatpush1.msra.mxu0 %v813
        %1747 = vmatprep.subr.mxu0 %v818
        %1748 = vmatpush1.msra.mxu0 %v817
        %1749 = vmatprep.subr.mxu0 %v822
        %1750 = vmatpush1.msra.mxu0 %v821
        %1751 = vmatprep.subr.mxu0 %v826
        %1752 = vmatpush1.msra.mxu0 %v825
        %1753 = vmatprep.subr.mxu0 %v830
        %1754 = vmatpush1.msra.mxu0 %v829
        %1755 = vmatprep.subr.mxu0 0.0
        %1756 = vmatpush1.msra.mxu0 0.0
        %1757 = vmatprep.subr.mxu0 0.0
        %1758 = vmatpush1.msra.mxu0 0.0
        %1759 = vmatprep.subr.mxu0 0.0
        %1760 = vmatpush1.msra.mxu0 0.0
        %1761 = vmatprep.subr.mxu0 0.0
        %1762 = vmatpush1.msra.mxu0 0.0
        %1763 = vmatprep.subr.mxu0 0.0
        %1764 = vmatpush1.msra.mxu0 0.0
        %1765 = vmatprep.subr.mxu0 0.0
        %1766 = vmatpush1.msra.mxu0 0.0
        %1767 = vmatprep.subr.mxu0 0.0
        %1768 = vmatpush1.msra.mxu0 0.0
        %1769 = vmatprep.subr.mxu0 0.0
        %1770 = vmatpush1.msra.mxu0 0.0
        %1771 = vmatprep.subr.mxu0 0.0
        %1772 = vmatpush1.msra.mxu0 0.0
        %1773 = vmatprep.subr.mxu0 0.0
        %1774 = vmatpush1.msra.mxu0 0.0
        %1775 = vmatprep.subr.mxu0 0.0
        %1776 = vmatpush1.msra.mxu0 0.0
        %1777 = vmatprep.subr.mxu0 0.0
        %1778 = vmatpush1.msra.mxu0 0.0
        %1779 = vmatprep.subr.mxu0 0.0
        %1780 = vmatpush1.msra.mxu0 0.0
        %1781 = vmatprep.subr.mxu0 0.0
        %1782 = vmatpush1.msra.mxu0 0.0
        %1783 = vmatprep.subr.mxu0 0.0
        %1784 = vmatpush1.msra.mxu0 0.0
        %1785 = vmatprep.subr.mxu0 0.0
        %1786 = vmatpush1.msra.mxu0 0.0
        %1787 = vmatprep.mubr.f32.mxu0 0.0
        %1788 = vmatmul.mubr.f32.gmra.mrb[0].mxu0 %v1715
        %v1789 = vpop.f32.mrb[0].mxu0
        %v1790 = vadd.f32 0.0, %v1789
        %v1791 = vpop.f32.mrb[0].mxu0
        %v1792 = vadd.f32 0.0, %v1791
        %1793 = vdwg.mxu0
        %1794 = vmatprep.subr.mxu0 %v772
        %1795 = vmatpush1.msra.mxu0 %v771
        %1796 = vmatprep.subr.mxu0 %v776
        %1797 = vmatpush1.msra.mxu0 %v775
        %1798 = vmatprep.subr.mxu0 %v780
        %1799 = vmatpush1.msra.mxu0 %v779
        %1800 = vmatprep.subr.mxu0 %v784
        %1801 = vmatpush1.msra.mxu0 %v783
        %1802 = vmatprep.subr.mxu0 %v788
        %1803 = vmatpush1.msra.mxu0 %v787
        %1804 = vmatprep.subr.mxu0 %v792
        %1805 = vmatpush1.msra.mxu0 %v791
        %1806 = vmatprep.subr.mxu0 %v796
        %1807 = vmatpush1.msra.mxu0 %v795
        %1808 = vmatprep.subr.mxu0 %v800
        %1809 = vmatpush1.msra.mxu0 %v799
        %1810 = vmatprep.subr.mxu0 %v804
        %1811 = vmatpush1.msra.mxu0 %v803
        %1812 = vmatprep.subr.mxu0 %v808
        %1813 = vmatpush1.msra.mxu0 %v807
        %1814 = vmatprep.subr.mxu0 %v812
        %1815 = vmatpush1.msra.mxu0 %v811
        %1816 = vmatprep.subr.mxu0 %v816
        %1817 = vmatpush1.msra.mxu0 %v815
        %1818 = vmatprep.subr.mxu0 %v820
        %1819 = vmatpush1.msra.mxu0 %v819
        %1820 = vmatprep.subr.mxu0 %v824
        %1821 = vmatpush1.msra.mxu0 %v823
        %1822 = vmatprep.subr.mxu0 %v828
        %1823 = vmatpush1.msra.mxu0 %v827
        %1824 = vmatprep.subr.mxu0 %v832
        %1825 = vmatpush1.msra.mxu0 %v831
        %1826 = vmatprep.subr.mxu0 0.0
        %1827 = vmatpush1.msra.mxu0 0.0
        %1828 = vmatprep.subr.mxu0 0.0
        %1829 = vmatpush1.msra.mxu0 0.0
        %1830 = vmatprep.subr.mxu0 0.0
        %1831 = vmatpush1.msra.mxu0 0.0
        %1832 = vmatprep.subr.mxu0 0.0
        %1833 = vmatpush1.msra.mxu0 0.0
        %1834 = vmatprep.subr.mxu0 0.0
        %1835 = vmatpush1.msra.mxu0 0.0
        %1836 = vmatprep.subr.mxu0 0.0
        %1837 = vmatpush1.msra.mxu0 0.0
        %1838 = vmatprep.subr.mxu0 0.0
        %1839 = vmatpush1.msra.mxu0 0.0
        %1840 = vmatprep.subr.mxu0 0.0
        %1841 = vmatpush1.msra.mxu0 0.0
        %1842 = vmatprep.subr.mxu0 0.0
        %1843 = vmatpush1.msra.mxu0 0.0
        %1844 = vmatprep.subr.mxu0 0.0
        %1845 = vmatpush1.msra.mxu0 0.0
        %1846 = vmatprep.subr.mxu0 0.0
        %1847 = vmatpush1.msra.mxu0 0.0
        %1848 = vmatprep.subr.mxu0 0.0
        %1849 = vmatpush1.msra.mxu0 0.0
        %1850 = vmatprep.subr.mxu0 0.0
        %1851 = vmatpush1.msra.mxu0 0.0
        %1852 = vmatprep.subr.mxu0 0.0
        %1853 = vmatpush1.msra.mxu0 0.0
        %1854 = vmatprep.subr.mxu0 0.0
        %1855 = vmatpush1.msra.mxu0 0.0
        %1856 = vmatprep.subr.mxu0 0.0
        %1857 = vmatpush1.msra.mxu0 0.0
        %1858 = vmatprep.mubr.f32.mxu0 0.0
        %1859 = vmatmul.mubr.f32.gmra.mrb[0].mxu0 %v1715
        %v1860 = vpop.f32.mrb[0].mxu0
        %v1861 = vadd.f32 0.0, %v1860
        %v1862 = vpop.f32.mrb[0].mxu0
        %v1863 = vadd.f32 0.0, %v1862
        %1864 = vdwg.mxu0
        %v1865 = vadd.f32 %v1719, %v1790
        %v1866 = vadd.f32 %v1720, %v1792
        %v1867 = vadd.f32 %v1721, %v1861
        %v1868 = vadd.f32 %v1722, %v1863
        %v1869 = vxor.u32 %v1865, 2147483648
        %v1870 = vxor.u32 %v1866, 2147483648
        %v1871 = vxor.u32 %v1867, 2147483648
        %v1872 = vmul.f32 %v1869, 1.442695
        %v1873 = vpow.pop %v1872
        %v1874 = vmul.f32 %v1870, 1.442695
        %v1875 = vpow.pop %v1874
        %v1876 = vmul.f32 %v1871, 1.442695
        %v1877 = vpow.pop %v1876
        %v1878 = vadd.f32 %v1873, 1.0
        %v1879 = vadd.f32 %v1875, 1.0
        %v1880 = vadd.f32 %v1877, 1.0
        %v1881 = vrcp.pop %v1878
        %v1882 = vmul.f32 1.0, %v1881
        %v1883 = vrcp.pop %v1879
        %v1884 = vmul.f32 1.0, %v1883
        %v1885 = vrcp.pop %v1880
        %v1886 = vmul.f32 1.0, %v1885
        %v1887 = vtanh.pop %v1868
        %v1888 = vmul.f32 %v1884, %v1713
        %v1889 = vmul.f32 %v1882, %v1887
        %v1890 = vadd.f32 %v1888, %v1889
        %v1891 = vtanh.pop %v1890
        %v1892 = vmul.f32 %v1886, %v1891
        %s1893 = scalar_lea.vmem %s338, 40 [#allocation14]
        %1894 = vst [vmem:[%s1893] sm:$0xff] %v1892
        %s1895 = scalar_lea.vmem [#allocation7], 192
        %v1896 = vld [vmem:[%s1895] sm:$0xff]
        %v1897 = vld [vmem:[%s1895 + $0x8] sm:$0xff]
        %v1898 = vld [vmem:[%s1895 + $0x10] sm:$0xff]
        %v1899 = vld [vmem:[%s1895 + $0x18] sm:$0xff]
        %1900 = vmatprep.subr.mxu0 %v770
        %1901 = vmatpush1.msra.mxu0 %v769
        %1902 = vmatprep.subr.mxu0 %v774
        %1903 = vmatpush1.msra.mxu0 %v773
        %1904 = vmatprep.subr.mxu0 %v778
        %1905 = vmatpush1.msra.mxu0 %v777
        %1906 = vmatprep.subr.mxu0 %v782
        %1907 = vmatpush1.msra.mxu0 %v781
        %1908 = vmatprep.subr.mxu0 %v786
        %1909 = vmatpush1.msra.mxu0 %v785
        %1910 = vmatprep.subr.mxu0 %v790
        %1911 = vmatpush1.msra.mxu0 %v789
        %1912 = vmatprep.subr.mxu0 %v794
        %1913 = vmatpush1.msra.mxu0 %v793
        %1914 = vmatprep.subr.mxu0 %v798
        %1915 = vmatpush1.msra.mxu0 %v797
        %1916 = vmatprep.subr.mxu0 %v802
        %1917 = vmatpush1.msra.mxu0 %v801
        %1918 = vmatprep.subr.mxu0 %v806
        %1919 = vmatpush1.msra.mxu0 %v805
        %1920 = vmatprep.subr.mxu0 %v810
        %1921 = vmatpush1.msra.mxu0 %v809
        %1922 = vmatprep.subr.mxu0 %v814
        %1923 = vmatpush1.msra.mxu0 %v813
        %1924 = vmatprep.subr.mxu0 %v818
        %1925 = vmatpush1.msra.mxu0 %v817
        %1926 = vmatprep.subr.mxu0 %v822
        %1927 = vmatpush1.msra.mxu0 %v821
        %1928 = vmatprep.subr.mxu0 %v826
        %1929 = vmatpush1.msra.mxu0 %v825
        %1930 = vmatprep.subr.mxu0 %v830
        %1931 = vmatpush1.msra.mxu0 %v829
        %1932 = vmatprep.subr.mxu0 0.0
        %1933 = vmatpush1.msra.mxu0 0.0
        %1934 = vmatprep.subr.mxu0 0.0
        %1935 = vmatpush1.msra.mxu0 0.0
        %1936 = vmatprep.subr.mxu0 0.0
        %1937 = vmatpush1.msra.mxu0 0.0
        %1938 = vmatprep.subr.mxu0 0.0
        %1939 = vmatpush1.msra.mxu0 0.0
        %1940 = vmatprep.subr.mxu0 0.0
        %1941 = vmatpush1.msra.mxu0 0.0
        %1942 = vmatprep.subr.mxu0 0.0
        %1943 = vmatpush1.msra.mxu0 0.0
        %1944 = vmatprep.subr.mxu0 0.0
        %1945 = vmatpush1.msra.mxu0 0.0
        %1946 = vmatprep.subr.mxu0 0.0
        %1947 = vmatpush1.msra.mxu0 0.0
        %1948 = vmatprep.subr.mxu0 0.0
        %1949 = vmatpush1.msra.mxu0 0.0
        %1950 = vmatprep.subr.mxu0 0.0
        %1951 = vmatpush1.msra.mxu0 0.0
        %1952 = vmatprep.subr.mxu0 0.0
        %1953 = vmatpush1.msra.mxu0 0.0
        %1954 = vmatprep.subr.mxu0 0.0
        %1955 = vmatpush1.msra.mxu0 0.0
        %1956 = vmatprep.subr.mxu0 0.0
        %1957 = vmatpush1.msra.mxu0 0.0
        %1958 = vmatprep.subr.mxu0 0.0
        %1959 = vmatpush1.msra.mxu0 0.0
        %1960 = vmatprep.subr.mxu0 0.0
        %1961 = vmatpush1.msra.mxu0 0.0
        %1962 = vmatprep.subr.mxu0 0.0
        %1963 = vmatpush1.msra.mxu0 0.0
        %1964 = vmatprep.mubr.f32.mxu0 0.0
        %1965 = vmatmul.mubr.f32.gmra.mrb[0].mxu0 %v1892
        %v1966 = vpop.f32.mrb[0].mxu0
        %v1967 = vadd.f32 0.0, %v1966
        %v1968 = vpop.f32.mrb[0].mxu0
        %v1969 = vadd.f32 0.0, %v1968
        %1970 = vdwg.mxu0
        %1971 = vmatprep.subr.mxu0 %v772
        %1972 = vmatpush1.msra.mxu0 %v771
        %1973 = vmatprep.subr.mxu0 %v776
        %1974 = vmatpush1.msra.mxu0 %v775
        %1975 = vmatprep.subr.mxu0 %v780
        %1976 = vmatpush1.msra.mxu0 %v779
        %1977 = vmatprep.subr.mxu0 %v784
        %1978 = vmatpush1.msra.mxu0 %v783
        %1979 = vmatprep.subr.mxu0 %v788
        %1980 = vmatpush1.msra.mxu0 %v787
        %1981 = vmatprep.subr.mxu0 %v792
        %1982 = vmatpush1.msra.mxu0 %v791
        %1983 = vmatprep.subr.mxu0 %v796
        %1984 = vmatpush1.msra.mxu0 %v795
        %1985 = vmatprep.subr.mxu0 %v800
        %1986 = vmatpush1.msra.mxu0 %v799
        %1987 = vmatprep.subr.mxu0 %v804
        %1988 = vmatpush1.msra.mxu0 %v803
        %1989 = vmatprep.subr.mxu0 %v808
        %1990 = vmatpush1.msra.mxu0 %v807
        %1991 = vmatprep.subr.mxu0 %v812
        %1992 = vmatpush1.msra.mxu0 %v811
        %1993 = vmatprep.subr.mxu0 %v816
        %1994 = vmatpush1.msra.mxu0 %v815
        %1995 = vmatprep.subr.mxu0 %v820
        %1996 = vmatpush1.msra.mxu0 %v819
        %1997 = vmatprep.subr.mxu0 %v824
        %1998 = vmatpush1.msra.mxu0 %v823
        %1999 = vmatprep.subr.mxu0 %v828
        %2000 = vmatpush1.msra.mxu0 %v827
        %2001 = vmatprep.subr.mxu0 %v832
        %2002 = vmatpush1.msra.mxu0 %v831
        %2003 = vmatprep.subr.mxu0 0.0
        %2004 = vmatpush1.msra.mxu0 0.0
        %2005 = vmatprep.subr.mxu0 0.0
        %2006 = vmatpush1.msra.mxu0 0.0
        %2007 = vmatprep.subr.mxu0 0.0
        %2008 = vmatpush1.msra.mxu0 0.0
        %2009 = vmatprep.subr.mxu0 0.0
        %2010 = vmatpush1.msra.mxu0 0.0
        %2011 = vmatprep.subr.mxu0 0.0
        %2012 = vmatpush1.msra.mxu0 0.0
        %2013 = vmatprep.subr.mxu0 0.0
        %2014 = vmatpush1.msra.mxu0 0.0
        %2015 = vmatprep.subr.mxu0 0.0
        %2016 = vmatpush1.msra.mxu0 0.0
        %2017 = vmatprep.subr.mxu0 0.0
        %2018 = vmatpush1.msra.mxu0 0.0
        %2019 = vmatprep.subr.mxu0 0.0
        %2020 = vmatpush1.msra.mxu0 0.0
        %2021 = vmatprep.subr.mxu0 0.0
        %2022 = vmatpush1.msra.mxu0 0.0
        %2023 = vmatprep.subr.mxu0 0.0
        %2024 = vmatpush1.msra.mxu0 0.0
        %2025 = vmatprep.subr.mxu0 0.0
        %2026 = vmatpush1.msra.mxu0 0.0
        %2027 = vmatprep.subr.mxu0 0.0
        %2028 = vmatpush1.msra.mxu0 0.0
        %2029 = vmatprep.subr.mxu0 0.0
        %2030 = vmatpush1.msra.mxu0 0.0
        %2031 = vmatprep.subr.mxu0 0.0
        %2032 = vmatpush1.msra.mxu0 0.0
        %2033 = vmatprep.subr.mxu0 0.0
        %2034 = vmatpush1.msra.mxu0 0.0
        %2035 = vmatprep.mubr.f32.mxu0 0.0
        %2036 = vmatmul.mubr.f32.gmra.mrb[0].mxu0 %v1892
        %v2037 = vpop.f32.mrb[0].mxu0
        %v2038 = vadd.f32 0.0, %v2037
        %v2039 = vpop.f32.mrb[0].mxu0
        %v2040 = vadd.f32 0.0, %v2039
        %2041 = vdwg.mxu0
        %v2042 = vadd.f32 %v1896, %v1967
        %v2043 = vadd.f32 %v1897, %v1969
        %v2044 = vadd.f32 %v1898, %v2038
        %v2045 = vadd.f32 %v1899, %v2040
        %v2046 = vxor.u32 %v2042, 2147483648
        %v2047 = vxor.u32 %v2043, 2147483648
        %v2048 = vxor.u32 %v2044, 2147483648
        %v2049 = vmul.f32 %v2046, 1.442695
        %v2050 = vpow.pop %v2049
        %v2051 = vmul.f32 %v2047, 1.442695
        %v2052 = vpow.pop %v2051
        %v2053 = vmul.f32 %v2048, 1.442695
        %v2054 = vpow.pop %v2053
        %v2055 = vadd.f32 %v2050, 1.0
        %v2056 = vadd.f32 %v2052, 1.0
        %v2057 = vadd.f32 %v2054, 1.0
        %v2058 = vrcp.pop %v2055
        %v2059 = vmul.f32 1.0, %v2058
        %v2060 = vrcp.pop %v2056
        %v2061 = vmul.f32 1.0, %v2060
        %v2062 = vrcp.pop %v2057
        %v2063 = vmul.f32 1.0, %v2062
        %v2064 = vtanh.pop %v2045
        %v2065 = vmul.f32 %v2061, %v1890
        %v2066 = vmul.f32 %v2059, %v2064
        %v2067 = vadd.f32 %v2065, %v2066
        %v2068 = vtanh.pop %v2067
        %v2069 = vmul.f32 %v2063, %v2068
        %s2070 = scalar_lea.vmem %s338, 48 [#allocation14]
        %2071 = vst [vmem:[%s2070] sm:$0xff] %v2069
        %s2072 = scalar_lea.vmem [#allocation7], 224
        %v2073 = vld [vmem:[%s2072] sm:$0xff]
        %v2074 = vld [vmem:[%s2072 + $0x8] sm:$0xff]
        %v2075 = vld [vmem:[%s2072 + $0x10] sm:$0xff]
        %v2076 = vld [vmem:[%s2072 + $0x18] sm:$0xff]
        %2077 = vmatprep.subr.mxu0 %v770
        %2078 = vmatpush1.msra.mxu0 %v769
        %2079 = vmatprep.subr.mxu0 %v774
        %2080 = vmatpush1.msra.mxu0 %v773
        %2081 = vmatprep.subr.mxu0 %v778
        %2082 = vmatpush1.msra.mxu0 %v777
        %2083 = vmatprep.subr.mxu0 %v782
        %2084 = vmatpush1.msra.mxu0 %v781
        %2085 = vmatprep.subr.mxu0 %v786
        %2086 = vmatpush1.msra.mxu0 %v785
        %2087 = vmatprep.subr.mxu0 %v790
        %2088 = vmatpush1.msra.mxu0 %v789
        %2089 = vmatprep.subr.mxu0 %v794
        %2090 = vmatpush1.msra.mxu0 %v793
        %2091 = vmatprep.subr.mxu0 %v798
        %2092 = vmatpush1.msra.mxu0 %v797
        %2093 = vmatprep.subr.mxu0 %v802
        %2094 = vmatpush1.msra.mxu0 %v801
        %2095 = vmatprep.subr.mxu0 %v806
        %2096 = vmatpush1.msra.mxu0 %v805
        %2097 = vmatprep.subr.mxu0 %v810
        %2098 = vmatpush1.msra.mxu0 %v809
        %2099 = vmatprep.subr.mxu0 %v814
        %2100 = vmatpush1.msra.mxu0 %v813
        %2101 = vmatprep.subr.mxu0 %v818
        %2102 = vmatpush1.msra.mxu0 %v817
        %2103 = vmatprep.subr.mxu0 %v822
        %2104 = vmatpush1.msra.mxu0 %v821
        %2105 = vmatprep.subr.mxu0 %v826
        %2106 = vmatpush1.msra.mxu0 %v825
        %2107 = vmatprep.subr.mxu0 %v830
        %2108 = vmatpush1.msra.mxu0 %v829
        %2109 = vmatprep.subr.mxu0 0.0
        %2110 = vmatpush1.msra.mxu0 0.0
        %2111 = vmatprep.subr.mxu0 0.0
        %2112 = vmatpush1.msra.mxu0 0.0
        %2113 = vmatprep.subr.mxu0 0.0
        %2114 = vmatpush1.msra.mxu0 0.0
        %2115 = vmatprep.subr.mxu0 0.0
        %2116 = vmatpush1.msra.mxu0 0.0
        %2117 = vmatprep.subr.mxu0 0.0
        %2118 = vmatpush1.msra.mxu0 0.0
        %2119 = vmatprep.subr.mxu0 0.0
        %2120 = vmatpush1.msra.mxu0 0.0
        %2121 = vmatprep.subr.mxu0 0.0
        %2122 = vmatpush1.msra.mxu0 0.0
        %2123 = vmatprep.subr.mxu0 0.0
        %2124 = vmatpush1.msra.mxu0 0.0
        %2125 = vmatprep.subr.mxu0 0.0
        %2126 = vmatpush1.msra.mxu0 0.0
        %2127 = vmatprep.subr.mxu0 0.0
        %2128 = vmatpush1.msra.mxu0 0.0
        %2129 = vmatprep.subr.mxu0 0.0
        %2130 = vmatpush1.msra.mxu0 0.0
        %2131 = vmatprep.subr.mxu0 0.0
        %2132 = vmatpush1.msra.mxu0 0.0
        %2133 = vmatprep.subr.mxu0 0.0
        %2134 = vmatpush1.msra.mxu0 0.0
        %2135 = vmatprep.subr.mxu0 0.0
        %2136 = vmatpush1.msra.mxu0 0.0
        %2137 = vmatprep.subr.mxu0 0.0
        %2138 = vmatpush1.msra.mxu0 0.0
        %2139 = vmatprep.subr.mxu0 0.0
        %2140 = vmatpush1.msra.mxu0 0.0
        %2141 = vmatprep.mubr.f32.mxu0 0.0
        %2142 = vmatmul.mubr.f32.gmra.mrb[0].mxu0 %v2069
        %v2143 = vpop.f32.mrb[0].mxu0
        %v2144 = vadd.f32 0.0, %v2143
        %v2145 = vpop.f32.mrb[0].mxu0
        %v2146 = vadd.f32 0.0, %v2145
        %2147 = vdwg.mxu0
        %2148 = vmatprep.subr.mxu0 %v772
        %2149 = vmatpush1.msra.mxu0 %v771
        %2150 = vmatprep.subr.mxu0 %v776
        %2151 = vmatpush1.msra.mxu0 %v775
        %2152 = vmatprep.subr.mxu0 %v780
        %2153 = vmatpush1.msra.mxu0 %v779
        %2154 = vmatprep.subr.mxu0 %v784
        %2155 = vmatpush1.msra.mxu0 %v783
        %2156 = vmatprep.subr.mxu0 %v788
        %2157 = vmatpush1.msra.mxu0 %v787
        %2158 = vmatprep.subr.mxu0 %v792
        %2159 = vmatpush1.msra.mxu0 %v791
        %2160 = vmatprep.subr.mxu0 %v796
        %2161 = vmatpush1.msra.mxu0 %v795
        %2162 = vmatprep.subr.mxu0 %v800
        %2163 = vmatpush1.msra.mxu0 %v799
        %2164 = vmatprep.subr.mxu0 %v804
        %2165 = vmatpush1.msra.mxu0 %v803
        %2166 = vmatprep.subr.mxu0 %v808
        %2167 = vmatpush1.msra.mxu0 %v807
        %2168 = vmatprep.subr.mxu0 %v812
        %2169 = vmatpush1.msra.mxu0 %v811
        %2170 = vmatprep.subr.mxu0 %v816
        %2171 = vmatpush1.msra.mxu0 %v815
        %2172 = vmatprep.subr.mxu0 %v820
        %2173 = vmatpush1.msra.mxu0 %v819
        %2174 = vmatprep.subr.mxu0 %v824
        %2175 = vmatpush1.msra.mxu0 %v823
        %2176 = vmatprep.subr.mxu0 %v828
        %2177 = vmatpush1.msra.mxu0 %v827
        %2178 = vmatprep.subr.mxu0 %v832
        %2179 = vmatpush1.msra.mxu0 %v831
        %2180 = vmatprep.subr.mxu0 0.0
        %2181 = vmatpush1.msra.mxu0 0.0
        %2182 = vmatprep.subr.mxu0 0.0
        %2183 = vmatpush1.msra.mxu0 0.0
        %2184 = vmatprep.subr.mxu0 0.0
        %2185 = vmatpush1.msra.mxu0 0.0
        %2186 = vmatprep.subr.mxu0 0.0
        %2187 = vmatpush1.msra.mxu0 0.0
        %2188 = vmatprep.subr.mxu0 0.0
        %2189 = vmatpush1.msra.mxu0 0.0
        %2190 = vmatprep.subr.mxu0 0.0
        %2191 = vmatpush1.msra.mxu0 0.0
        %2192 = vmatprep.subr.mxu0 0.0
        %2193 = vmatpush1.msra.mxu0 0.0
        %2194 = vmatprep.subr.mxu0 0.0
        %2195 = vmatpush1.msra.mxu0 0.0
        %2196 = vmatprep.subr.mxu0 0.0
        %2197 = vmatpush1.msra.mxu0 0.0
        %2198 = vmatprep.subr.mxu0 0.0
        %2199 = vmatpush1.msra.mxu0 0.0
        %2200 = vmatprep.subr.mxu0 0.0
        %2201 = vmatpush1.msra.mxu0 0.0
        %2202 = vmatprep.subr.mxu0 0.0
        %2203 = vmatpush1.msra.mxu0 0.0
        %2204 = vmatprep.subr.mxu0 0.0
        %2205 = vmatpush1.msra.mxu0 0.0
        %2206 = vmatprep.subr.mxu0 0.0
        %2207 = vmatpush1.msra.mxu0 0.0
        %2208 = vmatprep.subr.mxu0 0.0
        %2209 = vmatpush1.msra.mxu0 0.0
        %2210 = vmatprep.subr.mxu0 0.0
        %2211 = vmatpush1.msra.mxu0 0.0
        %2212 = vmatprep.mubr.f32.mxu0 0.0
        %2213 = vmatmul.mubr.f32.gmra.mrb[0].mxu0 %v2069
        %v2214 = vpop.f32.mrb[0].mxu0
        %v2215 = vadd.f32 0.0, %v2214
        %v2216 = vpop.f32.mrb[0].mxu0
        %v2217 = vadd.f32 0.0, %v2216
        %2218 = vdwg.mxu0
        %v2219 = vadd.f32 %v2073, %v2144
        %v2220 = vadd.f32 %v2074, %v2146
        %v2221 = vadd.f32 %v2075, %v2215
        %v2222 = vadd.f32 %v2076, %v2217
        %v2223 = vxor.u32 %v2219, 2147483648
        %v2224 = vxor.u32 %v2220, 2147483648
        %v2225 = vxor.u32 %v2221, 2147483648
        %v2226 = vmul.f32 %v2223, 1.442695
        %v2227 = vpow.pop %v2226
        %v2228 = vmul.f32 %v2224, 1.442695
        %v2229 = vpow.pop %v2228
        %v2230 = vmul.f32 %v2225, 1.442695
        %v2231 = vpow.pop %v2230
        %v2232 = vadd.f32 %v2227, 1.0
        %v2233 = vadd.f32 %v2229, 1.0
        %v2234 = vadd.f32 %v2231, 1.0
        %v2235 = vrcp.pop %v2232
        %v2236 = vmul.f32 1.0, %v2235
        %v2237 = vrcp.pop %v2233
        %v2238 = vmul.f32 1.0, %v2237
        %v2239 = vrcp.pop %v2234
        %v2240 = vmul.f32 1.0, %v2239
        %v2241 = vtanh.pop %v2222
        %v2242 = vmul.f32 %v2238, %v2067
        %v2243 = vmul.f32 %v2236, %v2241
        %v2244 = vadd.f32 %v2242, %v2243
        %v2245 = vtanh.pop %v2244
        %v2246 = vmul.f32 %v2240, %v2245
        %s2247 = scalar_lea.vmem %s338, 56 [#allocation14]
        %2248 = vst [vmem:[%s2247] sm:$0xff] %v2246
        %2249 = vst [vmem:[#allocation5] sm:$0xff] %v2246
        %2250 = vst [vmem:[#allocation6] sm:$0xff] %v2244
        // Predicated region
        $region90: #{tpu_custom_call.1} parent=31 // pred_check
          %p2251 = pneg %p355
        $region91: #{tpu_custom_call.1} parent=31 // pred_check_branch
          %2253 = sbr.rel (%p2251) target = $region93
        $region92: #{tpu_custom_call.1} parent=31 // pred_region
          %2254 = vst [vmem:[%s345] sm:$0xff] %v2246
          %2255 = vst [vmem:[%s352] sm:$0xff] %v2244
        $region93: #{tpu_custom_call.1} parent=31 // pred_fallthru
          _
        %s2256 = sand.u32 %s134, 1
        %s2257 = scalar_lea.sflag [#allocation10], %s2256
        %s2258 = sand.u32 %s134, 1
        %s2259 = smul.addr %s2258, 64
        %s2260 = scalar_lea.vmem [#allocation14], %s2259
        %s2261 = sand.u32 %s32, 1
        %s2262 = scalar_lea.sflag [#allocation16], %s2261
        %s2263 = sand.u32 %s160, 1
        %s2264 = smul.addr %s2263, 8
        %s2265 = scalar_lea.vmem [#allocation15], %s2264
        %s2266 = sand.u32 %s32, 1
        %s2267 = scalar_lea.sflag [#allocation16], %s2266
        %s2268 = sand.u32 %s186, 1
        %s2269 = smul.addr %s2268, 8
        %s2270 = scalar_lea.vmem [#allocation17], %s2269
        // Predicated region
        $region94: #{tpu_custom_call.1} parent=31 // pred_check
          %p2271 = pneg %p144
        $region95: #{tpu_custom_call.1} parent=31 // pred_check_branch
          %2273 = sbr.rel (%p2271) target = $region97
        $region96: #{tpu_custom_call.1} parent=31 // pred_region
          %s2274 = smul.u32 8, %s37
          %s2276 = ssub.s32 1024, 1024
          %2277 = vsyncadd %s2257, %s2276
          %s2278 = smul.addr %s2274, 2
          %s2279 = sadd.s32 %s36, %s2278
          %s2280 = smul.addr %s2279, 128
          %s2281 = scalar_lea.hbm %s6, %s2280
          %s2282 = sshll.u32 %s2260, 4
          %s2283 = int_to_ptr.vmem [resolvable:$true] %s2282
          %2288 = dma.vmem_to_hbm [thread:$0]  %s2283, 1024, %s2281, %s2257, 128, 256, 8
        $region97: #{tpu_custom_call.1} parent=31 // pred_fallthru
          _
        // Predicated region
        $region98: #{tpu_custom_call.1} parent=31 // pred_check
          %p2289 = pneg %p170
        $region99: #{tpu_custom_call.1} parent=31 // pred_check_branch
          %2291 = sbr.rel (%p2289) target = $region101
        $region100: #{tpu_custom_call.1} parent=31 // pred_region
          %s2293 = ssub.s32 128, 128
          %2294 = vsyncadd %s2262, %s2293
          %s2295 = smul.addr %s36, 128
          %s2296 = scalar_lea.hbm %s7, %s2295
          %s2298 = sshll.u32 %s2265, 4
          %s2299 = int_to_ptr.vmem [resolvable:$true] %s2298
          %2301 = dma.vmem_to_hbm [thread:$0]  %s2299, 128, %s2296, %s2262
        $region101: #{tpu_custom_call.1} parent=31 // pred_fallthru
          _
        // Predicated region
        $region102: #{tpu_custom_call.1} parent=31 // pred_check
          %p2302 = pneg %p196
        $region103: #{tpu_custom_call.1} parent=31 // pred_check_branch
          %2304 = sbr.rel (%p2302) target = $region105
        $region104: #{tpu_custom_call.1} parent=31 // pred_region
          %s2306 = ssub.s32 128, 128
          %2307 = vsyncadd %s2267, %s2306
          %s2308 = smul.addr %s36, 128
          %s2309 = scalar_lea.hbm %s8, %s2308
          %s2311 = sshll.u32 %s2270, 4
          %s2312 = int_to_ptr.vmem [resolvable:$true] %s2311
          %2314 = dma.vmem_to_hbm [thread:$0]  %s2312, 128, %s2309, %s2267
        $region105: #{tpu_custom_call.1} parent=31 // pred_fallthru
          _
      $region32: #{tpu_custom_call.1} parent=5 // pred_fallthru
        _
      %p2315 = scmp.le.s32.totalorder 2, %s27
      // Predicated region
      $region106: #{tpu_custom_call.1} parent=5 // pred_check
        %p2316 = pneg %p2315
      $region107: #{tpu_custom_call.1} parent=5 // pred_check_branch
        %2318 = sbr.rel (%p2316) target = $region109
      $region108: #{tpu_custom_call.1} parent=5 // pred_region
        %s2319 = ssub.s32 %s27, 2
        // Predicated region
        $region110: #{tpu_custom_call.1} parent=108 // pred_check
          %p2320 = pneg %p150
        $region111: #{tpu_custom_call.1} parent=108 // pred_check_branch
          %2322 = sbr.rel (%p2320) target = $region113
        $region112: #{tpu_custom_call.1} parent=108 // pred_region
          %s2323 = sand.u32 %s135, 1
          %s2324 = scalar_lea.sflag [#allocation10], %s2323
          %s2325 = sand.u32 %s135, 1
          %s2326 = smul.addr %s2325, 64
          %s2327 = scalar_lea.vmem [#allocation14], %s2326
          %2328 = dma.done %s2324, 1024
        $region113: #{tpu_custom_call.1} parent=108 // pred_fallthru
          _
        // Predicated region
        $region114: #{tpu_custom_call.1} parent=108 // pred_check
          %p2329 = pneg %p176
        $region115: #{tpu_custom_call.1} parent=108 // pred_check_branch
          %2331 = sbr.rel (%p2329) target = $region117
        $region116: #{tpu_custom_call.1} parent=108 // pred_region
          %s2332 = sand.u32 %s33, 1
          %s2333 = scalar_lea.sflag [#allocation16], %s2332
          %s2334 = sand.u32 %s161, 1
          %s2335 = smul.addr %s2334, 8
          %s2336 = scalar_lea.vmem [#allocation15], %s2335
          %2337 = dma.done %s2333, 128
        $region117: #{tpu_custom_call.1} parent=108 // pred_fallthru
          _
        // Predicated region
        $region118: #{tpu_custom_call.1} parent=108 // pred_check
          %p2338 = pneg %p202
        $region119: #{tpu_custom_call.1} parent=108 // pred_check_branch
          %2340 = sbr.rel (%p2338) target = $region121
        $region120: #{tpu_custom_call.1} parent=108 // pred_region
          %s2341 = sand.u32 %s33, 1
          %s2342 = scalar_lea.sflag [#allocation16], %s2341
          %s2343 = sand.u32 %s187, 1
          %s2344 = smul.addr %s2343, 8
          %s2345 = scalar_lea.vmem [#allocation17], %s2344
          %2346 = dma.done %s2342, 128
        $region121: #{tpu_custom_call.1} parent=108 // pred_fallthru
          _
      $region109: #{tpu_custom_call.1} parent=5 // pred_fallthru
        _
    $region6: #{tpu_custom_call.1} parent=1 // loop_footer
      %s31 = sadd.s32 1, %s27
    $region7: #{tpu_custom_call.1} parent=1 // loop_footer_branch
      %26 = sbr.rel target = $region3
    $region8: #{tpu_custom_call.1} parent=1 // loop_exit
      _
    %2347 = vsyncpa [#allocation9], 1
    %s2348 = scalar_lea.sflag [#allocation9], 1
    %2349 = vsyncpa %s2348, 1
    %2350 = vsyncpa [#allocation12], 1
    %s2351 = scalar_lea.sflag [#allocation12], 1
    %2352 = vsyncpa %s2351, 1
    %2353 = vsyncpa [#allocation10], 1
    %s2354 = scalar_lea.sflag [#allocation10], 1
    %2355 = vsyncpa %s2354, 1
    %2356 = vsyncpa [#allocation16], 1
    %s2357 = scalar_lea.sflag [#allocation16], 1
    %2358 = vsyncpa %s2357, 1

</llo_original>
